<compile_context>
chip_gen: v7x
topology: tpu7x:2x2x1
jax: 0.10.0
libtpu: 0.0.40
codegen_flags: <defaults>
</compile_context>

<pallas_src>
import jax
import jax.numpy as jnp
from jax.experimental import pallas as pl
from jax.experimental.pallas import tpu as pltpu


def make_classifier_kernel(n_layers, T, B, E, H, O):
    L = n_layers
    G = 4 * H

    def kernel(*refs):
        ids_ref, emb_ref, h0_ref, c0_ref = refs[:4]
        lstm_refs = refs[4:4 + 3 * L]
        (w1_ref, b1_ref, w2_ref, b2_ref, w3_ref, b3_ref) = refs[4 + 3 * L:10 + 3 * L]
        sig_ref, hn_ref, cn_ref = refs[10 + 3 * L:]

        # ---- Hoisted weight / bias loads (once, outside the unrolled recurrence) ----
        w_ih = [lstm_refs[3 * l][...] for l in range(L)]          # (in_dim, 4H)
        w_hh = [lstm_refs[3 * l + 1][...] for l in range(L)]      # (H, 4H)
        # Bias is folded into the input projection; broadcast hoisted (l >= 1 reused T times).
        b_bc = [None] + [jnp.broadcast_to(lstm_refs[3 * l + 2][...], (B, G))
                         for l in range(1, L)]

        h = [h0_ref[l] for l in range(L)]                         # (B, H)
        c = [c0_ref[l] for l in range(L)]                         # (B, H)

        # ---- In-kernel embedding gather + batched layer-0 input projection ----
        rows = []
        for t in range(T):
            for bb in range(B):
                idx = ids_ref[bb, t]                              # scalar from SMEM
                rows.append(emb_ref[pl.ds(idx, 1), :])            # (1, E)
        x_all = jnp.concatenate(rows, axis=0)                     # (T*B, E)
        x_proj_all = (jnp.dot(x_all, w_ih[0], preferred_element_type=jnp.float32)
                      + lstm_refs[2][...])                        # (T*B, 4H), bias folded
        x_proj0 = [x_proj_all[t * B:(t + 1) * B, :] for t in range(T)]   # T x (B, 4H)

        def cell(l, x_proj):
            # Only the recurrent matmul + add (+ gate math) stay on the serialized chain.
            gates = x_proj + jnp.dot(h[l], w_hh[l], preferred_element_type=jnp.float32)
            # Two lane-full EUP pushes, then slice i/f/g/o (PyTorch gate order i,f,g,o).
            sg = jax.nn.sigmoid(gates)
            tg = jnp.tanh(gates)
            i_g = sg[:, 0:H]
            f_g = sg[:, H:2 * H]
            g_g = tg[:, 2 * H:3 * H]
            o_g = sg[:, 3 * H:4 * H]
            c_new = f_g * c[l] + i_g * g_g
            h_new = o_g * jnp.tanh(c_new)
            h[l] = h_new
            c[l] = c_new
            return h_new

        # ---- Wavefront-interleaved, fully unrolled recurrence ----
        # In wave w, layer l runs timestep t = w - l; the L independent chains interleave.
        # pending[l] = already-projected (bias-folded) input for layer l's next timestep.
        pending = [None] * L
        for wave in range(T + L - 1):
            new_h = [None] * L
            for l in range(L):
                t = wave - l
                if 0 <= t < T:
                    xp = x_proj0[t] if l == 0 else pending[l]
                    new_h[l] = cell(l, xp)
            # Issue next-layer input projections one wave early (off the recurrence chain).
            for l in range(L - 1):
                if new_h[l] is not None:
                    pending[l + 1] = (jnp.dot(new_h[l], w_ih[l + 1],
                                              preferred_element_type=jnp.float32)
                                      + b_bc[l + 1])

        for l in range(L):
            hn_ref[l] = h[l]
            cn_ref[l] = c[l]

        # ---- Collapsed FC epilogue ----
        # No nonlinearity between fc1/fc2/fc3, and only column O-1 of the last timestep
        # is read (sig.view(B,-1)[:, -1]); collapse to W_eff (H,1), b_eff (1,1).
        # The weight collapse depends only on parameters -> off the recurrence chain.
        w3_last = w3_ref[:, O - 1:O]                              # (F2, 1)
        b3_last = b3_ref[:, O - 1:O]                              # (1, 1)
        w23 = jnp.dot(w2_ref[...], w3_last, preferred_element_type=jnp.float32)   # (F1, 1)
        w_eff = jnp.dot(w1_ref[...], w23, preferred_element_type=jnp.float32)     # (H, 1)
        b_eff = (jnp.dot(jnp.dot(b1_ref[...], w2_ref[...],
                                 preferred_element_type=jnp.float32),
                         w3_last, preferred_element_type=jnp.float32)
                 + jnp.dot(b2_ref[...], w3_last, preferred_element_type=jnp.float32)
                 + b3_last)                                                        # (1, 1)
        out = jnp.dot(h[L - 1], w_eff, preferred_element_type=jnp.float32) + b_eff  # (B, 1)
        sig_ref[...] = jax.nn.sigmoid(out)

    return kernel


def classifier_forward(params, x_ids, hidden):
    """Matches Classifier.forward (eval mode): returns (sig_out[:, -1], (h_n, c_n))."""
    h0, c0 = hidden
    B, T = x_ids.shape
    L, _, H = h0.shape
    V, E = params["embedding"].shape
    O = params["fc3_w"].shape[1]

    inputs = [x_ids.astype(jnp.int32), params["embedding"], h0, c0]
    for l in range(L):
        inputs += [params[f"w_ih_{l}"], params[f"w_hh_{l}"], params[f"b_{l}"]]
    inputs += [params["fc1_w"], params["fc1_b"],
               params["fc2_w"], params["fc2_b"],
               params["fc3_w"], params["fc3_b"]]

    kernel = make_classifier_kernel(L, T, B, E, H, O)
    vmem = pl.BlockSpec(memory_space=pltpu.MemorySpace.VMEM)
    smem = pl.BlockSpec(memory_space=pltpu.MemorySpace.SMEM)

    sig, hn, cn = pl.pallas_call(
        kernel,
        out_shape=(
            jax.ShapeDtypeStruct((B, 1), jnp.float32),            # sig[:, -1] column
            jax.ShapeDtypeStruct((L, B, H), jnp.float32),         # h_n
            jax.ShapeDtypeStruct((L, B, H), jnp.float32),         # c_n
        ),
        in_specs=[smem] + [vmem] * (len(inputs) - 1),
        out_specs=(vmem, vmem, vmem),
        compiler_params=pltpu.CompilerParams(
            vmem_limit_bytes=32 * 1024 * 1024,                    # safe on v5e/v6e/v7x
        ),
    )(*inputs)

    # sig_out.view(B, -1)[:, -1] == last output unit of the last timestep.
    sig_out = sig[:, 0]
    return sig_out, (hn, cn)


def init_params(key, vocab_size, output_size, E, H, L, F1=64, F2=16):
    ks = list(jax.random.split(key, 8 + 4 * L))
    kit = iter(ks)

    def u(shape, scale):
        return jax.random.uniform(next(kit), shape, jnp.float32, -scale, scale)

    params = {}
    params["embedding"] = jax.random.normal(next(kit), (vocab_size, E), jnp.float32)
    std = 1.0 / float(H) ** 0.5
    for l in range(L):
        in_dim = E if l == 0 else H
        w_ih = u((4 * H, in_dim), std)                 # PyTorch layout (4H, in)
        w_hh = u((4 * H, H), std)
        b_ih = u((4 * H,), std)
        b_hh = u((4 * H,), std)
        params[f"w_ih_{l}"] = w_ih.T                   # kernel uses (in, 4H)
        params[f"w_hh_{l}"] = w_hh.T                   # (H, 4H)
        params[f"b_{l}"] = (b_ih + b_hh).reshape(1, 4 * H)
    # Linear layers: PyTorch weight is (out, in); store transposed + 2D biases.
    params["fc1_w"] = u((F1, H), 1.0 / float(H) ** 0.5).T
    params["fc1_b"] = u((F1,), 1.0 / float(H) ** 0.5).reshape(1, F1)
    params["fc2_w"] = u((F2, F1), 1.0 / float(F1) ** 0.5).T
    params["fc2_b"] = u((F2,), 1.0 / float(F1) ** 0.5).reshape(1, F2)
    params["fc3_w"] = u((output_size, F2), 1.0 / float(F2) ** 0.5).T
    params["fc3_b"] = u((output_size,), 1.0 / float(F2) ** 0.5).reshape(1, output_size)
    return params


def reference_forward(params, x_ids, hidden):
    """Pure-JAX reference (eval-mode PyTorch semantics, un-fused) for verification."""
    h0, c0 = hidden
    B, T = x_ids.shape
    L, _, H = h0.shape
    x_seq = params["embedding"][x_ids]                 # (B, T, E)
    hs, cs = [], []
    for l in range(L):
        w_ih, w_hh, b = params[f"w_ih_{l}"], params[f"w_hh_{l}"], params[f"b_{l}"]
        h, c = h0[l], c0[l]
        outs = []
        for t in range(T):
            gates = x_seq[:, t, :] @ w_ih + h @ w_hh + b
            i = jax.nn.sigmoid(gates[:, :H])
            f = jax.nn.sigmoid(gates[:, H:2 * H])
            g = jnp.tanh(gates[:, 2 * H:3 * H])
            o = jax.nn.sigmoid(gates[:, 3 * H:])
            c = f * c + i * g
            h = o * jnp.tanh(c)
            outs.append(h)
        x_seq = jnp.stack(outs, axis=1)
        hs.append(h)
        cs.append(c)
    out = x_seq.reshape(-1, H)
    out = out @ params["fc1_w"] + params["fc1_b"]
    out = out @ params["fc2_w"] + params["fc2_b"]
    out = out @ params["fc3_w"] + params["fc3_b"]
    sig = jax.nn.sigmoid(out).reshape(B, -1)
    return sig[:, -1], (jnp.stack(hs), jnp.stack(cs))


if __name__ == "__main__":
    # Small shapes consistent with the module.
    vocab_size, output_size = 50, 1
    embedding_dim, hidden_dim, n_layers = 32, 32, 2
    B, T = 2, 8

    key = jax.random.PRNGKey(0)
    kp, kx = jax.random.split(key)
    params = init_params(kp, vocab_size, output_size, embedding_dim, hidden_dim, n_layers)

    x_ids = jax.random.randint(kx, (B, T), 0, vocab_size, dtype=jnp.int32)
    # init_hidden(batch_size): zeros of shape (n_layers, B, hidden_dim)
    h0 = jnp.zeros((n_layers, B, hidden_dim), jnp.float32)
    c0 = jnp.zeros((n_layers, B, hidden_dim), jnp.float32)

    sig_out, (hn, cn) = classifier_forward(params, x_ids, (h0, c0))
    jax.block_until_ready((sig_out, hn, cn))

    ref_sig, (ref_hn, ref_cn) = reference_forward(params, x_ids, (h0, c0))
    assert sig_out.shape == (B,)
    assert hn.shape == (n_layers, B, hidden_dim) and cn.shape == (n_layers, B, hidden_dim)
    assert jnp.allclose(sig_out, ref_sig, atol=1e-5), "sig_out mismatch"
    assert jnp.allclose(hn, ref_hn, atol=1e-5), "h_n mismatch"
    assert jnp.allclose(cn, ref_cn, atol=1e-5), "c_n mismatch"

    print("KERNEL_OK")
</pallas_src>

<mosaic_0001>
module attributes {stable_mosaic.version = 11 : i64} {
  func.func @kernel(%arg0: memref<2x8xi32, #tpu.memory_space<smem>>, %arg1: memref<50x32xf32, #tpu.memory_space<vmem>>, %arg2: memref<2x2x32xf32, #tpu.memory_space<vmem>>, %arg3: memref<2x2x32xf32, #tpu.memory_space<vmem>>, %arg4: memref<32x128xf32, #tpu.memory_space<vmem>>, %arg5: memref<32x128xf32, #tpu.memory_space<vmem>>, %arg6: memref<1x128xf32, #tpu.memory_space<vmem>>, %arg7: memref<32x128xf32, #tpu.memory_space<vmem>>, %arg8: memref<32x128xf32, #tpu.memory_space<vmem>>, %arg9: memref<1x128xf32, #tpu.memory_space<vmem>>, %arg10: memref<32x64xf32, #tpu.memory_space<vmem>>, %arg11: memref<1x64xf32, #tpu.memory_space<vmem>>, %arg12: memref<64x16xf32, #tpu.memory_space<vmem>>, %arg13: memref<1x16xf32, #tpu.memory_space<vmem>>, %arg14: memref<16x1xf32, #tpu.memory_space<vmem>>, %arg15: memref<1x1xf32, #tpu.memory_space<vmem>>, %arg16: memref<2x1xf32, #tpu.memory_space<vmem>>, %arg17: memref<2x2x32xf32, #tpu.memory_space<vmem>>, %arg18: memref<2x2x32xf32, #tpu.memory_space<vmem>>) attributes {dimension_semantics = [], scalar_prefetch = 0 : i64, scratch_operands = 0 : i64, tpu.core_type = #tpu.core_type<tc>} {
    %c0 = arith.constant 0 : index
    %c0_0 = arith.constant 0 : index
    %0 = vector.load %arg4[%c0, %c0_0] : memref<32x128xf32, #tpu.memory_space<vmem>>, vector<32x128xf32>
    %c0_1 = arith.constant 0 : index
    %c0_2 = arith.constant 0 : index
    %1 = vector.load %arg7[%c0_1, %c0_2] : memref<32x128xf32, #tpu.memory_space<vmem>>, vector<32x128xf32>
    %c0_3 = arith.constant 0 : index
    %c0_4 = arith.constant 0 : index
    %2 = vector.load %arg5[%c0_3, %c0_4] : memref<32x128xf32, #tpu.memory_space<vmem>>, vector<32x128xf32>
    %c0_5 = arith.constant 0 : index
    %c0_6 = arith.constant 0 : index
    %3 = vector.load %arg8[%c0_5, %c0_6] : memref<32x128xf32, #tpu.memory_space<vmem>>, vector<32x128xf32>
    %c0_7 = arith.constant 0 : index
    %c0_8 = arith.constant 0 : index
    %4 = vector.load %arg9[%c0_7, %c0_8] : memref<1x128xf32, #tpu.memory_space<vmem>>, vector<1x128xf32>
    %5 = vector.shape_cast %4 : vector<1x128xf32> to vector<1x128xf32>
    %6 = vector.broadcast %5 : vector<1x128xf32> to vector<2x128xf32>
    %c0_9 = arith.constant 0 : index
    %c0_10 = arith.constant 0 : index
    %c0_11 = arith.constant 0 : index
    %7 = vector.load %arg2[%c0_9, %c0_10, %c0_11] : memref<2x2x32xf32, #tpu.memory_space<vmem>>, vector<1x2x32xf32>
    %8 = vector.shape_cast %7 : vector<1x2x32xf32> to vector<2x32xf32>
    %c1 = arith.constant 1 : index
    %c0_12 = arith.constant 0 : index
    %c0_13 = arith.constant 0 : index
    %9 = vector.load %arg2[%c1, %c0_12, %c0_13] : memref<2x2x32xf32, #tpu.memory_space<vmem>>, vector<1x2x32xf32>
    %10 = vector.shape_cast %9 : vector<1x2x32xf32> to vector<2x32xf32>
    %c0_14 = arith.constant 0 : index
    %c0_15 = arith.constant 0 : index
    %c0_16 = arith.constant 0 : index
    %11 = vector.load %arg3[%c0_14, %c0_15, %c0_16] : memref<2x2x32xf32, #tpu.memory_space<vmem>>, vector<1x2x32xf32>
    %12 = vector.shape_cast %11 : vector<1x2x32xf32> to vector<2x32xf32>
    %c1_17 = arith.constant 1 : index
    %c0_18 = arith.constant 0 : index
    %c0_19 = arith.constant 0 : index
    %13 = vector.load %arg3[%c1_17, %c0_18, %c0_19] : memref<2x2x32xf32, #tpu.memory_space<vmem>>, vector<1x2x32xf32>
    %14 = vector.shape_cast %13 : vector<1x2x32xf32> to vector<2x32xf32>
    %c0_20 = arith.constant 0 : index
    %c0_21 = arith.constant 0 : index
    %15 = memref.load %arg0[%c0_20, %c0_21] : memref<2x8xi32, #tpu.memory_space<smem>>
    %16 = arith.index_cast %15 : i32 to index
    %c0_22 = arith.constant 0 : index
    %17 = vector.load %arg1[%16, %c0_22] : memref<50x32xf32, #tpu.memory_space<vmem>>, vector<1x32xf32>
    %c1_23 = arith.constant 1 : index
    %c0_24 = arith.constant 0 : index
    %18 = memref.load %arg0[%c1_23, %c0_24] : memref<2x8xi32, #tpu.memory_space<smem>>
    %19 = arith.index_cast %18 : i32 to index
    %c0_25 = arith.constant 0 : index
    %20 = vector.load %arg1[%19, %c0_25] : memref<50x32xf32, #tpu.memory_space<vmem>>, vector<1x32xf32>
    %c0_26 = arith.constant 0 : index
    %c1_27 = arith.constant 1 : index
    %21 = memref.load %arg0[%c0_26, %c1_27] : memref<2x8xi32, #tpu.memory_space<smem>>
    %22 = arith.index_cast %21 : i32 to index
    %c0_28 = arith.constant 0 : index
    %23 = vector.load %arg1[%22, %c0_28] : memref<50x32xf32, #tpu.memory_space<vmem>>, vector<1x32xf32>
    %c1_29 = arith.constant 1 : index
    %c1_30 = arith.constant 1 : index
    %24 = memref.load %arg0[%c1_29, %c1_30] : memref<2x8xi32, #tpu.memory_space<smem>>
    %25 = arith.index_cast %24 : i32 to index
    %c0_31 = arith.constant 0 : index
    %26 = vector.load %arg1[%25, %c0_31] : memref<50x32xf32, #tpu.memory_space<vmem>>, vector<1x32xf32>
    %c0_32 = arith.constant 0 : index
    %c2 = arith.constant 2 : index
    %27 = memref.load %arg0[%c0_32, %c2] : memref<2x8xi32, #tpu.memory_space<smem>>
    %28 = arith.index_cast %27 : i32 to index
    %c0_33 = arith.constant 0 : index
    %29 = vector.load %arg1[%28, %c0_33] : memref<50x32xf32, #tpu.memory_space<vmem>>, vector<1x32xf32>
    %c1_34 = arith.constant 1 : index
    %c2_35 = arith.constant 2 : index
    %30 = memref.load %arg0[%c1_34, %c2_35] : memref<2x8xi32, #tpu.memory_space<smem>>
    %31 = arith.index_cast %30 : i32 to index
    %c0_36 = arith.constant 0 : index
    %32 = vector.load %arg1[%31, %c0_36] : memref<50x32xf32, #tpu.memory_space<vmem>>, vector<1x32xf32>
    %c0_37 = arith.constant 0 : index
    %c3 = arith.constant 3 : index
    %33 = memref.load %arg0[%c0_37, %c3] : memref<2x8xi32, #tpu.memory_space<smem>>
    %34 = arith.index_cast %33 : i32 to index
    %c0_38 = arith.constant 0 : index
    %35 = vector.load %arg1[%34, %c0_38] : memref<50x32xf32, #tpu.memory_space<vmem>>, vector<1x32xf32>
    %c1_39 = arith.constant 1 : index
    %c3_40 = arith.constant 3 : index
    %36 = memref.load %arg0[%c1_39, %c3_40] : memref<2x8xi32, #tpu.memory_space<smem>>
    %37 = arith.index_cast %36 : i32 to index
    %c0_41 = arith.constant 0 : index
    %38 = vector.load %arg1[%37, %c0_41] : memref<50x32xf32, #tpu.memory_space<vmem>>, vector<1x32xf32>
    %c0_42 = arith.constant 0 : index
    %c4 = arith.constant 4 : index
    %39 = memref.load %arg0[%c0_42, %c4] : memref<2x8xi32, #tpu.memory_space<smem>>
    %40 = arith.index_cast %39 : i32 to index
    %c0_43 = arith.constant 0 : index
    %41 = vector.load %arg1[%40, %c0_43] : memref<50x32xf32, #tpu.memory_space<vmem>>, vector<1x32xf32>
    %c1_44 = arith.constant 1 : index
    %c4_45 = arith.constant 4 : index
    %42 = memref.load %arg0[%c1_44, %c4_45] : memref<2x8xi32, #tpu.memory_space<smem>>
    %43 = arith.index_cast %42 : i32 to index
    %c0_46 = arith.constant 0 : index
    %44 = vector.load %arg1[%43, %c0_46] : memref<50x32xf32, #tpu.memory_space<vmem>>, vector<1x32xf32>
    %c0_47 = arith.constant 0 : index
    %c5 = arith.constant 5 : index
    %45 = memref.load %arg0[%c0_47, %c5] : memref<2x8xi32, #tpu.memory_space<smem>>
    %46 = arith.index_cast %45 : i32 to index
    %c0_48 = arith.constant 0 : index
    %47 = vector.load %arg1[%46, %c0_48] : memref<50x32xf32, #tpu.memory_space<vmem>>, vector<1x32xf32>
    %c1_49 = arith.constant 1 : index
    %c5_50 = arith.constant 5 : index
    %48 = memref.load %arg0[%c1_49, %c5_50] : memref<2x8xi32, #tpu.memory_space<smem>>
    %49 = arith.index_cast %48 : i32 to index
    %c0_51 = arith.constant 0 : index
    %50 = vector.load %arg1[%49, %c0_51] : memref<50x32xf32, #tpu.memory_space<vmem>>, vector<1x32xf32>
    %c0_52 = arith.constant 0 : index
    %c6 = arith.constant 6 : index
    %51 = memref.load %arg0[%c0_52, %c6] : memref<2x8xi32, #tpu.memory_space<smem>>
    %52 = arith.index_cast %51 : i32 to index
    %c0_53 = arith.constant 0 : index
    %53 = vector.load %arg1[%52, %c0_53] : memref<50x32xf32, #tpu.memory_space<vmem>>, vector<1x32xf32>
    %c1_54 = arith.constant 1 : index
    %c6_55 = arith.constant 6 : index
    %54 = memref.load %arg0[%c1_54, %c6_55] : memref<2x8xi32, #tpu.memory_space<smem>>
    %55 = arith.index_cast %54 : i32 to index
    %c0_56 = arith.constant 0 : index
    %56 = vector.load %arg1[%55, %c0_56] : memref<50x32xf32, #tpu.memory_space<vmem>>, vector<1x32xf32>
    %c0_57 = arith.constant 0 : index
    %c7 = arith.constant 7 : index
    %57 = memref.load %arg0[%c0_57, %c7] : memref<2x8xi32, #tpu.memory_space<smem>>
    %58 = arith.index_cast %57 : i32 to index
    %c0_58 = arith.constant 0 : index
    %59 = vector.load %arg1[%58, %c0_58] : memref<50x32xf32, #tpu.memory_space<vmem>>, vector<1x32xf32>
    %c1_59 = arith.constant 1 : index
    %c7_60 = arith.constant 7 : index
    %60 = memref.load %arg0[%c1_59, %c7_60] : memref<2x8xi32, #tpu.memory_space<smem>>
    %61 = arith.index_cast %60 : i32 to index
    %c0_61 = arith.constant 0 : index
    %62 = vector.load %arg1[%61, %c0_61] : memref<50x32xf32, #tpu.memory_space<vmem>>, vector<1x32xf32>
    %63 = tpu.concatenate %17, %20, %23, %26, %29, %32, %35, %38, %41, %44, %47, %50, %53, %56, %59, %62 in 0 : vector<1x32xf32>, vector<1x32xf32>, vector<1x32xf32>, vector<1x32xf32>, vector<1x32xf32>, vector<1x32xf32>, vector<1x32xf32>, vector<1x32xf32>, vector<1x32xf32>, vector<1x32xf32>, vector<1x32xf32>, vector<1x32xf32>, vector<1x32xf32>, vector<1x32xf32>, vector<1x32xf32>, vector<1x32xf32> -> vector<16x32xf32>
    %cst = arith.constant dense<0.000000e+00> : vector<16x128xf32>
    %64 = tpu.matmul %63, %0, %cst {dimension_numbers = #tpu.dot_dimension_numbers<[1], [0], [0], [1], [0, 0, 1, 1], [], []>} : vector<16x32xf32>, vector<32x128xf32>, vector<16x128xf32> -> vector<16x128xf32>
    %c0_62 = arith.constant 0 : index
    %c0_63 = arith.constant 0 : index
    %65 = vector.load %arg6[%c0_62, %c0_63] : memref<1x128xf32, #tpu.memory_space<vmem>>, vector<1x128xf32>
    %66 = vector.broadcast %65 : vector<1x128xf32> to vector<16x128xf32>
    %67 = arith.addf %64, %66 : vector<16x128xf32>
    %68 = vector.extract_strided_slice %67 {offsets = [0, 0], sizes = [2, 128], strides = [1, 1]} : vector<16x128xf32> to vector<2x128xf32>
    %69 = vector.extract_strided_slice %67 {offsets = [2, 0], sizes = [2, 128], strides = [1, 1]} : vector<16x128xf32> to vector<2x128xf32>
    %70 = vector.extract_strided_slice %67 {offsets = [4, 0], sizes = [2, 128], strides = [1, 1]} : vector<16x128xf32> to vector<2x128xf32>
    %71 = vector.extract_strided_slice %67 {offsets = [6, 0], sizes = [2, 128], strides = [1, 1]} : vector<16x128xf32> to vector<2x128xf32>
    %72 = vector.extract_strided_slice %67 {offsets = [8, 0], sizes = [2, 128], strides = [1, 1]} : vector<16x128xf32> to vector<2x128xf32>
    %73 = vector.extract_strided_slice %67 {offsets = [10, 0], sizes = [2, 128], strides = [1, 1]} : vector<16x128xf32> to vector<2x128xf32>
    %74 = vector.extract_strided_slice %67 {offsets = [12, 0], sizes = [2, 128], strides = [1, 1]} : vector<16x128xf32> to vector<2x128xf32>
    %75 = vector.extract_strided_slice %67 {offsets = [14, 0], sizes = [2, 128], strides = [1, 1]} : vector<16x128xf32> to vector<2x128xf32>
    %cst_64 = arith.constant dense<0.000000e+00> : vector<2x128xf32>
    %76 = tpu.matmul %8, %2, %cst_64 {dimension_numbers = #tpu.dot_dimension_numbers<[1], [0], [0], [1], [0, 0, 1, 1], [], []>} : vector<2x32xf32>, vector<32x128xf32>, vector<2x128xf32> -> vector<2x128xf32>
    %77 = arith.addf %68, %76 : vector<2x128xf32>
    %78 = arith.negf %77 : vector<2x128xf32>
    %79 = math.exp %78 : vector<2x128xf32>
    %cst_65 = arith.constant 1.000000e+00 : f32
    %80 = vector.broadcast %cst_65 : f32 to vector<2x128xf32>
    %81 = arith.addf %80, %79 : vector<2x128xf32>
    %82 = arith.divf %80, %81 : vector<2x128xf32>
    %83 = math.tanh %77 : vector<2x128xf32>
    %84 = vector.extract_strided_slice %82 {offsets = [0, 0], sizes = [2, 32], strides = [1, 1]} : vector<2x128xf32> to vector<2x32xf32>
    %85 = vector.extract_strided_slice %82 {offsets = [0, 32], sizes = [2, 32], strides = [1, 1]} : vector<2x128xf32> to vector<2x32xf32>
    %86 = vector.extract_strided_slice %83 {offsets = [0, 64], sizes = [2, 32], strides = [1, 1]} : vector<2x128xf32> to vector<2x32xf32>
    %87 = vector.extract_strided_slice %82 {offsets = [0, 96], sizes = [2, 32], strides = [1, 1]} : vector<2x128xf32> to vector<2x32xf32>
    %88 = arith.mulf %85, %12 : vector<2x32xf32>
    %89 = arith.mulf %84, %86 : vector<2x32xf32>
    %90 = arith.addf %88, %89 : vector<2x32xf32>
    %91 = math.tanh %90 : vector<2x32xf32>
    %92 = arith.mulf %87, %91 : vector<2x32xf32>
    %cst_66 = arith.constant dense<0.000000e+00> : vector<2x128xf32>
    %93 = tpu.matmul %92, %1, %cst_66 {dimension_numbers = #tpu.dot_dimension_numbers<[1], [0], [0], [1], [0, 0, 1, 1], [], []>} : vector<2x32xf32>, vector<32x128xf32>, vector<2x128xf32> -> vector<2x128xf32>
    %94 = arith.addf %93, %6 : vector<2x128xf32>
    %cst_67 = arith.constant dense<0.000000e+00> : vector<2x128xf32>
    %95 = tpu.matmul %92, %2, %cst_67 {dimension_numbers = #tpu.dot_dimension_numbers<[1], [0], [0], [1], [0, 0, 1, 1], [], []>} : vector<2x32xf32>, vector<32x128xf32>, vector<2x128xf32> -> vector<2x128xf32>
    %96 = arith.addf %69, %95 : vector<2x128xf32>
    %97 = arith.negf %96 : vector<2x128xf32>
    %98 = math.exp %97 : vector<2x128xf32>
    %cst_68 = arith.constant 1.000000e+00 : f32
    %99 = vector.broadcast %cst_68 : f32 to vector<2x128xf32>
    %100 = arith.addf %99, %98 : vector<2x128xf32>
    %101 = arith.divf %99, %100 : vector<2x128xf32>
    %102 = math.tanh %96 : vector<2x128xf32>
    %103 = vector.extract_strided_slice %101 {offsets = [0, 0], sizes = [2, 32], strides = [1, 1]} : vector<2x128xf32> to vector<2x32xf32>
    %104 = vector.extract_strided_slice %101 {offsets = [0, 32], sizes = [2, 32], strides = [1, 1]} : vector<2x128xf32> to vector<2x32xf32>
    %105 = vector.extract_strided_slice %102 {offsets = [0, 64], sizes = [2, 32], strides = [1, 1]} : vector<2x128xf32> to vector<2x32xf32>
    %106 = vector.extract_strided_slice %101 {offsets = [0, 96], sizes = [2, 32], strides = [1, 1]} : vector<2x128xf32> to vector<2x32xf32>
    %107 = arith.mulf %104, %90 : vector<2x32xf32>
    %108 = arith.mulf %103, %105 : vector<2x32xf32>
    %109 = arith.addf %107, %108 : vector<2x32xf32>
    %110 = math.tanh %109 : vector<2x32xf32>
    %111 = arith.mulf %106, %110 : vector<2x32xf32>
    %cst_69 = arith.constant dense<0.000000e+00> : vector<2x128xf32>
    %112 = tpu.matmul %10, %3, %cst_69 {dimension_numbers = #tpu.dot_dimension_numbers<[1], [0], [0], [1], [0, 0, 1, 1], [], []>} : vector<2x32xf32>, vector<32x128xf32>, vector<2x128xf32> -> vector<2x128xf32>
    %113 = arith.addf %94, %112 : vector<2x128xf32>
    %114 = arith.negf %113 : vector<2x128xf32>
    %115 = math.exp %114 : vector<2x128xf32>
    %cst_70 = arith.constant 1.000000e+00 : f32
    %116 = vector.broadcast %cst_70 : f32 to vector<2x128xf32>
    %117 = arith.addf %116, %115 : vector<2x128xf32>
    %118 = arith.divf %116, %117 : vector<2x128xf32>
    %119 = math.tanh %113 : vector<2x128xf32>
    %120 = vector.extract_strided_slice %118 {offsets = [0, 0], sizes = [2, 32], strides = [1, 1]} : vector<2x128xf32> to vector<2x32xf32>
    %121 = vector.extract_strided_slice %118 {offsets = [0, 32], sizes = [2, 32], strides = [1, 1]} : vector<2x128xf32> to vector<2x32xf32>
    %122 = vector.extract_strided_slice %119 {offsets = [0, 64], sizes = [2, 32], strides = [1, 1]} : vector<2x128xf32> to vector<2x32xf32>
    %123 = vector.extract_strided_slice %118 {offsets = [0, 96], sizes = [2, 32], strides = [1, 1]} : vector<2x128xf32> to vector<2x32xf32>
    %124 = arith.mulf %121, %14 : vector<2x32xf32>
    %125 = arith.mulf %120, %122 : vector<2x32xf32>
    %126 = arith.addf %124, %125 : vector<2x32xf32>
    %127 = math.tanh %126 : vector<2x32xf32>
    %128 = arith.mulf %123, %127 : vector<2x32xf32>
    %cst_71 = arith.constant dense<0.000000e+00> : vector<2x128xf32>
    %129 = tpu.matmul %111, %1, %cst_71 {dimension_numbers = #tpu.dot_dimension_numbers<[1], [0], [0], [1], [0, 0, 1, 1], [], []>} : vector<2x32xf32>, vector<32x128xf32>, vector<2x128xf32> -> vector<2x128xf32>
    %130 = arith.addf %129, %6 : vector<2x128xf32>
    %cst_72 = arith.constant dense<0.000000e+00> : vector<2x128xf32>
    %131 = tpu.matmul %111, %2, %cst_72 {dimension_numbers = #tpu.dot_dimension_numbers<[1], [0], [0], [1], [0, 0, 1, 1], [], []>} : vector<2x32xf32>, vector<32x128xf32>, vector<2x128xf32> -> vector<2x128xf32>
    %132 = arith.addf %70, %131 : vector<2x128xf32>
    %133 = arith.negf %132 : vector<2x128xf32>
    %134 = math.exp %133 : vector<2x128xf32>
    %cst_73 = arith.constant 1.000000e+00 : f32
    %135 = vector.broadcast %cst_73 : f32 to vector<2x128xf32>
    %136 = arith.addf %135, %134 : vector<2x128xf32>
    %137 = arith.divf %135, %136 : vector<2x128xf32>
    %138 = math.tanh %132 : vector<2x128xf32>
    %139 = vector.extract_strided_slice %137 {offsets = [0, 0], sizes = [2, 32], strides = [1, 1]} : vector<2x128xf32> to vector<2x32xf32>
    %140 = vector.extract_strided_slice %137 {offsets = [0, 32], sizes = [2, 32], strides = [1, 1]} : vector<2x128xf32> to vector<2x32xf32>
    %141 = vector.extract_strided_slice %138 {offsets = [0, 64], sizes = [2, 32], strides = [1, 1]} : vector<2x128xf32> to vector<2x32xf32>
    %142 = vector.extract_strided_slice %137 {offsets = [0, 96], sizes = [2, 32], strides = [1, 1]} : vector<2x128xf32> to vector<2x32xf32>
    %143 = arith.mulf %140, %109 : vector<2x32xf32>
    %144 = arith.mulf %139, %141 : vector<2x32xf32>
    %145 = arith.addf %143, %144 : vector<2x32xf32>
    %146 = math.tanh %145 : vector<2x32xf32>
    %147 = arith.mulf %142, %146 : vector<2x32xf32>
    %cst_74 = arith.constant dense<0.000000e+00> : vector<2x128xf32>
    %148 = tpu.matmul %128, %3, %cst_74 {dimension_numbers = #tpu.dot_dimension_numbers<[1], [0], [0], [1], [0, 0, 1, 1], [], []>} : vector<2x32xf32>, vector<32x128xf32>, vector<2x128xf32> -> vector<2x128xf32>
    %149 = arith.addf %130, %148 : vector<2x128xf32>
    %150 = arith.negf %149 : vector<2x128xf32>
    %151 = math.exp %150 : vector<2x128xf32>
    %cst_75 = arith.constant 1.000000e+00 : f32
    %152 = vector.broadcast %cst_75 : f32 to vector<2x128xf32>
    %153 = arith.addf %152, %151 : vector<2x128xf32>
    %154 = arith.divf %152, %153 : vector<2x128xf32>
    %155 = math.tanh %149 : vector<2x128xf32>
    %156 = vector.extract_strided_slice %154 {offsets = [0, 0], sizes = [2, 32], strides = [1, 1]} : vector<2x128xf32> to vector<2x32xf32>
    %157 = vector.extract_strided_slice %154 {offsets = [0, 32], sizes = [2, 32], strides = [1, 1]} : vector<2x128xf32> to vector<2x32xf32>
    %158 = vector.extract_strided_slice %155 {offsets = [0, 64], sizes = [2, 32], strides = [1, 1]} : vector<2x128xf32> to vector<2x32xf32>
    %159 = vector.extract_strided_slice %154 {offsets = [0, 96], sizes = [2, 32], strides = [1, 1]} : vector<2x128xf32> to vector<2x32xf32>
    %160 = arith.mulf %157, %126 : vector<2x32xf32>
    %161 = arith.mulf %156, %158 : vector<2x32xf32>
    %162 = arith.addf %160, %161 : vector<2x32xf32>
    %163 = math.tanh %162 : vector<2x32xf32>
    %164 = arith.mulf %159, %163 : vector<2x32xf32>
    %cst_76 = arith.constant dense<0.000000e+00> : vector<2x128xf32>
    %165 = tpu.matmul %147, %1, %cst_76 {dimension_numbers = #tpu.dot_dimension_numbers<[1], [0], [0], [1], [0, 0, 1, 1], [], []>} : vector<2x32xf32>, vector<32x128xf32>, vector<2x128xf32> -> vector<2x128xf32>
    %166 = arith.addf %165, %6 : vector<2x128xf32>
    %cst_77 = arith.constant dense<0.000000e+00> : vector<2x128xf32>
    %167 = tpu.matmul %147, %2, %cst_77 {dimension_numbers = #tpu.dot_dimension_numbers<[1], [0], [0], [1], [0, 0, 1, 1], [], []>} : vector<2x32xf32>, vector<32x128xf32>, vector<2x128xf32> -> vector<2x128xf32>
    %168 = arith.addf %71, %167 : vector<2x128xf32>
    %169 = arith.negf %168 : vector<2x128xf32>
    %170 = math.exp %169 : vector<2x128xf32>
    %cst_78 = arith.constant 1.000000e+00 : f32
    %171 = vector.broadcast %cst_78 : f32 to vector<2x128xf32>
    %172 = arith.addf %171, %170 : vector<2x128xf32>
    %173 = arith.divf %171, %172 : vector<2x128xf32>
    %174 = math.tanh %168 : vector<2x128xf32>
    %175 = vector.extract_strided_slice %173 {offsets = [0, 0], sizes = [2, 32], strides = [1, 1]} : vector<2x128xf32> to vector<2x32xf32>
    %176 = vector.extract_strided_slice %173 {offsets = [0, 32], sizes = [2, 32], strides = [1, 1]} : vector<2x128xf32> to vector<2x32xf32>
    %177 = vector.extract_strided_slice %174 {offsets = [0, 64], sizes = [2, 32], strides = [1, 1]} : vector<2x128xf32> to vector<2x32xf32>
    %178 = vector.extract_strided_slice %173 {offsets = [0, 96], sizes = [2, 32], strides = [1, 1]} : vector<2x128xf32> to vector<2x32xf32>
    %179 = arith.mulf %176, %145 : vector<2x32xf32>
    %180 = arith.mulf %175, %177 : vector<2x32xf32>
    %181 = arith.addf %179, %180 : vector<2x32xf32>
    %182 = math.tanh %181 : vector<2x32xf32>
    %183 = arith.mulf %178, %182 : vector<2x32xf32>
    %cst_79 = arith.constant dense<0.000000e+00> : vector<2x128xf32>
    %184 = tpu.matmul %164, %3, %cst_79 {dimension_numbers = #tpu.dot_dimension_numbers<[1], [0], [0], [1], [0, 0, 1, 1], [], []>} : vector<2x32xf32>, vector<32x128xf32>, vector<2x128xf32> -> vector<2x128xf32>
    %185 = arith.addf %166, %184 : vector<2x128xf32>
    %186 = arith.negf %185 : vector<2x128xf32>
    %187 = math.exp %186 : vector<2x128xf32>
    %cst_80 = arith.constant 1.000000e+00 : f32
    %188 = vector.broadcast %cst_80 : f32 to vector<2x128xf32>
    %189 = arith.addf %188, %187 : vector<2x128xf32>
    %190 = arith.divf %188, %189 : vector<2x128xf32>
    %191 = math.tanh %185 : vector<2x128xf32>
    %192 = vector.extract_strided_slice %190 {offsets = [0, 0], sizes = [2, 32], strides = [1, 1]} : vector<2x128xf32> to vector<2x32xf32>
    %193 = vector.extract_strided_slice %190 {offsets = [0, 32], sizes = [2, 32], strides = [1, 1]} : vector<2x128xf32> to vector<2x32xf32>
    %194 = vector.extract_strided_slice %191 {offsets = [0, 64], sizes = [2, 32], strides = [1, 1]} : vector<2x128xf32> to vector<2x32xf32>
    %195 = vector.extract_strided_slice %190 {offsets = [0, 96], sizes = [2, 32], strides = [1, 1]} : vector<2x128xf32> to vector<2x32xf32>
    %196 = arith.mulf %193, %162 : vector<2x32xf32>
    %197 = arith.mulf %192, %194 : vector<2x32xf32>
    %198 = arith.addf %196, %197 : vector<2x32xf32>
    %199 = math.tanh %198 : vector<2x32xf32>
    %200 = arith.mulf %195, %199 : vector<2x32xf32>
    %cst_81 = arith.constant dense<0.000000e+00> : vector<2x128xf32>
    %201 = tpu.matmul %183, %1, %cst_81 {dimension_numbers = #tpu.dot_dimension_numbers<[1], [0], [0], [1], [0, 0, 1, 1], [], []>} : vector<2x32xf32>, vector<32x128xf32>, vector<2x128xf32> -> vector<2x128xf32>
    %202 = arith.addf %201, %6 : vector<2x128xf32>
    %cst_82 = arith.constant dense<0.000000e+00> : vector<2x128xf32>
    %203 = tpu.matmul %183, %2, %cst_82 {dimension_numbers = #tpu.dot_dimension_numbers<[1], [0], [0], [1], [0, 0, 1, 1], [], []>} : vector<2x32xf32>, vector<32x128xf32>, vector<2x128xf32> -> vector<2x128xf32>
    %204 = arith.addf %72, %203 : vector<2x128xf32>
    %205 = arith.negf %204 : vector<2x128xf32>
    %206 = math.exp %205 : vector<2x128xf32>
    %cst_83 = arith.constant 1.000000e+00 : f32
    %207 = vector.broadcast %cst_83 : f32 to vector<2x128xf32>
    %208 = arith.addf %207, %206 : vector<2x128xf32>
    %209 = arith.divf %207, %208 : vector<2x128xf32>
    %210 = math.tanh %204 : vector<2x128xf32>
    %211 = vector.extract_strided_slice %209 {offsets = [0, 0], sizes = [2, 32], strides = [1, 1]} : vector<2x128xf32> to vector<2x32xf32>
    %212 = vector.extract_strided_slice %209 {offsets = [0, 32], sizes = [2, 32], strides = [1, 1]} : vector<2x128xf32> to vector<2x32xf32>
    %213 = vector.extract_strided_slice %210 {offsets = [0, 64], sizes = [2, 32], strides = [1, 1]} : vector<2x128xf32> to vector<2x32xf32>
    %214 = vector.extract_strided_slice %209 {offsets = [0, 96], sizes = [2, 32], strides = [1, 1]} : vector<2x128xf32> to vector<2x32xf32>
    %215 = arith.mulf %212, %181 : vector<2x32xf32>
    %216 = arith.mulf %211, %213 : vector<2x32xf32>
    %217 = arith.addf %215, %216 : vector<2x32xf32>
    %218 = math.tanh %217 : vector<2x32xf32>
    %219 = arith.mulf %214, %218 : vector<2x32xf32>
    %cst_84 = arith.constant dense<0.000000e+00> : vector<2x128xf32>
    %220 = tpu.matmul %200, %3, %cst_84 {dimension_numbers = #tpu.dot_dimension_numbers<[1], [0], [0], [1], [0, 0, 1, 1], [], []>} : vector<2x32xf32>, vector<32x128xf32>, vector<2x128xf32> -> vector<2x128xf32>
    %221 = arith.addf %202, %220 : vector<2x128xf32>
    %222 = arith.negf %221 : vector<2x128xf32>
    %223 = math.exp %222 : vector<2x128xf32>
    %cst_85 = arith.constant 1.000000e+00 : f32
    %224 = vector.broadcast %cst_85 : f32 to vector<2x128xf32>
    %225 = arith.addf %224, %223 : vector<2x128xf32>
    %226 = arith.divf %224, %225 : vector<2x128xf32>
    %227 = math.tanh %221 : vector<2x128xf32>
    %228 = vector.extract_strided_slice %226 {offsets = [0, 0], sizes = [2, 32], strides = [1, 1]} : vector<2x128xf32> to vector<2x32xf32>
    %229 = vector.extract_strided_slice %226 {offsets = [0, 32], sizes = [2, 32], strides = [1, 1]} : vector<2x128xf32> to vector<2x32xf32>
    %230 = vector.extract_strided_slice %227 {offsets = [0, 64], sizes = [2, 32], strides = [1, 1]} : vector<2x128xf32> to vector<2x32xf32>
    %231 = vector.extract_strided_slice %226 {offsets = [0, 96], sizes = [2, 32], strides = [1, 1]} : vector<2x128xf32> to vector<2x32xf32>
    %232 = arith.mulf %229, %198 : vector<2x32xf32>
    %233 = arith.mulf %228, %230 : vector<2x32xf32>
    %234 = arith.addf %232, %233 : vector<2x32xf32>
    %235 = math.tanh %234 : vector<2x32xf32>
    %236 = arith.mulf %231, %235 : vector<2x32xf32>
    %cst_86 = arith.constant dense<0.000000e+00> : vector<2x128xf32>
    %237 = tpu.matmul %219, %1, %cst_86 {dimension_numbers = #tpu.dot_dimension_numbers<[1], [0], [0], [1], [0, 0, 1, 1], [], []>} : vector<2x32xf32>, vector<32x128xf32>, vector<2x128xf32> -> vector<2x128xf32>
    %238 = arith.addf %237, %6 : vector<2x128xf32>
    %cst_87 = arith.constant dense<0.000000e+00> : vector<2x128xf32>
    %239 = tpu.matmul %219, %2, %cst_87 {dimension_numbers = #tpu.dot_dimension_numbers<[1], [0], [0], [1], [0, 0, 1, 1], [], []>} : vector<2x32xf32>, vector<32x128xf32>, vector<2x128xf32> -> vector<2x128xf32>
    %240 = arith.addf %73, %239 : vector<2x128xf32>
    %241 = arith.negf %240 : vector<2x128xf32>
    %242 = math.exp %241 : vector<2x128xf32>
    %cst_88 = arith.constant 1.000000e+00 : f32
    %243 = vector.broadcast %cst_88 : f32 to vector<2x128xf32>
    %244 = arith.addf %243, %242 : vector<2x128xf32>
    %245 = arith.divf %243, %244 : vector<2x128xf32>
    %246 = math.tanh %240 : vector<2x128xf32>
    %247 = vector.extract_strided_slice %245 {offsets = [0, 0], sizes = [2, 32], strides = [1, 1]} : vector<2x128xf32> to vector<2x32xf32>
    %248 = vector.extract_strided_slice %245 {offsets = [0, 32], sizes = [2, 32], strides = [1, 1]} : vector<2x128xf32> to vector<2x32xf32>
    %249 = vector.extract_strided_slice %246 {offsets = [0, 64], sizes = [2, 32], strides = [1, 1]} : vector<2x128xf32> to vector<2x32xf32>
    %250 = vector.extract_strided_slice %245 {offsets = [0, 96], sizes = [2, 32], strides = [1, 1]} : vector<2x128xf32> to vector<2x32xf32>
    %251 = arith.mulf %248, %217 : vector<2x32xf32>
    %252 = arith.mulf %247, %249 : vector<2x32xf32>
    %253 = arith.addf %251, %252 : vector<2x32xf32>
    %254 = math.tanh %253 : vector<2x32xf32>
    %255 = arith.mulf %250, %254 : vector<2x32xf32>
    %cst_89 = arith.constant dense<0.000000e+00> : vector<2x128xf32>
    %256 = tpu.matmul %236, %3, %cst_89 {dimension_numbers = #tpu.dot_dimension_numbers<[1], [0], [0], [1], [0, 0, 1, 1], [], []>} : vector<2x32xf32>, vector<32x128xf32>, vector<2x128xf32> -> vector<2x128xf32>
    %257 = arith.addf %238, %256 : vector<2x128xf32>
    %258 = arith.negf %257 : vector<2x128xf32>
    %259 = math.exp %258 : vector<2x128xf32>
    %cst_90 = arith.constant 1.000000e+00 : f32
    %260 = vector.broadcast %cst_90 : f32 to vector<2x128xf32>
    %261 = arith.addf %260, %259 : vector<2x128xf32>
    %262 = arith.divf %260, %261 : vector<2x128xf32>
    %263 = math.tanh %257 : vector<2x128xf32>
    %264 = vector.extract_strided_slice %262 {offsets = [0, 0], sizes = [2, 32], strides = [1, 1]} : vector<2x128xf32> to vector<2x32xf32>
    %265 = vector.extract_strided_slice %262 {offsets = [0, 32], sizes = [2, 32], strides = [1, 1]} : vector<2x128xf32> to vector<2x32xf32>
    %266 = vector.extract_strided_slice %263 {offsets = [0, 64], sizes = [2, 32], strides = [1, 1]} : vector<2x128xf32> to vector<2x32xf32>
    %267 = vector.extract_strided_slice %262 {offsets = [0, 96], sizes = [2, 32], strides = [1, 1]} : vector<2x128xf32> to vector<2x32xf32>
    %268 = arith.mulf %265, %234 : vector<2x32xf32>
    %269 = arith.mulf %264, %266 : vector<2x32xf32>
    %270 = arith.addf %268, %269 : vector<2x32xf32>
    %271 = math.tanh %270 : vector<2x32xf32>
    %272 = arith.mulf %267, %271 : vector<2x32xf32>
    %cst_91 = arith.constant dense<0.000000e+00> : vector<2x128xf32>
    %273 = tpu.matmul %255, %1, %cst_91 {dimension_numbers = #tpu.dot_dimension_numbers<[1], [0], [0], [1], [0, 0, 1, 1], [], []>} : vector<2x32xf32>, vector<32x128xf32>, vector<2x128xf32> -> vector<2x128xf32>
    %274 = arith.addf %273, %6 : vector<2x128xf32>
    %cst_92 = arith.constant dense<0.000000e+00> : vector<2x128xf32>
    %275 = tpu.matmul %255, %2, %cst_92 {dimension_numbers = #tpu.dot_dimension_numbers<[1], [0], [0], [1], [0, 0, 1, 1], [], []>} : vector<2x32xf32>, vector<32x128xf32>, vector<2x128xf32> -> vector<2x128xf32>
    %276 = arith.addf %74, %275 : vector<2x128xf32>
    %277 = arith.negf %276 : vector<2x128xf32>
    %278 = math.exp %277 : vector<2x128xf32>
    %cst_93 = arith.constant 1.000000e+00 : f32
    %279 = vector.broadcast %cst_93 : f32 to vector<2x128xf32>
    %280 = arith.addf %279, %278 : vector<2x128xf32>
    %281 = arith.divf %279, %280 : vector<2x128xf32>
    %282 = math.tanh %276 : vector<2x128xf32>
    %283 = vector.extract_strided_slice %281 {offsets = [0, 0], sizes = [2, 32], strides = [1, 1]} : vector<2x128xf32> to vector<2x32xf32>
    %284 = vector.extract_strided_slice %281 {offsets = [0, 32], sizes = [2, 32], strides = [1, 1]} : vector<2x128xf32> to vector<2x32xf32>
    %285 = vector.extract_strided_slice %282 {offsets = [0, 64], sizes = [2, 32], strides = [1, 1]} : vector<2x128xf32> to vector<2x32xf32>
    %286 = vector.extract_strided_slice %281 {offsets = [0, 96], sizes = [2, 32], strides = [1, 1]} : vector<2x128xf32> to vector<2x32xf32>
    %287 = arith.mulf %284, %253 : vector<2x32xf32>
    %288 = arith.mulf %283, %285 : vector<2x32xf32>
    %289 = arith.addf %287, %288 : vector<2x32xf32>
    %290 = math.tanh %289 : vector<2x32xf32>
    %291 = arith.mulf %286, %290 : vector<2x32xf32>
    %cst_94 = arith.constant dense<0.000000e+00> : vector<2x128xf32>
    %292 = tpu.matmul %272, %3, %cst_94 {dimension_numbers = #tpu.dot_dimension_numbers<[1], [0], [0], [1], [0, 0, 1, 1], [], []>} : vector<2x32xf32>, vector<32x128xf32>, vector<2x128xf32> -> vector<2x128xf32>
    %293 = arith.addf %274, %292 : vector<2x128xf32>
    %294 = arith.negf %293 : vector<2x128xf32>
    %295 = math.exp %294 : vector<2x128xf32>
    %cst_95 = arith.constant 1.000000e+00 : f32
    %296 = vector.broadcast %cst_95 : f32 to vector<2x128xf32>
    %297 = arith.addf %296, %295 : vector<2x128xf32>
    %298 = arith.divf %296, %297 : vector<2x128xf32>
    %299 = math.tanh %293 : vector<2x128xf32>
    %300 = vector.extract_strided_slice %298 {offsets = [0, 0], sizes = [2, 32], strides = [1, 1]} : vector<2x128xf32> to vector<2x32xf32>
    %301 = vector.extract_strided_slice %298 {offsets = [0, 32], sizes = [2, 32], strides = [1, 1]} : vector<2x128xf32> to vector<2x32xf32>
    %302 = vector.extract_strided_slice %299 {offsets = [0, 64], sizes = [2, 32], strides = [1, 1]} : vector<2x128xf32> to vector<2x32xf32>
    %303 = vector.extract_strided_slice %298 {offsets = [0, 96], sizes = [2, 32], strides = [1, 1]} : vector<2x128xf32> to vector<2x32xf32>
    %304 = arith.mulf %301, %270 : vector<2x32xf32>
    %305 = arith.mulf %300, %302 : vector<2x32xf32>
    %306 = arith.addf %304, %305 : vector<2x32xf32>
    %307 = math.tanh %306 : vector<2x32xf32>
    %308 = arith.mulf %303, %307 : vector<2x32xf32>
    %cst_96 = arith.constant dense<0.000000e+00> : vector<2x128xf32>
    %309 = tpu.matmul %291, %1, %cst_96 {dimension_numbers = #tpu.dot_dimension_numbers<[1], [0], [0], [1], [0, 0, 1, 1], [], []>} : vector<2x32xf32>, vector<32x128xf32>, vector<2x128xf32> -> vector<2x128xf32>
    %310 = arith.addf %309, %6 : vector<2x128xf32>
    %cst_97 = arith.constant dense<0.000000e+00> : vector<2x128xf32>
    %311 = tpu.matmul %291, %2, %cst_97 {dimension_numbers = #tpu.dot_dimension_numbers<[1], [0], [0], [1], [0, 0, 1, 1], [], []>} : vector<2x32xf32>, vector<32x128xf32>, vector<2x128xf32> -> vector<2x128xf32>
    %312 = arith.addf %75, %311 : vector<2x128xf32>
    %313 = arith.negf %312 : vector<2x128xf32>
    %314 = math.exp %313 : vector<2x128xf32>
    %cst_98 = arith.constant 1.000000e+00 : f32
    %315 = vector.broadcast %cst_98 : f32 to vector<2x128xf32>
    %316 = arith.addf %315, %314 : vector<2x128xf32>
    %317 = arith.divf %315, %316 : vector<2x128xf32>
    %318 = math.tanh %312 : vector<2x128xf32>
    %319 = vector.extract_strided_slice %317 {offsets = [0, 0], sizes = [2, 32], strides = [1, 1]} : vector<2x128xf32> to vector<2x32xf32>
    %320 = vector.extract_strided_slice %317 {offsets = [0, 32], sizes = [2, 32], strides = [1, 1]} : vector<2x128xf32> to vector<2x32xf32>
    %321 = vector.extract_strided_slice %318 {offsets = [0, 64], sizes = [2, 32], strides = [1, 1]} : vector<2x128xf32> to vector<2x32xf32>
    %322 = vector.extract_strided_slice %317 {offsets = [0, 96], sizes = [2, 32], strides = [1, 1]} : vector<2x128xf32> to vector<2x32xf32>
    %323 = arith.mulf %320, %289 : vector<2x32xf32>
    %324 = arith.mulf %319, %321 : vector<2x32xf32>
    %325 = arith.addf %323, %324 : vector<2x32xf32>
    %326 = math.tanh %325 : vector<2x32xf32>
    %327 = arith.mulf %322, %326 : vector<2x32xf32>
    %cst_99 = arith.constant dense<0.000000e+00> : vector<2x128xf32>
    %328 = tpu.matmul %308, %3, %cst_99 {dimension_numbers = #tpu.dot_dimension_numbers<[1], [0], [0], [1], [0, 0, 1, 1], [], []>} : vector<2x32xf32>, vector<32x128xf32>, vector<2x128xf32> -> vector<2x128xf32>
    %329 = arith.addf %310, %328 : vector<2x128xf32>
    %330 = arith.negf %329 : vector<2x128xf32>
    %331 = math.exp %330 : vector<2x128xf32>
    %cst_100 = arith.constant 1.000000e+00 : f32
    %332 = vector.broadcast %cst_100 : f32 to vector<2x128xf32>
    %333 = arith.addf %332, %331 : vector<2x128xf32>
    %334 = arith.divf %332, %333 : vector<2x128xf32>
    %335 = math.tanh %329 : vector<2x128xf32>
    %336 = vector.extract_strided_slice %334 {offsets = [0, 0], sizes = [2, 32], strides = [1, 1]} : vector<2x128xf32> to vector<2x32xf32>
    %337 = vector.extract_strided_slice %334 {offsets = [0, 32], sizes = [2, 32], strides = [1, 1]} : vector<2x128xf32> to vector<2x32xf32>
    %338 = vector.extract_strided_slice %335 {offsets = [0, 64], sizes = [2, 32], strides = [1, 1]} : vector<2x128xf32> to vector<2x32xf32>
    %339 = vector.extract_strided_slice %334 {offsets = [0, 96], sizes = [2, 32], strides = [1, 1]} : vector<2x128xf32> to vector<2x32xf32>
    %340 = arith.mulf %337, %306 : vector<2x32xf32>
    %341 = arith.mulf %336, %338 : vector<2x32xf32>
    %342 = arith.addf %340, %341 : vector<2x32xf32>
    %343 = math.tanh %342 : vector<2x32xf32>
    %344 = arith.mulf %339, %343 : vector<2x32xf32>
    %cst_101 = arith.constant dense<0.000000e+00> : vector<2x128xf32>
    %345 = tpu.matmul %327, %1, %cst_101 {dimension_numbers = #tpu.dot_dimension_numbers<[1], [0], [0], [1], [0, 0, 1, 1], [], []>} : vector<2x32xf32>, vector<32x128xf32>, vector<2x128xf32> -> vector<2x128xf32>
    %346 = arith.addf %345, %6 : vector<2x128xf32>
    %cst_102 = arith.constant dense<0.000000e+00> : vector<2x128xf32>
    %347 = tpu.matmul %344, %3, %cst_102 {dimension_numbers = #tpu.dot_dimension_numbers<[1], [0], [0], [1], [0, 0, 1, 1], [], []>} : vector<2x32xf32>, vector<32x128xf32>, vector<2x128xf32> -> vector<2x128xf32>
    %348 = arith.addf %346, %347 : vector<2x128xf32>
    %349 = arith.negf %348 : vector<2x128xf32>
    %350 = math.exp %349 : vector<2x128xf32>
    %cst_103 = arith.constant 1.000000e+00 : f32
    %351 = vector.broadcast %cst_103 : f32 to vector<2x128xf32>
    %352 = arith.addf %351, %350 : vector<2x128xf32>
    %353 = arith.divf %351, %352 : vector<2x128xf32>
    %354 = math.tanh %348 : vector<2x128xf32>
    %355 = vector.extract_strided_slice %353 {offsets = [0, 0], sizes = [2, 32], strides = [1, 1]} : vector<2x128xf32> to vector<2x32xf32>
    %356 = vector.extract_strided_slice %353 {offsets = [0, 32], sizes = [2, 32], strides = [1, 1]} : vector<2x128xf32> to vector<2x32xf32>
    %357 = vector.extract_strided_slice %354 {offsets = [0, 64], sizes = [2, 32], strides = [1, 1]} : vector<2x128xf32> to vector<2x32xf32>
    %358 = vector.extract_strided_slice %353 {offsets = [0, 96], sizes = [2, 32], strides = [1, 1]} : vector<2x128xf32> to vector<2x32xf32>
    %359 = arith.mulf %356, %342 : vector<2x32xf32>
    %360 = arith.mulf %355, %357 : vector<2x32xf32>
    %361 = arith.addf %359, %360 : vector<2x32xf32>
    %362 = math.tanh %361 : vector<2x32xf32>
    %363 = arith.mulf %358, %362 : vector<2x32xf32>
    %c0_104 = arith.constant 0 : index
    %c0_105 = arith.constant 0 : index
    %c0_106 = arith.constant 0 : index
    %364 = vector.load %arg17[%c0_104, %c0_105, %c0_106] : memref<2x2x32xf32, #tpu.memory_space<vmem>>, vector<1x2x32xf32>
    %365 = vector.shape_cast %364 : vector<1x2x32xf32> to vector<2x32xf32>
    %366 = vector.shape_cast %327 : vector<2x32xf32> to vector<1x2x32xf32>
    tpu.vector_store %arg17[%c0_104, %c0_105, %c0_106], %366 {strides = array<i32>} : memref<2x2x32xf32, #tpu.memory_space<vmem>>, vector<1x2x32xf32>,
    %c0_107 = arith.constant 0 : index
    %c0_108 = arith.constant 0 : index
    %c0_109 = arith.constant 0 : index
    %367 = vector.load %arg18[%c0_107, %c0_108, %c0_109] : memref<2x2x32xf32, #tpu.memory_space<vmem>>, vector<1x2x32xf32>
    %368 = vector.shape_cast %367 : vector<1x2x32xf32> to vector<2x32xf32>
    %369 = vector.shape_cast %325 : vector<2x32xf32> to vector<1x2x32xf32>
    tpu.vector_store %arg18[%c0_107, %c0_108, %c0_109], %369 {strides = array<i32>} : memref<2x2x32xf32, #tpu.memory_space<vmem>>, vector<1x2x32xf32>,
    %c1_110 = arith.constant 1 : index
    %c0_111 = arith.constant 0 : index
    %c0_112 = arith.constant 0 : index
    %370 = vector.load %arg17[%c1_110, %c0_111, %c0_112] : memref<2x2x32xf32, #tpu.memory_space<vmem>>, vector<1x2x32xf32>
    %371 = vector.shape_cast %370 : vector<1x2x32xf32> to vector<2x32xf32>
    %372 = vector.shape_cast %363 : vector<2x32xf32> to vector<1x2x32xf32>
    tpu.vector_store %arg17[%c1_110, %c0_111, %c0_112], %372 {strides = array<i32>} : memref<2x2x32xf32, #tpu.memory_space<vmem>>, vector<1x2x32xf32>,
    %c1_113 = arith.constant 1 : index
    %c0_114 = arith.constant 0 : index
    %c0_115 = arith.constant 0 : index
    %373 = vector.load %arg18[%c1_113, %c0_114, %c0_115] : memref<2x2x32xf32, #tpu.memory_space<vmem>>, vector<1x2x32xf32>
    %374 = vector.shape_cast %373 : vector<1x2x32xf32> to vector<2x32xf32>
    %375 = vector.shape_cast %361 : vector<2x32xf32> to vector<1x2x32xf32>
    tpu.vector_store %arg18[%c1_113, %c0_114, %c0_115], %375 {strides = array<i32>} : memref<2x2x32xf32, #tpu.memory_space<vmem>>, vector<1x2x32xf32>,
    %c0_116 = arith.constant 0 : index
    %c0_117 = arith.constant 0 : index
    %376 = vector.load %arg14[%c0_116, %c0_117] : memref<16x1xf32, #tpu.memory_space<vmem>>, vector<16x1xf32>
    %c0_118 = arith.constant 0 : index
    %c0_119 = arith.constant 0 : index
    %377 = vector.load %arg15[%c0_118, %c0_119] : memref<1x1xf32, #tpu.memory_space<vmem>>, vector<1x1xf32>
    %c0_120 = arith.constant 0 : index
    %c0_121 = arith.constant 0 : index
    %378 = vector.load %arg12[%c0_120, %c0_121] : memref<64x16xf32, #tpu.memory_space<vmem>>, vector<64x16xf32>
    %cst_122 = arith.constant dense<0.000000e+00> : vector<64x1xf32>
    %379 = tpu.matmul %378, %376, %cst_122 {dimension_numbers = #tpu.dot_dimension_numbers<[1], [0], [0], [1], [0, 0, 1, 1], [], []>} : vector<64x16xf32>, vector<16x1xf32>, vector<64x1xf32> -> vector<64x1xf32>
    %c0_123 = arith.constant 0 : index
    %c0_124 = arith.constant 0 : index
    %380 = vector.load %arg10[%c0_123, %c0_124] : memref<32x64xf32, #tpu.memory_space<vmem>>, vector<32x64xf32>
    %cst_125 = arith.constant dense<0.000000e+00> : vector<32x1xf32>
    %381 = tpu.matmul %380, %379, %cst_125 {dimension_numbers = #tpu.dot_dimension_numbers<[1], [0], [0], [1], [0, 0, 1, 1], [], []>} : vector<32x64xf32>, vector<64x1xf32>, vector<32x1xf32> -> vector<32x1xf32>
    %c0_126 = arith.constant 0 : index
    %c0_127 = arith.constant 0 : index
    %382 = vector.load %arg11[%c0_126, %c0_127] : memref<1x64xf32, #tpu.memory_space<vmem>>, vector<1x64xf32>
    %c0_128 = arith.constant 0 : index
    %c0_129 = arith.constant 0 : index
    %383 = vector.load %arg12[%c0_128, %c0_129] : memref<64x16xf32, #tpu.memory_space<vmem>>, vector<64x16xf32>
    %cst_130 = arith.constant dense<0.000000e+00> : vector<1x16xf32>
    %384 = tpu.matmul %382, %383, %cst_130 {dimension_numbers = #tpu.dot_dimension_numbers<[1], [0], [0], [1], [0, 0, 1, 1], [], []>} : vector<1x64xf32>, vector<64x16xf32>, vector<1x16xf32> -> vector<1x16xf32>
    %cst_131 = arith.constant dense<0.000000e+00> : vector<1x1xf32>
    %385 = tpu.matmul %384, %376, %cst_131 {dimension_numbers = #tpu.dot_dimension_numbers<[1], [0], [0], [1], [0, 0, 1, 1], [], []>} : vector<1x16xf32>, vector<16x1xf32>, vector<1x1xf32> -> vector<1x1xf32>
    %c0_132 = arith.constant 0 : index
    %c0_133 = arith.constant 0 : index
    %386 = vector.load %arg13[%c0_132, %c0_133] : memref<1x16xf32, #tpu.memory_space<vmem>>, vector<1x16xf32>
    %cst_134 = arith.constant dense<0.000000e+00> : vector<1x1xf32>
    %387 = tpu.matmul %386, %376, %cst_134 {dimension_numbers = #tpu.dot_dimension_numbers<[1], [0], [0], [1], [0, 0, 1, 1], [], []>} : vector<1x16xf32>, vector<16x1xf32>, vector<1x1xf32> -> vector<1x1xf32>
    %388 = arith.addf %385, %387 : vector<1x1xf32>
    %389 = arith.addf %388, %377 : vector<1x1xf32>
    %cst_135 = arith.constant dense<0.000000e+00> : vector<2x1xf32>
    %390 = tpu.matmul %363, %381, %cst_135 {dimension_numbers = #tpu.dot_dimension_numbers<[1], [0], [0], [1], [0, 0, 1, 1], [], []>} : vector<2x32xf32>, vector<32x1xf32>, vector<2x1xf32> -> vector<2x1xf32>
    %391 = vector.broadcast %389 : vector<1x1xf32> to vector<2x1xf32>
    %392 = arith.addf %390, %391 : vector<2x1xf32>
    %393 = arith.negf %392 : vector<2x1xf32>
    %394 = math.exp %393 : vector<2x1xf32>
    %cst_136 = arith.constant 1.000000e+00 : f32
    %395 = vector.broadcast %cst_136 : f32 to vector<2x1xf32>
    %396 = arith.addf %395, %394 : vector<2x1xf32>
    %397 = arith.divf %395, %396 : vector<2x1xf32>
    %c0_137 = arith.constant 0 : index
    %c0_138 = arith.constant 0 : index
    %398 = vector.load %arg16[%c0_137, %c0_138] : memref<2x1xf32, #tpu.memory_space<vmem>>, vector<2x1xf32>
    tpu.vector_store %arg16[%c0_137, %c0_138], %397 {strides = array<i32>} : memref<2x1xf32, #tpu.memory_space<vmem>>, vector<2x1xf32>,
    return
  }
}

</mosaic_0001>

<llo_original>
// kernel: tpu_custom_call.1
$region0: #{tpu_custom_call.1}
  #allocation0 [shape = 'u32[]', space=smem, size = 0x4, offset = 0x4, fixed_abs, tag = 'smem constant byte address 0x4 - core index']
  #allocation1 [shape = 'u32[144,128]{1,0:T(1,128)}', space=vmem, size = 0x12000, scoped, tag = 'internal scratch']
  #allocation2 [shape = 'f32[1,1]{1,0:T(1,128)S(1)}', space=vmem, size = 0x200, scoped, tag = 'scoped memory for tpu_custom_call.1']
  %s0 = inlined_call_operand.vmem [shape: s32[2,8], index: 0, kind: input, shape index: {}]
  %s1 = inlined_call_operand.vmem [shape: f32[50,32], index: 1, kind: input, shape index: {}]
  %s2 = inlined_call_operand.vmem [shape: f32[2,2,32], index: 2, kind: input, shape index: {}]
  %s3 = inlined_call_operand.vmem [shape: f32[2,2,32], index: 3, kind: input, shape index: {}]
  %s4 = inlined_call_operand.vmem [shape: f32[32,128], index: 4, kind: input, shape index: {}]
  %s5 = inlined_call_operand.vmem [shape: f32[32,128], index: 5, kind: input, shape index: {}]
  %s6 = inlined_call_operand.vmem [shape: f32[1,128], index: 6, kind: input, shape index: {}]
  %s7 = inlined_call_operand.vmem [shape: f32[32,128], index: 7, kind: input, shape index: {}]
  %s8 = inlined_call_operand.vmem [shape: f32[32,128], index: 8, kind: input, shape index: {}]
  %s9 = inlined_call_operand.vmem [shape: f32[1,128], index: 9, kind: input, shape index: {}]
  %s10 = inlined_call_operand.vmem [shape: f32[32,64], index: 10, kind: input, shape index: {}]
  %s11 = inlined_call_operand.vmem [shape: f32[1,64], index: 11, kind: input, shape index: {}]
  %s12 = inlined_call_operand.vmem [shape: f32[64,16], index: 12, kind: input, shape index: {}]
  %s13 = inlined_call_operand.vmem [shape: f32[1,16], index: 13, kind: input, shape index: {}]
  %s14 = inlined_call_operand.vmem [shape: f32[16,1], index: 14, kind: input, shape index: {}]
  %s15 = inlined_call_operand.<no memory space> [shape: f32[1,1], index: 15, kind: input, shape index: {}]
  %s16 = inlined_call_operand.vmem [shape: f32[2,1], index: 16, kind: output, shape index: {0}]
  %s17 = inlined_call_operand.hbm [shape: f32[2,2,32], index: 17, kind: output, shape index: {1}]
  %s18 = inlined_call_operand.hbm [shape: f32[2,2,32], index: 18, kind: output, shape index: {2}]
  %19 = xla_tuple %s16, %s17, %s18
  %s20 = sld [smem:[#allocation0]]
  $region94: #{tpu_custom_call.1} parent=0
    _
  %s22 = ssub.s32 1, %s20
  %s23 = scalar_select 0, %s22, %s20
  %v24 = vstv %s15
  %25 = vst [vmem:[#allocation2] sm:$0x1] %v24
  $region1: #{tpu_custom_call.1} parent=0
    #allocation3 [shape = 'u8[1024]{0}', space=smem, size = 0x400, scoped, tag = 'input window, operand 0, single buffered']
    #allocation4 [shape = 's32[1]{0}', space=sflag, size = 0x4, scoped, tag = 'scoped memory for tpu_custom_call.1']
    #allocation5 [shape = 's32[1]{0}', space=sflag, size = 0x4, scoped, tag = 'scoped memory for tpu_custom_call.1']
    #allocation6 [shape = 'u8[2048]{0}', space=vmem, size = 0x800, scoped, tag = 'output window, operand 1, single buffered']
    #allocation7 [shape = 'u8[2048]{0}', space=vmem, size = 0x800, scoped, tag = 'output window, operand 2, single buffered']
    #allocation8 [shape = 's32[1]{0}', space=sflag, size = 0x4, scoped, tag = 'scoped memory for tpu_custom_call.1']
    %26 = vsyncpa [#allocation5], 0
    %27 = vsyncpa [#allocation4], 0
    %28 = vsyncpa [#allocation8], 0
    // Predicated region
    $region2: #{tpu_custom_call.1} parent=1 // pred_check
      _
    $region3: #{tpu_custom_call.1} parent=1 // pred_check_branch
      %30 = sbr.rel (0) target = $region5
    $region4: #{tpu_custom_call.1} parent=1 // pred_region
      %s32 = ssub.s32 32, 32
      %33 = vsyncadd [#allocation5], %s32
      %s35 = sshll.u32 %s0, 4
      %s36 = int_to_ptr.vmem [resolvable:$true] %s35
      %38 = dma.vmem_to_smem %s36, 32, [#allocation3], [#allocation5]
    $region5: #{tpu_custom_call.1} parent=1 // pred_fallthru
      _
    // Predicated region
    $region6: #{tpu_custom_call.1} parent=1 // pred_check
      _
    $region7: #{tpu_custom_call.1} parent=1 // pred_check_branch
      %40 = sbr.rel (0) target = $region9
    $region8: #{tpu_custom_call.1} parent=1 // pred_region
      _
    $region9: #{tpu_custom_call.1} parent=1 // pred_fallthru
      _
    // Predicated region
    $region10: #{tpu_custom_call.1} parent=1 // pred_check
      _
    $region11: #{tpu_custom_call.1} parent=1 // pred_check_branch
      %42 = sbr.rel (0) target = $region13
    $region12: #{tpu_custom_call.1} parent=1 // pred_region
      _
    $region13: #{tpu_custom_call.1} parent=1 // pred_fallthru
      _
    // Predicated region
    $region14: #{tpu_custom_call.1} parent=1 // pred_check
      _
    $region15: #{tpu_custom_call.1} parent=1 // pred_check_branch
      %44 = sbr.rel (0) target = $region17
    $region16: #{tpu_custom_call.1} parent=1 // pred_region
      _
    $region17: #{tpu_custom_call.1} parent=1 // pred_fallthru
      _
    // Predicated region
    $region18: #{tpu_custom_call.1} parent=1 // pred_check
      _
    $region19: #{tpu_custom_call.1} parent=1 // pred_check_branch
      %46 = sbr.rel (0) target = $region21
    $region20: #{tpu_custom_call.1} parent=1 // pred_region
      _
    $region21: #{tpu_custom_call.1} parent=1 // pred_fallthru
      _
    // Predicated region
    $region22: #{tpu_custom_call.1} parent=1 // pred_check
      _
    $region23: #{tpu_custom_call.1} parent=1 // pred_check_branch
      %48 = sbr.rel (0) target = $region25
    $region24: #{tpu_custom_call.1} parent=1 // pred_region
      _
    $region25: #{tpu_custom_call.1} parent=1 // pred_fallthru
      _
    // Predicated region
    $region26: #{tpu_custom_call.1} parent=1 // pred_check
      _
    $region27: #{tpu_custom_call.1} parent=1 // pred_check_branch
      %50 = sbr.rel (0) target = $region29
    $region28: #{tpu_custom_call.1} parent=1 // pred_region
      _
    $region29: #{tpu_custom_call.1} parent=1 // pred_fallthru
      _
    // Predicated region
    $region30: #{tpu_custom_call.1} parent=1 // pred_check
      _
    $region31: #{tpu_custom_call.1} parent=1 // pred_check_branch
      %52 = sbr.rel (0) target = $region33
    $region32: #{tpu_custom_call.1} parent=1 // pred_region
      _
    $region33: #{tpu_custom_call.1} parent=1 // pred_fallthru
      _
    // Predicated region
    $region34: #{tpu_custom_call.1} parent=1 // pred_check
      _
    $region35: #{tpu_custom_call.1} parent=1 // pred_check_branch
      %54 = sbr.rel (0) target = $region37
    $region36: #{tpu_custom_call.1} parent=1 // pred_region
      _
    $region37: #{tpu_custom_call.1} parent=1 // pred_fallthru
      _
    // Predicated region
    $region38: #{tpu_custom_call.1} parent=1 // pred_check
      _
    $region39: #{tpu_custom_call.1} parent=1 // pred_check_branch
      %56 = sbr.rel (0) target = $region41
    $region40: #{tpu_custom_call.1} parent=1 // pred_region
      _
    $region41: #{tpu_custom_call.1} parent=1 // pred_fallthru
      _
    // Predicated region
    $region42: #{tpu_custom_call.1} parent=1 // pred_check
      _
    $region43: #{tpu_custom_call.1} parent=1 // pred_check_branch
      %58 = sbr.rel (0) target = $region45
    $region44: #{tpu_custom_call.1} parent=1 // pred_region
      _
    $region45: #{tpu_custom_call.1} parent=1 // pred_fallthru
      _
    // Predicated region
    $region46: #{tpu_custom_call.1} parent=1 // pred_check
      _
    $region47: #{tpu_custom_call.1} parent=1 // pred_check_branch
      %60 = sbr.rel (0) target = $region49
    $region48: #{tpu_custom_call.1} parent=1 // pred_region
      _
    $region49: #{tpu_custom_call.1} parent=1 // pred_fallthru
      _
    // Predicated region
    $region50: #{tpu_custom_call.1} parent=1 // pred_check
      _
    $region51: #{tpu_custom_call.1} parent=1 // pred_check_branch
      %62 = sbr.rel (0) target = $region53
    $region52: #{tpu_custom_call.1} parent=1 // pred_region
      _
    $region53: #{tpu_custom_call.1} parent=1 // pred_fallthru
      _
    // Predicated region
    $region54: #{tpu_custom_call.1} parent=1 // pred_check
      _
    $region55: #{tpu_custom_call.1} parent=1 // pred_check_branch
      %64 = sbr.rel (0) target = $region57
    $region56: #{tpu_custom_call.1} parent=1 // pred_region
      _
    $region57: #{tpu_custom_call.1} parent=1 // pred_fallthru
      _
    // Predicated region
    $region58: #{tpu_custom_call.1} parent=1 // pred_check
      _
    $region59: #{tpu_custom_call.1} parent=1 // pred_check_branch
      %66 = sbr.rel (0) target = $region61
    $region60: #{tpu_custom_call.1} parent=1 // pred_region
      _
    $region61: #{tpu_custom_call.1} parent=1 // pred_fallthru
      _
    // Predicated region
    $region62: #{tpu_custom_call.1} parent=1 // pred_check
      _
    $region63: #{tpu_custom_call.1} parent=1 // pred_check_branch
      %68 = sbr.rel (0) target = $region65
    $region64: #{tpu_custom_call.1} parent=1 // pred_region
      _
    $region65: #{tpu_custom_call.1} parent=1 // pred_fallthru
      _
    // Predicated region
    $region66: #{tpu_custom_call.1} parent=1 // pred_check
      _
    $region67: #{tpu_custom_call.1} parent=1 // pred_check_branch
      %70 = sbr.rel (0) target = $region69
    $region68: #{tpu_custom_call.1} parent=1 // pred_region
      %71 = dma.done [#allocation5], 32
    $region69: #{tpu_custom_call.1} parent=1 // pred_fallthru
      _
    %72 = sfence
    %v73 = vld [vmem:[%s4] sm:$0xff]
    %v74 = vld [vmem:[%s4 + $0x8] sm:$0xff]
    %v75 = vld [vmem:[%s4 + $0x10] sm:$0xff]
    %v76 = vld [vmem:[%s4 + $0x18] sm:$0xff]
    %v77 = vld [vmem:[%s7] sm:$0xff]
    %v78 = vld [vmem:[%s7 + $0x8] sm:$0xff]
    %v79 = vld [vmem:[%s7 + $0x10] sm:$0xff]
    %v80 = vld [vmem:[%s7 + $0x18] sm:$0xff]
    %v81 = vld [vmem:[%s5] sm:$0xff]
    %v82 = vld [vmem:[%s5 + $0x8] sm:$0xff]
    %v83 = vld [vmem:[%s5 + $0x10] sm:$0xff]
    %v84 = vld [vmem:[%s5 + $0x18] sm:$0xff]
    %v85 = vld [vmem:[%s8] sm:$0xff]
    %v86 = vld [vmem:[%s8 + $0x8] sm:$0xff]
    %v87 = vld [vmem:[%s8 + $0x10] sm:$0xff]
    %v88 = vld [vmem:[%s8 + $0x18] sm:$0xff]
    %v89 = vld [vmem:[%s9] sm:$0x1]
    %v91 = vlaneseq
    %v92 = vshrl.u32 %v91, 7
    %v93 = vsub.s32 0, %v92
    %v94 = vrot.slane %v89, %v93
    %v96 = vld [vmem:[%s2] sm:$0x3]
    %s97 = scalar_lea.vmem %s2, 2
    %v98 = vld [vmem:[%s97] sm:$0x3]
    %v99 = vld [vmem:[%s3] sm:$0x3]
    %s100 = scalar_lea.vmem %s3, 2
    %v101 = vld [vmem:[%s100] sm:$0x3]
    %s102 = sld [smem:[#allocation3]]
    %s103 = scalar_lea.vmem %s1, %s102
    %v104 = vld [vmem:[%s103] sm:$0x1]
    %s105 = sld [smem:[#allocation3 + $0x80]]
    %s106 = scalar_lea.vmem %s1, %s105
    %v107 = vld [vmem:[%s106] sm:$0x1]
    %s108 = sld [smem:[#allocation3 + $0x1]]
    %s109 = scalar_lea.vmem %s1, %s108
    %v110 = vld [vmem:[%s109] sm:$0x1]
    %s111 = sld [smem:[#allocation3 + $0x81]]
    %s112 = scalar_lea.vmem %s1, %s111
    %v113 = vld [vmem:[%s112] sm:$0x1]
    %s114 = sld [smem:[#allocation3 + $0x2]]
    %s115 = scalar_lea.vmem %s1, %s114
    %v116 = vld [vmem:[%s115] sm:$0x1]
    %s117 = sld [smem:[#allocation3 + $0x82]]
    %s118 = scalar_lea.vmem %s1, %s117
    %v119 = vld [vmem:[%s118] sm:$0x1]
    %s120 = sld [smem:[#allocation3 + $0x3]]
    %s121 = scalar_lea.vmem %s1, %s120
    %v122 = vld [vmem:[%s121] sm:$0x1]
    %s123 = sld [smem:[#allocation3 + $0x83]]
    %s124 = scalar_lea.vmem %s1, %s123
    %v125 = vld [vmem:[%s124] sm:$0x1]
    %s126 = sld [smem:[#allocation3 + $0x4]]
    %s127 = scalar_lea.vmem %s1, %s126
    %v128 = vld [vmem:[%s127] sm:$0x1]
    %s129 = sld [smem:[#allocation3 + $0x84]]
    %s130 = scalar_lea.vmem %s1, %s129
    %v131 = vld [vmem:[%s130] sm:$0x1]
    %s132 = sld [smem:[#allocation3 + $0x5]]
    %s133 = scalar_lea.vmem %s1, %s132
    %v134 = vld [vmem:[%s133] sm:$0x1]
    %s135 = sld [smem:[#allocation3 + $0x85]]
    %s136 = scalar_lea.vmem %s1, %s135
    %v137 = vld [vmem:[%s136] sm:$0x1]
    %s138 = sld [smem:[#allocation3 + $0x6]]
    %s139 = scalar_lea.vmem %s1, %s138
    %v140 = vld [vmem:[%s139] sm:$0x1]
    %s141 = sld [smem:[#allocation3 + $0x86]]
    %s142 = scalar_lea.vmem %s1, %s141
    %v143 = vld [vmem:[%s142] sm:$0x1]
    %s144 = sld [smem:[#allocation3 + $0x7]]
    %s145 = scalar_lea.vmem %s1, %s144
    %v146 = vld [vmem:[%s145] sm:$0x1]
    %s147 = sld [smem:[#allocation3 + $0x87]]
    %s148 = scalar_lea.vmem %s1, %s147
    %v149 = vld [vmem:[%s148] sm:$0x1]
    %v151 = vrot.slane %v107, 7
    %v154 = vrot.slane %v110, 6
    %v157 = vrot.slane %v113, 5
    %v160 = vrot.slane %v116, 4
    %v163 = vrot.slane %v119, 3
    %v166 = vrot.slane %v122, 2
    %v169 = vrot.slane %v125, 1
    %v172 = vrot.slane %v131, 7
    %v175 = vrot.slane %v134, 6
    %v178 = vrot.slane %v137, 5
    %v181 = vrot.slane %v140, 4
    %v184 = vrot.slane %v143, 3
    %v187 = vrot.slane %v146, 2
    %v190 = vrot.slane %v149, 1
    %vm192 = vcmask 1040384
    %v193 = vsel %vm192, %v104, %v151
    %vm194 = vcmask 1041408
    %v195 = vsel %vm194, %v193, %v154
    %vm196 = vcmask 1042432
    %v197 = vsel %vm196, %v195, %v157
    %vm198 = vcmask 1043456
    %v199 = vsel %vm198, %v197, %v160
    %vm200 = vcmask 1044480
    %v201 = vsel %vm200, %v199, %v163
    %vm202 = vcmask 1045504
    %v203 = vsel %vm202, %v201, %v166
    %vm204 = vcmask 1046528
    %v205 = vsel %vm204, %v203, %v169
    %v206 = vsel %vm192, %v128, %v172
    %v207 = vsel %vm194, %v206, %v175
    %v208 = vsel %vm196, %v207, %v178
    %v209 = vsel %vm198, %v208, %v181
    %v210 = vsel %vm200, %v209, %v184
    %v211 = vsel %vm202, %v210, %v187
    %v212 = vsel %vm204, %v211, %v190
    %v213 = vld [vmem:[%s6] sm:$0x1]
    %v215 = vlaneseq
    %v216 = vshrl.u32 %v215, 7
    %v217 = vsub.s32 0, %v216
    %v218 = vrot.slane %v213, %v217
    %vm220 = vcmask 261120
    %v222 = vsel %vm220, %v205, 0
    %v225 = vsel %vm220, %v212, 0
    %227 = vmatprep.subr.mxu0 0.0
    %228 = vmatpush1.msra.mxu0 %v73
    %229 = vmatprep.subr.mxu0 0.0
    %230 = vmatpush1.msra.mxu0 %v74
    %231 = vmatprep.subr.mxu0 0.0
    %232 = vmatpush1.msra.mxu0 %v75
    %233 = vmatprep.subr.mxu0 0.0
    %234 = vmatpush1.msra.mxu0 %v76
    %235 = vmatprep.subr.mxu0 0.0
    %236 = vmatpush1.msra.mxu0 0.0
    %237 = vmatprep.subr.mxu0 0.0
    %238 = vmatpush1.msra.mxu0 0.0
    %239 = vmatprep.subr.mxu0 0.0
    %240 = vmatpush1.msra.mxu0 0.0
    %241 = vmatprep.subr.mxu0 0.0
    %242 = vmatpush1.msra.mxu0 0.0
    %243 = vmatprep.subr.mxu0 0.0
    %244 = vmatpush1.msra.mxu0 0.0
    %245 = vmatprep.subr.mxu0 0.0
    %246 = vmatpush1.msra.mxu0 0.0
    %247 = vmatprep.subr.mxu0 0.0
    %248 = vmatpush1.msra.mxu0 0.0
    %249 = vmatprep.subr.mxu0 0.0
    %250 = vmatpush1.msra.mxu0 0.0
    %251 = vmatprep.subr.mxu0 0.0
    %252 = vmatpush1.msra.mxu0 0.0
    %253 = vmatprep.subr.mxu0 0.0
    %254 = vmatpush1.msra.mxu0 0.0
    %255 = vmatprep.subr.mxu0 0.0
    %256 = vmatpush1.msra.mxu0 0.0
    %257 = vmatprep.subr.mxu0 0.0
    %258 = vmatpush1.msra.mxu0 0.0
    %259 = vmatprep.subr.mxu0 0.0
    %260 = vmatpush1.msra.mxu0 0.0
    %261 = vmatprep.subr.mxu0 0.0
    %262 = vmatpush1.msra.mxu0 0.0
    %263 = vmatprep.subr.mxu0 0.0
    %264 = vmatpush1.msra.mxu0 0.0
    %265 = vmatprep.subr.mxu0 0.0
    %266 = vmatpush1.msra.mxu0 0.0
    %267 = vmatprep.subr.mxu0 0.0
    %268 = vmatpush1.msra.mxu0 0.0
    %269 = vmatprep.subr.mxu0 0.0
    %270 = vmatpush1.msra.mxu0 0.0
    %271 = vmatprep.subr.mxu0 0.0
    %272 = vmatpush1.msra.mxu0 0.0
    %273 = vmatprep.subr.mxu0 0.0
    %274 = vmatpush1.msra.mxu0 0.0
    %275 = vmatprep.subr.mxu0 0.0
    %276 = vmatpush1.msra.mxu0 0.0
    %277 = vmatprep.subr.mxu0 0.0
    %278 = vmatpush1.msra.mxu0 0.0
    %279 = vmatprep.subr.mxu0 0.0
    %280 = vmatpush1.msra.mxu0 0.0
    %281 = vmatprep.subr.mxu0 0.0
    %282 = vmatpush1.msra.mxu0 0.0
    %283 = vmatprep.subr.mxu0 0.0
    %284 = vmatpush1.msra.mxu0 0.0
    %285 = vmatprep.subr.mxu0 0.0
    %286 = vmatpush1.msra.mxu0 0.0
    %287 = vmatprep.subr.mxu0 0.0
    %288 = vmatpush1.msra.mxu0 0.0
    %289 = vmatprep.subr.mxu0 0.0
    %290 = vmatpush1.msra.mxu0 0.0
    %291 = vmatprep.mubr.f32.mxu0 0.0
    %292 = vmatmul.mubr.f32.gmra.mrb[0].mxu0 %v222
    %v293 = vpop.f32.mrb[0].mxu0
    %v294 = vadd.f32 %v218, %v293
    %v295 = vpop.f32.mrb[0].mxu0
    %296 = vmatprep.mubr.f32.mxu0 0.0
    %297 = vmatmul.mubr.f32.gmra.mrb[0].mxu0 %v225
    %v298 = vpop.f32.mrb[0].mxu0
    %v299 = vadd.f32 %v218, %v298
    %v300 = vpop.f32.mrb[0].mxu0
    %301 = vdwg.mxu0
    %v303 = vsel %vm220, %v96, 0
    %305 = vmatprep.subr.mxu0 0.0
    %306 = vmatpush1.msra.mxu0 %v81
    %307 = vmatprep.subr.mxu0 0.0
    %308 = vmatpush1.msra.mxu0 %v82
    %309 = vmatprep.subr.mxu0 0.0
    %310 = vmatpush1.msra.mxu0 %v83
    %311 = vmatprep.subr.mxu0 0.0
    %312 = vmatpush1.msra.mxu0 %v84
    %313 = vmatprep.subr.mxu0 0.0
    %314 = vmatpush1.msra.mxu0 0.0
    %315 = vmatprep.subr.mxu0 0.0
    %316 = vmatpush1.msra.mxu0 0.0
    %317 = vmatprep.subr.mxu0 0.0
    %318 = vmatpush1.msra.mxu0 0.0
    %319 = vmatprep.subr.mxu0 0.0
    %320 = vmatpush1.msra.mxu0 0.0
    %321 = vmatprep.subr.mxu0 0.0
    %322 = vmatpush1.msra.mxu0 0.0
    %323 = vmatprep.subr.mxu0 0.0
    %324 = vmatpush1.msra.mxu0 0.0
    %325 = vmatprep.subr.mxu0 0.0
    %326 = vmatpush1.msra.mxu0 0.0
    %327 = vmatprep.subr.mxu0 0.0
    %328 = vmatpush1.msra.mxu0 0.0
    %329 = vmatprep.subr.mxu0 0.0
    %330 = vmatpush1.msra.mxu0 0.0
    %331 = vmatprep.subr.mxu0 0.0
    %332 = vmatpush1.msra.mxu0 0.0
    %333 = vmatprep.subr.mxu0 0.0
    %334 = vmatpush1.msra.mxu0 0.0
    %335 = vmatprep.subr.mxu0 0.0
    %336 = vmatpush1.msra.mxu0 0.0
    %337 = vmatprep.subr.mxu0 0.0
    %338 = vmatpush1.msra.mxu0 0.0
    %339 = vmatprep.subr.mxu0 0.0
    %340 = vmatpush1.msra.mxu0 0.0
    %341 = vmatprep.subr.mxu0 0.0
    %342 = vmatpush1.msra.mxu0 0.0
    %343 = vmatprep.subr.mxu0 0.0
    %344 = vmatpush1.msra.mxu0 0.0
    %345 = vmatprep.subr.mxu0 0.0
    %346 = vmatpush1.msra.mxu0 0.0
    %347 = vmatprep.subr.mxu0 0.0
    %348 = vmatpush1.msra.mxu0 0.0
    %349 = vmatprep.subr.mxu0 0.0
    %350 = vmatpush1.msra.mxu0 0.0
    %351 = vmatprep.subr.mxu0 0.0
    %352 = vmatpush1.msra.mxu0 0.0
    %353 = vmatprep.subr.mxu0 0.0
    %354 = vmatpush1.msra.mxu0 0.0
    %355 = vmatprep.subr.mxu0 0.0
    %356 = vmatpush1.msra.mxu0 0.0
    %357 = vmatprep.subr.mxu0 0.0
    %358 = vmatpush1.msra.mxu0 0.0
    %359 = vmatprep.subr.mxu0 0.0
    %360 = vmatpush1.msra.mxu0 0.0
    %361 = vmatprep.subr.mxu0 0.0
    %362 = vmatpush1.msra.mxu0 0.0
    %363 = vmatprep.subr.mxu0 0.0
    %364 = vmatpush1.msra.mxu0 0.0
    %365 = vmatprep.subr.mxu0 0.0
    %366 = vmatpush1.msra.mxu0 0.0
    %367 = vmatprep.subr.mxu0 0.0
    %368 = vmatpush1.msra.mxu0 0.0
    %369 = vmatprep.mubr.f32.mxu0 0.0
    %370 = vmatmul.mubr.f32.gmra.mrb[0].mxu0 %v303
    %v371 = vpop.f32.mrb[0].mxu0
    %v372 = vadd.f32 0.0, %v371
    %v373 = vpop.f32.mrb[0].mxu0
    %374 = vdwg.mxu0
    %v375 = vadd.f32 %v294, %v372
    %v376 = vxor.u32 %v375, 2147483648
    %v377 = vmul.f32 %v376, 1.442695
    %v378 = vpow.pop %v377
    %v379 = vadd.f32 %v378, 1.0
    %v380 = vrcp.pop %v379
    %v381 = vmul.f32 1.0, %v380
    %v382 = vtanh.pop %v375
    %384 = vrot.lane.b32.xlu0 %v99, 32
    %v385 = vpop.permute.xlu0 %384
    %v387 = vmul.f32 %v381, %v385
    %389 = vrot.lane.b32.xlu0 %v382, 64
    %v390 = vpop.permute.xlu0 %389
    %v392 = vmul.f32 %v381, %v390
    %394 = vrot.lane.b32.xlu0 %v392, 32
    %v395 = vpop.permute.xlu0 %394
    %v397 = vadd.f32 %v387, %v395
    %v398 = vtanh.pop %v397
    %400 = vrot.lane.b32.xlu0 %v398, 64
    %v401 = vpop.permute.xlu0 %400
    %v403 = vmul.f32 %v381, %v401
    %405 = vrot.lane.b32.xlu0 %v403, 32
    %v406 = vpop.permute.xlu0 %405
    %v407 = vsel %vm220, %v406, 0
    %409 = vmatprep.subr.mxu0 0.0
    %410 = vmatpush1.msra.mxu0 %v77
    %411 = vmatprep.subr.mxu0 0.0
    %412 = vmatpush1.msra.mxu0 %v78
    %413 = vmatprep.subr.mxu0 0.0
    %414 = vmatpush1.msra.mxu0 %v79
    %415 = vmatprep.subr.mxu0 0.0
    %416 = vmatpush1.msra.mxu0 %v80
    %417 = vmatprep.subr.mxu0 0.0
    %418 = vmatpush1.msra.mxu0 0.0
    %419 = vmatprep.subr.mxu0 0.0
    %420 = vmatpush1.msra.mxu0 0.0
    %421 = vmatprep.subr.mxu0 0.0
    %422 = vmatpush1.msra.mxu0 0.0
    %423 = vmatprep.subr.mxu0 0.0
    %424 = vmatpush1.msra.mxu0 0.0
    %425 = vmatprep.subr.mxu0 0.0
    %426 = vmatpush1.msra.mxu0 0.0
    %427 = vmatprep.subr.mxu0 0.0
    %428 = vmatpush1.msra.mxu0 0.0
    %429 = vmatprep.subr.mxu0 0.0
    %430 = vmatpush1.msra.mxu0 0.0
    %431 = vmatprep.subr.mxu0 0.0
    %432 = vmatpush1.msra.mxu0 0.0
    %433 = vmatprep.subr.mxu0 0.0
    %434 = vmatpush1.msra.mxu0 0.0
    %435 = vmatprep.subr.mxu0 0.0
    %436 = vmatpush1.msra.mxu0 0.0
    %437 = vmatprep.subr.mxu0 0.0
    %438 = vmatpush1.msra.mxu0 0.0
    %439 = vmatprep.subr.mxu0 0.0
    %440 = vmatpush1.msra.mxu0 0.0
    %441 = vmatprep.subr.mxu0 0.0
    %442 = vmatpush1.msra.mxu0 0.0
    %443 = vmatprep.subr.mxu0 0.0
    %444 = vmatpush1.msra.mxu0 0.0
    %445 = vmatprep.subr.mxu0 0.0
    %446 = vmatpush1.msra.mxu0 0.0
    %447 = vmatprep.subr.mxu0 0.0
    %448 = vmatpush1.msra.mxu0 0.0
    %449 = vmatprep.subr.mxu0 0.0
    %450 = vmatpush1.msra.mxu0 0.0
    %451 = vmatprep.subr.mxu0 0.0
    %452 = vmatpush1.msra.mxu0 0.0
    %453 = vmatprep.subr.mxu0 0.0
    %454 = vmatpush1.msra.mxu0 0.0
    %455 = vmatprep.subr.mxu0 0.0
    %456 = vmatpush1.msra.mxu0 0.0
    %457 = vmatprep.subr.mxu0 0.0
    %458 = vmatpush1.msra.mxu0 0.0
    %459 = vmatprep.subr.mxu0 0.0
    %460 = vmatpush1.msra.mxu0 0.0
    %461 = vmatprep.subr.mxu0 0.0
    %462 = vmatpush1.msra.mxu0 0.0
    %463 = vmatprep.subr.mxu0 0.0
    %464 = vmatpush1.msra.mxu0 0.0
    %465 = vmatprep.subr.mxu0 0.0
    %466 = vmatpush1.msra.mxu0 0.0
    %467 = vmatprep.subr.mxu0 0.0
    %468 = vmatpush1.msra.mxu0 0.0
    %469 = vmatprep.subr.mxu0 0.0
    %470 = vmatpush1.msra.mxu0 0.0
    %471 = vmatprep.subr.mxu0 0.0
    %472 = vmatpush1.msra.mxu0 0.0
    %473 = vmatprep.mubr.f32.mxu0 0.0
    %474 = vmatmul.mubr.f32.gmra.mrb[0].mxu0 %v407
    %v475 = vpop.f32.mrb[0].mxu0
    %v476 = vadd.f32 %v94, %v475
    %v477 = vpop.f32.mrb[0].mxu0
    %478 = vdwg.mxu0
    %479 = vmatprep.subr.mxu0 0.0
    %480 = vmatpush1.msra.mxu0 %v81
    %481 = vmatprep.subr.mxu0 0.0
    %482 = vmatpush1.msra.mxu0 %v82
    %483 = vmatprep.subr.mxu0 0.0
    %484 = vmatpush1.msra.mxu0 %v83
    %485 = vmatprep.subr.mxu0 0.0
    %486 = vmatpush1.msra.mxu0 %v84
    %487 = vmatprep.subr.mxu0 0.0
    %488 = vmatpush1.msra.mxu0 0.0
    %489 = vmatprep.subr.mxu0 0.0
    %490 = vmatpush1.msra.mxu0 0.0
    %491 = vmatprep.subr.mxu0 0.0
    %492 = vmatpush1.msra.mxu0 0.0
    %493 = vmatprep.subr.mxu0 0.0
    %494 = vmatpush1.msra.mxu0 0.0
    %495 = vmatprep.subr.mxu0 0.0
    %496 = vmatpush1.msra.mxu0 0.0
    %497 = vmatprep.subr.mxu0 0.0
    %498 = vmatpush1.msra.mxu0 0.0
    %499 = vmatprep.subr.mxu0 0.0
    %500 = vmatpush1.msra.mxu0 0.0
    %501 = vmatprep.subr.mxu0 0.0
    %502 = vmatpush1.msra.mxu0 0.0
    %503 = vmatprep.subr.mxu0 0.0
    %504 = vmatpush1.msra.mxu0 0.0
    %505 = vmatprep.subr.mxu0 0.0
    %506 = vmatpush1.msra.mxu0 0.0
    %507 = vmatprep.subr.mxu0 0.0
    %508 = vmatpush1.msra.mxu0 0.0
    %509 = vmatprep.subr.mxu0 0.0
    %510 = vmatpush1.msra.mxu0 0.0
    %511 = vmatprep.subr.mxu0 0.0
    %512 = vmatpush1.msra.mxu0 0.0
    %513 = vmatprep.subr.mxu0 0.0
    %514 = vmatpush1.msra.mxu0 0.0
    %515 = vmatprep.subr.mxu0 0.0
    %516 = vmatpush1.msra.mxu0 0.0
    %517 = vmatprep.subr.mxu0 0.0
    %518 = vmatpush1.msra.mxu0 0.0
    %519 = vmatprep.subr.mxu0 0.0
    %520 = vmatpush1.msra.mxu0 0.0
    %521 = vmatprep.subr.mxu0 0.0
    %522 = vmatpush1.msra.mxu0 0.0
    %523 = vmatprep.subr.mxu0 0.0
    %524 = vmatpush1.msra.mxu0 0.0
    %525 = vmatprep.subr.mxu0 0.0
    %526 = vmatpush1.msra.mxu0 0.0
    %527 = vmatprep.subr.mxu0 0.0
    %528 = vmatpush1.msra.mxu0 0.0
    %529 = vmatprep.subr.mxu0 0.0
    %530 = vmatpush1.msra.mxu0 0.0
    %531 = vmatprep.subr.mxu0 0.0
    %532 = vmatpush1.msra.mxu0 0.0
    %533 = vmatprep.subr.mxu0 0.0
    %534 = vmatpush1.msra.mxu0 0.0
    %535 = vmatprep.subr.mxu0 0.0
    %536 = vmatpush1.msra.mxu0 0.0
    %537 = vmatprep.subr.mxu0 0.0
    %538 = vmatpush1.msra.mxu0 0.0
    %539 = vmatprep.subr.mxu0 0.0
    %540 = vmatpush1.msra.mxu0 0.0
    %541 = vmatprep.subr.mxu0 0.0
    %542 = vmatpush1.msra.mxu0 0.0
    %543 = vmatprep.mubr.f32.mxu0 0.0
    %544 = vmatmul.mubr.f32.gmra.mrb[0].mxu0 %v407
    %v545 = vpop.f32.mrb[0].mxu0
    %v546 = vadd.f32 0.0, %v545
    %v547 = vpop.f32.mrb[0].mxu0
    %548 = vdwg.mxu0
    %v550 = vrot.slane %v546, 6
    %v552 = vadd.f32 %v294, %v550
    %v553 = vxor.u32 %v552, 2147483648
    %v554 = vmul.f32 %v553, 1.442695
    %v555 = vpow.pop %v554
    %v556 = vadd.f32 %v555, 1.0
    %v557 = vrcp.pop %v556
    %v558 = vmul.f32 1.0, %v557
    %v559 = vtanh.pop %v552
    %v561 = vrot.slane %v397, 6
    %v563 = vmul.f32 %v558, %v561
    %565 = vrot.lane.b32.xlu0 %v559, 64
    %v566 = vpop.permute.xlu0 %565
    %v568 = vmul.f32 %v558, %v566
    %570 = vrot.lane.b32.xlu0 %v568, 32
    %v571 = vpop.permute.xlu0 %570
    %v573 = vadd.f32 %v563, %v571
    %v574 = vtanh.pop %v573
    %576 = vrot.lane.b32.xlu0 %v574, 64
    %v577 = vpop.permute.xlu0 %576
    %v579 = vmul.f32 %v558, %v577
    %v581 = vsel %vm220, %v98, 0
    %583 = vmatprep.subr.mxu0 0.0
    %584 = vmatpush1.msra.mxu0 %v85
    %585 = vmatprep.subr.mxu0 0.0
    %586 = vmatpush1.msra.mxu0 %v86
    %587 = vmatprep.subr.mxu0 0.0
    %588 = vmatpush1.msra.mxu0 %v87
    %589 = vmatprep.subr.mxu0 0.0
    %590 = vmatpush1.msra.mxu0 %v88
    %591 = vmatprep.subr.mxu0 0.0
    %592 = vmatpush1.msra.mxu0 0.0
    %593 = vmatprep.subr.mxu0 0.0
    %594 = vmatpush1.msra.mxu0 0.0
    %595 = vmatprep.subr.mxu0 0.0
    %596 = vmatpush1.msra.mxu0 0.0
    %597 = vmatprep.subr.mxu0 0.0
    %598 = vmatpush1.msra.mxu0 0.0
    %599 = vmatprep.subr.mxu0 0.0
    %600 = vmatpush1.msra.mxu0 0.0
    %601 = vmatprep.subr.mxu0 0.0
    %602 = vmatpush1.msra.mxu0 0.0
    %603 = vmatprep.subr.mxu0 0.0
    %604 = vmatpush1.msra.mxu0 0.0
    %605 = vmatprep.subr.mxu0 0.0
    %606 = vmatpush1.msra.mxu0 0.0
    %607 = vmatprep.subr.mxu0 0.0
    %608 = vmatpush1.msra.mxu0 0.0
    %609 = vmatprep.subr.mxu0 0.0
    %610 = vmatpush1.msra.mxu0 0.0
    %611 = vmatprep.subr.mxu0 0.0
    %612 = vmatpush1.msra.mxu0 0.0
    %613 = vmatprep.subr.mxu0 0.0
    %614 = vmatpush1.msra.mxu0 0.0
    %615 = vmatprep.subr.mxu0 0.0
    %616 = vmatpush1.msra.mxu0 0.0
    %617 = vmatprep.subr.mxu0 0.0
    %618 = vmatpush1.msra.mxu0 0.0
    %619 = vmatprep.subr.mxu0 0.0
    %620 = vmatpush1.msra.mxu0 0.0
    %621 = vmatprep.subr.mxu0 0.0
    %622 = vmatpush1.msra.mxu0 0.0
    %623 = vmatprep.subr.mxu0 0.0
    %624 = vmatpush1.msra.mxu0 0.0
    %625 = vmatprep.subr.mxu0 0.0
    %626 = vmatpush1.msra.mxu0 0.0
    %627 = vmatprep.subr.mxu0 0.0
    %628 = vmatpush1.msra.mxu0 0.0
    %629 = vmatprep.subr.mxu0 0.0
    %630 = vmatpush1.msra.mxu0 0.0
    %631 = vmatprep.subr.mxu0 0.0
    %632 = vmatpush1.msra.mxu0 0.0
    %633 = vmatprep.subr.mxu0 0.0
    %634 = vmatpush1.msra.mxu0 0.0
    %635 = vmatprep.subr.mxu0 0.0
    %636 = vmatpush1.msra.mxu0 0.0
    %637 = vmatprep.subr.mxu0 0.0
    %638 = vmatpush1.msra.mxu0 0.0
    %639 = vmatprep.subr.mxu0 0.0
    %640 = vmatpush1.msra.mxu0 0.0
    %641 = vmatprep.subr.mxu0 0.0
    %642 = vmatpush1.msra.mxu0 0.0
    %643 = vmatprep.subr.mxu0 0.0
    %644 = vmatpush1.msra.mxu0 0.0
    %645 = vmatprep.subr.mxu0 0.0
    %646 = vmatpush1.msra.mxu0 0.0
    %647 = vmatprep.mubr.f32.mxu0 0.0
    %648 = vmatmul.mubr.f32.gmra.mrb[0].mxu0 %v581
    %v649 = vpop.f32.mrb[0].mxu0
    %v650 = vadd.f32 0.0, %v649
    %v651 = vpop.f32.mrb[0].mxu0
    %652 = vdwg.mxu0
    %v653 = vadd.f32 %v476, %v650
    %v654 = vxor.u32 %v653, 2147483648
    %v655 = vmul.f32 %v654, 1.442695
    %v656 = vpow.pop %v655
    %v657 = vadd.f32 %v656, 1.0
    %v658 = vrcp.pop %v657
    %v659 = vmul.f32 1.0, %v658
    %v660 = vtanh.pop %v653
    %662 = vrot.lane.b32.xlu0 %v101, 32
    %v663 = vpop.permute.xlu0 %662
    %v665 = vmul.f32 %v659, %v663
    %667 = vrot.lane.b32.xlu0 %v660, 64
    %v668 = vpop.permute.xlu0 %667
    %v670 = vmul.f32 %v659, %v668
    %672 = vrot.lane.b32.xlu0 %v670, 32
    %v673 = vpop.permute.xlu0 %672
    %v675 = vadd.f32 %v665, %v673
    %v676 = vtanh.pop %v675
    %678 = vrot.lane.b32.xlu0 %v676, 64
    %v679 = vpop.permute.xlu0 %678
    %v681 = vmul.f32 %v659, %v679
    %v683 = vrot.slane %v579, 2
    %684 = vrot.lane.b32.xlu0 %v683, 32
    %v685 = vpop.permute.xlu0 %684
    %v686 = vsel %vm220, %v685, 0
    %688 = vmatprep.subr.mxu0 0.0
    %689 = vmatpush1.msra.mxu0 %v77
    %690 = vmatprep.subr.mxu0 0.0
    %691 = vmatpush1.msra.mxu0 %v78
    %692 = vmatprep.subr.mxu0 0.0
    %693 = vmatpush1.msra.mxu0 %v79
    %694 = vmatprep.subr.mxu0 0.0
    %695 = vmatpush1.msra.mxu0 %v80
    %696 = vmatprep.subr.mxu0 0.0
    %697 = vmatpush1.msra.mxu0 0.0
    %698 = vmatprep.subr.mxu0 0.0
    %699 = vmatpush1.msra.mxu0 0.0
    %700 = vmatprep.subr.mxu0 0.0
    %701 = vmatpush1.msra.mxu0 0.0
    %702 = vmatprep.subr.mxu0 0.0
    %703 = vmatpush1.msra.mxu0 0.0
    %704 = vmatprep.subr.mxu0 0.0
    %705 = vmatpush1.msra.mxu0 0.0
    %706 = vmatprep.subr.mxu0 0.0
    %707 = vmatpush1.msra.mxu0 0.0
    %708 = vmatprep.subr.mxu0 0.0
    %709 = vmatpush1.msra.mxu0 0.0
    %710 = vmatprep.subr.mxu0 0.0
    %711 = vmatpush1.msra.mxu0 0.0
    %712 = vmatprep.subr.mxu0 0.0
    %713 = vmatpush1.msra.mxu0 0.0
    %714 = vmatprep.subr.mxu0 0.0
    %715 = vmatpush1.msra.mxu0 0.0
    %716 = vmatprep.subr.mxu0 0.0
    %717 = vmatpush1.msra.mxu0 0.0
    %718 = vmatprep.subr.mxu0 0.0
    %719 = vmatpush1.msra.mxu0 0.0
    %720 = vmatprep.subr.mxu0 0.0
    %721 = vmatpush1.msra.mxu0 0.0
    %722 = vmatprep.subr.mxu0 0.0
    %723 = vmatpush1.msra.mxu0 0.0
    %724 = vmatprep.subr.mxu0 0.0
    %725 = vmatpush1.msra.mxu0 0.0
    %726 = vmatprep.subr.mxu0 0.0
    %727 = vmatpush1.msra.mxu0 0.0
    %728 = vmatprep.subr.mxu0 0.0
    %729 = vmatpush1.msra.mxu0 0.0
    %730 = vmatprep.subr.mxu0 0.0
    %731 = vmatpush1.msra.mxu0 0.0
    %732 = vmatprep.subr.mxu0 0.0
    %733 = vmatpush1.msra.mxu0 0.0
    %734 = vmatprep.subr.mxu0 0.0
    %735 = vmatpush1.msra.mxu0 0.0
    %736 = vmatprep.subr.mxu0 0.0
    %737 = vmatpush1.msra.mxu0 0.0
    %738 = vmatprep.subr.mxu0 0.0
    %739 = vmatpush1.msra.mxu0 0.0
    %740 = vmatprep.subr.mxu0 0.0
    %741 = vmatpush1.msra.mxu0 0.0
    %742 = vmatprep.subr.mxu0 0.0
    %743 = vmatpush1.msra.mxu0 0.0
    %744 = vmatprep.subr.mxu0 0.0
    %745 = vmatpush1.msra.mxu0 0.0
    %746 = vmatprep.subr.mxu0 0.0
    %747 = vmatpush1.msra.mxu0 0.0
    %748 = vmatprep.subr.mxu0 0.0
    %749 = vmatpush1.msra.mxu0 0.0
    %750 = vmatprep.subr.mxu0 0.0
    %751 = vmatpush1.msra.mxu0 0.0
    %752 = vmatprep.mubr.f32.mxu0 0.0
    %753 = vmatmul.mubr.f32.gmra.mrb[0].mxu0 %v686
    %v754 = vpop.f32.mrb[0].mxu0
    %v755 = vadd.f32 %v94, %v754
    %v756 = vpop.f32.mrb[0].mxu0
    %757 = vdwg.mxu0
    %758 = vmatprep.subr.mxu0 0.0
    %759 = vmatpush1.msra.mxu0 %v81
    %760 = vmatprep.subr.mxu0 0.0
    %761 = vmatpush1.msra.mxu0 %v82
    %762 = vmatprep.subr.mxu0 0.0
    %763 = vmatpush1.msra.mxu0 %v83
    %764 = vmatprep.subr.mxu0 0.0
    %765 = vmatpush1.msra.mxu0 %v84
    %766 = vmatprep.subr.mxu0 0.0
    %767 = vmatpush1.msra.mxu0 0.0
    %768 = vmatprep.subr.mxu0 0.0
    %769 = vmatpush1.msra.mxu0 0.0
    %770 = vmatprep.subr.mxu0 0.0
    %771 = vmatpush1.msra.mxu0 0.0
    %772 = vmatprep.subr.mxu0 0.0
    %773 = vmatpush1.msra.mxu0 0.0
    %774 = vmatprep.subr.mxu0 0.0
    %775 = vmatpush1.msra.mxu0 0.0
    %776 = vmatprep.subr.mxu0 0.0
    %777 = vmatpush1.msra.mxu0 0.0
    %778 = vmatprep.subr.mxu0 0.0
    %779 = vmatpush1.msra.mxu0 0.0
    %780 = vmatprep.subr.mxu0 0.0
    %781 = vmatpush1.msra.mxu0 0.0
    %782 = vmatprep.subr.mxu0 0.0
    %783 = vmatpush1.msra.mxu0 0.0
    %784 = vmatprep.subr.mxu0 0.0
    %785 = vmatpush1.msra.mxu0 0.0
    %786 = vmatprep.subr.mxu0 0.0
    %787 = vmatpush1.msra.mxu0 0.0
    %788 = vmatprep.subr.mxu0 0.0
    %789 = vmatpush1.msra.mxu0 0.0
    %790 = vmatprep.subr.mxu0 0.0
    %791 = vmatpush1.msra.mxu0 0.0
    %792 = vmatprep.subr.mxu0 0.0
    %793 = vmatpush1.msra.mxu0 0.0
    %794 = vmatprep.subr.mxu0 0.0
    %795 = vmatpush1.msra.mxu0 0.0
    %796 = vmatprep.subr.mxu0 0.0
    %797 = vmatpush1.msra.mxu0 0.0
    %798 = vmatprep.subr.mxu0 0.0
    %799 = vmatpush1.msra.mxu0 0.0
    %800 = vmatprep.subr.mxu0 0.0
    %801 = vmatpush1.msra.mxu0 0.0
    %802 = vmatprep.subr.mxu0 0.0
    %803 = vmatpush1.msra.mxu0 0.0
    %804 = vmatprep.subr.mxu0 0.0
    %805 = vmatpush1.msra.mxu0 0.0
    %806 = vmatprep.subr.mxu0 0.0
    %807 = vmatpush1.msra.mxu0 0.0
    %808 = vmatprep.subr.mxu0 0.0
    %809 = vmatpush1.msra.mxu0 0.0
    %810 = vmatprep.subr.mxu0 0.0
    %811 = vmatpush1.msra.mxu0 0.0
    %812 = vmatprep.subr.mxu0 0.0
    %813 = vmatpush1.msra.mxu0 0.0
    %814 = vmatprep.subr.mxu0 0.0
    %815 = vmatpush1.msra.mxu0 0.0
    %816 = vmatprep.subr.mxu0 0.0
    %817 = vmatpush1.msra.mxu0 0.0
    %818 = vmatprep.subr.mxu0 0.0
    %819 = vmatpush1.msra.mxu0 0.0
    %820 = vmatprep.subr.mxu0 0.0
    %821 = vmatpush1.msra.mxu0 0.0
    %822 = vmatprep.mubr.f32.mxu0 0.0
    %823 = vmatmul.mubr.f32.gmra.mrb[0].mxu0 %v686
    %v824 = vpop.f32.mrb[0].mxu0
    %v825 = vadd.f32 0.0, %v824
    %v826 = vpop.f32.mrb[0].mxu0
    %827 = vdwg.mxu0
    %v829 = vrot.slane %v825, 4
    %v831 = vadd.f32 %v294, %v829
    %v832 = vxor.u32 %v831, 2147483648
    %v833 = vmul.f32 %v832, 1.442695
    %v834 = vpow.pop %v833
    %v835 = vadd.f32 %v834, 1.0
    %v836 = vrcp.pop %v835
    %v837 = vmul.f32 1.0, %v836
    %v838 = vtanh.pop %v831
    %v840 = vrot.slane %v573, 6
    %v842 = vmul.f32 %v837, %v840
    %844 = vrot.lane.b32.xlu0 %v838, 64
    %v845 = vpop.permute.xlu0 %844
    %v847 = vmul.f32 %v837, %v845
    %849 = vrot.lane.b32.xlu0 %v847, 32
    %v850 = vpop.permute.xlu0 %849
    %v852 = vadd.f32 %v842, %v850
    %v853 = vtanh.pop %v852
    %855 = vrot.lane.b32.xlu0 %v853, 64
    %v856 = vpop.permute.xlu0 %855
    %v858 = vmul.f32 %v837, %v856
    %860 = vrot.lane.b32.xlu0 %v681, 32
    %v861 = vpop.permute.xlu0 %860
    %v862 = vsel %vm220, %v861, 0
    %864 = vmatprep.subr.mxu0 0.0
    %865 = vmatpush1.msra.mxu0 %v85
    %866 = vmatprep.subr.mxu0 0.0
    %867 = vmatpush1.msra.mxu0 %v86
    %868 = vmatprep.subr.mxu0 0.0
    %869 = vmatpush1.msra.mxu0 %v87
    %870 = vmatprep.subr.mxu0 0.0
    %871 = vmatpush1.msra.mxu0 %v88
    %872 = vmatprep.subr.mxu0 0.0
    %873 = vmatpush1.msra.mxu0 0.0
    %874 = vmatprep.subr.mxu0 0.0
    %875 = vmatpush1.msra.mxu0 0.0
    %876 = vmatprep.subr.mxu0 0.0
    %877 = vmatpush1.msra.mxu0 0.0
    %878 = vmatprep.subr.mxu0 0.0
    %879 = vmatpush1.msra.mxu0 0.0
    %880 = vmatprep.subr.mxu0 0.0
    %881 = vmatpush1.msra.mxu0 0.0
    %882 = vmatprep.subr.mxu0 0.0
    %883 = vmatpush1.msra.mxu0 0.0
    %884 = vmatprep.subr.mxu0 0.0
    %885 = vmatpush1.msra.mxu0 0.0
    %886 = vmatprep.subr.mxu0 0.0
    %887 = vmatpush1.msra.mxu0 0.0
    %888 = vmatprep.subr.mxu0 0.0
    %889 = vmatpush1.msra.mxu0 0.0
    %890 = vmatprep.subr.mxu0 0.0
    %891 = vmatpush1.msra.mxu0 0.0
    %892 = vmatprep.subr.mxu0 0.0
    %893 = vmatpush1.msra.mxu0 0.0
    %894 = vmatprep.subr.mxu0 0.0
    %895 = vmatpush1.msra.mxu0 0.0
    %896 = vmatprep.subr.mxu0 0.0
    %897 = vmatpush1.msra.mxu0 0.0
    %898 = vmatprep.subr.mxu0 0.0
    %899 = vmatpush1.msra.mxu0 0.0
    %900 = vmatprep.subr.mxu0 0.0
    %901 = vmatpush1.msra.mxu0 0.0
    %902 = vmatprep.subr.mxu0 0.0
    %903 = vmatpush1.msra.mxu0 0.0
    %904 = vmatprep.subr.mxu0 0.0
    %905 = vmatpush1.msra.mxu0 0.0
    %906 = vmatprep.subr.mxu0 0.0
    %907 = vmatpush1.msra.mxu0 0.0
    %908 = vmatprep.subr.mxu0 0.0
    %909 = vmatpush1.msra.mxu0 0.0
    %910 = vmatprep.subr.mxu0 0.0
    %911 = vmatpush1.msra.mxu0 0.0
    %912 = vmatprep.subr.mxu0 0.0
    %913 = vmatpush1.msra.mxu0 0.0
    %914 = vmatprep.subr.mxu0 0.0
    %915 = vmatpush1.msra.mxu0 0.0
    %916 = vmatprep.subr.mxu0 0.0
    %917 = vmatpush1.msra.mxu0 0.0
    %918 = vmatprep.subr.mxu0 0.0
    %919 = vmatpush1.msra.mxu0 0.0
    %920 = vmatprep.subr.mxu0 0.0
    %921 = vmatpush1.msra.mxu0 0.0
    %922 = vmatprep.subr.mxu0 0.0
    %923 = vmatpush1.msra.mxu0 0.0
    %924 = vmatprep.subr.mxu0 0.0
    %925 = vmatpush1.msra.mxu0 0.0
    %926 = vmatprep.subr.mxu0 0.0
    %927 = vmatpush1.msra.mxu0 0.0
    %928 = vmatprep.mubr.f32.mxu0 0.0
    %929 = vmatmul.mubr.f32.gmra.mrb[0].mxu0 %v862
    %v930 = vpop.f32.mrb[0].mxu0
    %v931 = vadd.f32 0.0, %v930
    %v932 = vpop.f32.mrb[0].mxu0
    %933 = vdwg.mxu0
    %v934 = vadd.f32 %v755, %v931
    %v935 = vxor.u32 %v934, 2147483648
    %v936 = vmul.f32 %v935, 1.442695
    %v937 = vpow.pop %v936
    %v938 = vadd.f32 %v937, 1.0
    %v939 = vrcp.pop %v938
    %v940 = vmul.f32 1.0, %v939
    %v941 = vtanh.pop %v934
    %v942 = vmul.f32 %v940, %v675
    %944 = vrot.lane.b32.xlu0 %v941, 64
    %v945 = vpop.permute.xlu0 %944
    %v947 = vmul.f32 %v940, %v945
    %949 = vrot.lane.b32.xlu0 %v947, 32
    %v950 = vpop.permute.xlu0 %949
    %v952 = vadd.f32 %v942, %v950
    %v953 = vtanh.pop %v952
    %955 = vrot.lane.b32.xlu0 %v953, 64
    %v956 = vpop.permute.xlu0 %955
    %v958 = vmul.f32 %v940, %v956
    %v960 = vrot.slane %v858, 4
    %961 = vrot.lane.b32.xlu0 %v960, 32
    %v962 = vpop.permute.xlu0 %961
    %v963 = vsel %vm220, %v962, 0
    %965 = vmatprep.subr.mxu0 0.0
    %966 = vmatpush1.msra.mxu0 %v77
    %967 = vmatprep.subr.mxu0 0.0
    %968 = vmatpush1.msra.mxu0 %v78
    %969 = vmatprep.subr.mxu0 0.0
    %970 = vmatpush1.msra.mxu0 %v79
    %971 = vmatprep.subr.mxu0 0.0
    %972 = vmatpush1.msra.mxu0 %v80
    %973 = vmatprep.subr.mxu0 0.0
    %974 = vmatpush1.msra.mxu0 0.0
    %975 = vmatprep.subr.mxu0 0.0
    %976 = vmatpush1.msra.mxu0 0.0
    %977 = vmatprep.subr.mxu0 0.0
    %978 = vmatpush1.msra.mxu0 0.0
    %979 = vmatprep.subr.mxu0 0.0
    %980 = vmatpush1.msra.mxu0 0.0
    %981 = vmatprep.subr.mxu0 0.0
    %982 = vmatpush1.msra.mxu0 0.0
    %983 = vmatprep.subr.mxu0 0.0
    %984 = vmatpush1.msra.mxu0 0.0
    %985 = vmatprep.subr.mxu0 0.0
    %986 = vmatpush1.msra.mxu0 0.0
    %987 = vmatprep.subr.mxu0 0.0
    %988 = vmatpush1.msra.mxu0 0.0
    %989 = vmatprep.subr.mxu0 0.0
    %990 = vmatpush1.msra.mxu0 0.0
    %991 = vmatprep.subr.mxu0 0.0
    %992 = vmatpush1.msra.mxu0 0.0
    %993 = vmatprep.subr.mxu0 0.0
    %994 = vmatpush1.msra.mxu0 0.0
    %995 = vmatprep.subr.mxu0 0.0
    %996 = vmatpush1.msra.mxu0 0.0
    %997 = vmatprep.subr.mxu0 0.0
    %998 = vmatpush1.msra.mxu0 0.0
    %999 = vmatprep.subr.mxu0 0.0
    %1000 = vmatpush1.msra.mxu0 0.0
    %1001 = vmatprep.subr.mxu0 0.0
    %1002 = vmatpush1.msra.mxu0 0.0
    %1003 = vmatprep.subr.mxu0 0.0
    %1004 = vmatpush1.msra.mxu0 0.0
    %1005 = vmatprep.subr.mxu0 0.0
    %1006 = vmatpush1.msra.mxu0 0.0
    %1007 = vmatprep.subr.mxu0 0.0
    %1008 = vmatpush1.msra.mxu0 0.0
    %1009 = vmatprep.subr.mxu0 0.0
    %1010 = vmatpush1.msra.mxu0 0.0
    %1011 = vmatprep.subr.mxu0 0.0
    %1012 = vmatpush1.msra.mxu0 0.0
    %1013 = vmatprep.subr.mxu0 0.0
    %1014 = vmatpush1.msra.mxu0 0.0
    %1015 = vmatprep.subr.mxu0 0.0
    %1016 = vmatpush1.msra.mxu0 0.0
    %1017 = vmatprep.subr.mxu0 0.0
    %1018 = vmatpush1.msra.mxu0 0.0
    %1019 = vmatprep.subr.mxu0 0.0
    %1020 = vmatpush1.msra.mxu0 0.0
    %1021 = vmatprep.subr.mxu0 0.0
    %1022 = vmatpush1.msra.mxu0 0.0
    %1023 = vmatprep.subr.mxu0 0.0
    %1024 = vmatpush1.msra.mxu0 0.0
    %1025 = vmatprep.subr.mxu0 0.0
    %1026 = vmatpush1.msra.mxu0 0.0
    %1027 = vmatprep.subr.mxu0 0.0
    %1028 = vmatpush1.msra.mxu0 0.0
    %1029 = vmatprep.mubr.f32.mxu0 0.0
    %1030 = vmatmul.mubr.f32.gmra.mrb[0].mxu0 %v963
    %v1031 = vpop.f32.mrb[0].mxu0
    %v1032 = vadd.f32 %v94, %v1031
    %v1033 = vpop.f32.mrb[0].mxu0
    %1034 = vdwg.mxu0
    %1035 = vmatprep.subr.mxu0 0.0
    %1036 = vmatpush1.msra.mxu0 %v81
    %1037 = vmatprep.subr.mxu0 0.0
    %1038 = vmatpush1.msra.mxu0 %v82
    %1039 = vmatprep.subr.mxu0 0.0
    %1040 = vmatpush1.msra.mxu0 %v83
    %1041 = vmatprep.subr.mxu0 0.0
    %1042 = vmatpush1.msra.mxu0 %v84
    %1043 = vmatprep.subr.mxu0 0.0
    %1044 = vmatpush1.msra.mxu0 0.0
    %1045 = vmatprep.subr.mxu0 0.0
    %1046 = vmatpush1.msra.mxu0 0.0
    %1047 = vmatprep.subr.mxu0 0.0
    %1048 = vmatpush1.msra.mxu0 0.0
    %1049 = vmatprep.subr.mxu0 0.0
    %1050 = vmatpush1.msra.mxu0 0.0
    %1051 = vmatprep.subr.mxu0 0.0
    %1052 = vmatpush1.msra.mxu0 0.0
    %1053 = vmatprep.subr.mxu0 0.0
    %1054 = vmatpush1.msra.mxu0 0.0
    %1055 = vmatprep.subr.mxu0 0.0
    %1056 = vmatpush1.msra.mxu0 0.0
    %1057 = vmatprep.subr.mxu0 0.0
    %1058 = vmatpush1.msra.mxu0 0.0
    %1059 = vmatprep.subr.mxu0 0.0
    %1060 = vmatpush1.msra.mxu0 0.0
    %1061 = vmatprep.subr.mxu0 0.0
    %1062 = vmatpush1.msra.mxu0 0.0
    %1063 = vmatprep.subr.mxu0 0.0
    %1064 = vmatpush1.msra.mxu0 0.0
    %1065 = vmatprep.subr.mxu0 0.0
    %1066 = vmatpush1.msra.mxu0 0.0
    %1067 = vmatprep.subr.mxu0 0.0
    %1068 = vmatpush1.msra.mxu0 0.0
    %1069 = vmatprep.subr.mxu0 0.0
    %1070 = vmatpush1.msra.mxu0 0.0
    %1071 = vmatprep.subr.mxu0 0.0
    %1072 = vmatpush1.msra.mxu0 0.0
    %1073 = vmatprep.subr.mxu0 0.0
    %1074 = vmatpush1.msra.mxu0 0.0
    %1075 = vmatprep.subr.mxu0 0.0
    %1076 = vmatpush1.msra.mxu0 0.0
    %1077 = vmatprep.subr.mxu0 0.0
    %1078 = vmatpush1.msra.mxu0 0.0
    %1079 = vmatprep.subr.mxu0 0.0
    %1080 = vmatpush1.msra.mxu0 0.0
    %1081 = vmatprep.subr.mxu0 0.0
    %1082 = vmatpush1.msra.mxu0 0.0
    %1083 = vmatprep.subr.mxu0 0.0
    %1084 = vmatpush1.msra.mxu0 0.0
    %1085 = vmatprep.subr.mxu0 0.0
    %1086 = vmatpush1.msra.mxu0 0.0
    %1087 = vmatprep.subr.mxu0 0.0
    %1088 = vmatpush1.msra.mxu0 0.0
    %1089 = vmatprep.subr.mxu0 0.0
    %1090 = vmatpush1.msra.mxu0 0.0
    %1091 = vmatprep.subr.mxu0 0.0
    %1092 = vmatpush1.msra.mxu0 0.0
    %1093 = vmatprep.subr.mxu0 0.0
    %1094 = vmatpush1.msra.mxu0 0.0
    %1095 = vmatprep.subr.mxu0 0.0
    %1096 = vmatpush1.msra.mxu0 0.0
    %1097 = vmatprep.subr.mxu0 0.0
    %1098 = vmatpush1.msra.mxu0 0.0
    %1099 = vmatprep.mubr.f32.mxu0 0.0
    %1100 = vmatmul.mubr.f32.gmra.mrb[0].mxu0 %v963
    %v1101 = vpop.f32.mrb[0].mxu0
    %v1102 = vadd.f32 0.0, %v1101
    %v1103 = vpop.f32.mrb[0].mxu0
    %1104 = vdwg.mxu0
    %v1106 = vrot.slane %v1102, 2
    %v1108 = vadd.f32 %v294, %v1106
    %v1109 = vxor.u32 %v1108, 2147483648
    %v1110 = vmul.f32 %v1109, 1.442695
    %v1111 = vpow.pop %v1110
    %v1112 = vadd.f32 %v1111, 1.0
    %v1113 = vrcp.pop %v1112
    %v1114 = vmul.f32 1.0, %v1113
    %v1115 = vtanh.pop %v1108
    %v1117 = vrot.slane %v852, 6
    %v1119 = vmul.f32 %v1114, %v1117
    %1121 = vrot.lane.b32.xlu0 %v1115, 64
    %v1122 = vpop.permute.xlu0 %1121
    %v1124 = vmul.f32 %v1114, %v1122
    %1126 = vrot.lane.b32.xlu0 %v1124, 32
    %v1127 = vpop.permute.xlu0 %1126
    %v1129 = vadd.f32 %v1119, %v1127
    %v1130 = vtanh.pop %v1129
    %1132 = vrot.lane.b32.xlu0 %v1130, 64
    %v1133 = vpop.permute.xlu0 %1132
    %v1135 = vmul.f32 %v1114, %v1133
    %1137 = vrot.lane.b32.xlu0 %v958, 32
    %v1138 = vpop.permute.xlu0 %1137
    %v1139 = vsel %vm220, %v1138, 0
    %1141 = vmatprep.subr.mxu0 0.0
    %1142 = vmatpush1.msra.mxu0 %v85
    %1143 = vmatprep.subr.mxu0 0.0
    %1144 = vmatpush1.msra.mxu0 %v86
    %1145 = vmatprep.subr.mxu0 0.0
    %1146 = vmatpush1.msra.mxu0 %v87
    %1147 = vmatprep.subr.mxu0 0.0
    %1148 = vmatpush1.msra.mxu0 %v88
    %1149 = vmatprep.subr.mxu0 0.0
    %1150 = vmatpush1.msra.mxu0 0.0
    %1151 = vmatprep.subr.mxu0 0.0
    %1152 = vmatpush1.msra.mxu0 0.0
    %1153 = vmatprep.subr.mxu0 0.0
    %1154 = vmatpush1.msra.mxu0 0.0
    %1155 = vmatprep.subr.mxu0 0.0
    %1156 = vmatpush1.msra.mxu0 0.0
    %1157 = vmatprep.subr.mxu0 0.0
    %1158 = vmatpush1.msra.mxu0 0.0
    %1159 = vmatprep.subr.mxu0 0.0
    %1160 = vmatpush1.msra.mxu0 0.0
    %1161 = vmatprep.subr.mxu0 0.0
    %1162 = vmatpush1.msra.mxu0 0.0
    %1163 = vmatprep.subr.mxu0 0.0
    %1164 = vmatpush1.msra.mxu0 0.0
    %1165 = vmatprep.subr.mxu0 0.0
    %1166 = vmatpush1.msra.mxu0 0.0
    %1167 = vmatprep.subr.mxu0 0.0
    %1168 = vmatpush1.msra.mxu0 0.0
    %1169 = vmatprep.subr.mxu0 0.0
    %1170 = vmatpush1.msra.mxu0 0.0
    %1171 = vmatprep.subr.mxu0 0.0
    %1172 = vmatpush1.msra.mxu0 0.0
    %1173 = vmatprep.subr.mxu0 0.0
    %1174 = vmatpush1.msra.mxu0 0.0
    %1175 = vmatprep.subr.mxu0 0.0
    %1176 = vmatpush1.msra.mxu0 0.0
    %1177 = vmatprep.subr.mxu0 0.0
    %1178 = vmatpush1.msra.mxu0 0.0
    %1179 = vmatprep.subr.mxu0 0.0
    %1180 = vmatpush1.msra.mxu0 0.0
    %1181 = vmatprep.subr.mxu0 0.0
    %1182 = vmatpush1.msra.mxu0 0.0
    %1183 = vmatprep.subr.mxu0 0.0
    %1184 = vmatpush1.msra.mxu0 0.0
    %1185 = vmatprep.subr.mxu0 0.0
    %1186 = vmatpush1.msra.mxu0 0.0
    %1187 = vmatprep.subr.mxu0 0.0
    %1188 = vmatpush1.msra.mxu0 0.0
    %1189 = vmatprep.subr.mxu0 0.0
    %1190 = vmatpush1.msra.mxu0 0.0
    %1191 = vmatprep.subr.mxu0 0.0
    %1192 = vmatpush1.msra.mxu0 0.0
    %1193 = vmatprep.subr.mxu0 0.0
    %1194 = vmatpush1.msra.mxu0 0.0
    %1195 = vmatprep.subr.mxu0 0.0
    %1196 = vmatpush1.msra.mxu0 0.0
    %1197 = vmatprep.subr.mxu0 0.0
    %1198 = vmatpush1.msra.mxu0 0.0
    %1199 = vmatprep.subr.mxu0 0.0
    %1200 = vmatpush1.msra.mxu0 0.0
    %1201 = vmatprep.subr.mxu0 0.0
    %1202 = vmatpush1.msra.mxu0 0.0
    %1203 = vmatprep.subr.mxu0 0.0
    %1204 = vmatpush1.msra.mxu0 0.0
    %1205 = vmatprep.mubr.f32.mxu0 0.0
    %1206 = vmatmul.mubr.f32.gmra.mrb[0].mxu0 %v1139
    %v1207 = vpop.f32.mrb[0].mxu0
    %v1208 = vadd.f32 0.0, %v1207
    %v1209 = vpop.f32.mrb[0].mxu0
    %1210 = vdwg.mxu0
    %v1211 = vadd.f32 %v1032, %v1208
    %v1212 = vxor.u32 %v1211, 2147483648
    %v1213 = vmul.f32 %v1212, 1.442695
    %v1214 = vpow.pop %v1213
    %v1215 = vadd.f32 %v1214, 1.0
    %v1216 = vrcp.pop %v1215
    %v1217 = vmul.f32 1.0, %v1216
    %v1218 = vtanh.pop %v1211
    %v1219 = vmul.f32 %v1217, %v952
    %1221 = vrot.lane.b32.xlu0 %v1218, 64
    %v1222 = vpop.permute.xlu0 %1221
    %v1224 = vmul.f32 %v1217, %v1222
    %1226 = vrot.lane.b32.xlu0 %v1224, 32
    %v1227 = vpop.permute.xlu0 %1226
    %v1229 = vadd.f32 %v1219, %v1227
    %v1230 = vtanh.pop %v1229
    %1232 = vrot.lane.b32.xlu0 %v1230, 64
    %v1233 = vpop.permute.xlu0 %1232
    %v1235 = vmul.f32 %v1217, %v1233
    %v1237 = vrot.slane %v1135, 6
    %1238 = vrot.lane.b32.xlu0 %v1237, 32
    %v1239 = vpop.permute.xlu0 %1238
    %v1240 = vsel %vm220, %v1239, 0
    %1242 = vmatprep.subr.mxu0 0.0
    %1243 = vmatpush1.msra.mxu0 %v77
    %1244 = vmatprep.subr.mxu0 0.0
    %1245 = vmatpush1.msra.mxu0 %v78
    %1246 = vmatprep.subr.mxu0 0.0
    %1247 = vmatpush1.msra.mxu0 %v79
    %1248 = vmatprep.subr.mxu0 0.0
    %1249 = vmatpush1.msra.mxu0 %v80
    %1250 = vmatprep.subr.mxu0 0.0
    %1251 = vmatpush1.msra.mxu0 0.0
    %1252 = vmatprep.subr.mxu0 0.0
    %1253 = vmatpush1.msra.mxu0 0.0
    %1254 = vmatprep.subr.mxu0 0.0
    %1255 = vmatpush1.msra.mxu0 0.0
    %1256 = vmatprep.subr.mxu0 0.0
    %1257 = vmatpush1.msra.mxu0 0.0
    %1258 = vmatprep.subr.mxu0 0.0
    %1259 = vmatpush1.msra.mxu0 0.0
    %1260 = vmatprep.subr.mxu0 0.0
    %1261 = vmatpush1.msra.mxu0 0.0
    %1262 = vmatprep.subr.mxu0 0.0
    %1263 = vmatpush1.msra.mxu0 0.0
    %1264 = vmatprep.subr.mxu0 0.0
    %1265 = vmatpush1.msra.mxu0 0.0
    %1266 = vmatprep.subr.mxu0 0.0
    %1267 = vmatpush1.msra.mxu0 0.0
    %1268 = vmatprep.subr.mxu0 0.0
    %1269 = vmatpush1.msra.mxu0 0.0
    %1270 = vmatprep.subr.mxu0 0.0
    %1271 = vmatpush1.msra.mxu0 0.0
    %1272 = vmatprep.subr.mxu0 0.0
    %1273 = vmatpush1.msra.mxu0 0.0
    %1274 = vmatprep.subr.mxu0 0.0
    %1275 = vmatpush1.msra.mxu0 0.0
    %1276 = vmatprep.subr.mxu0 0.0
    %1277 = vmatpush1.msra.mxu0 0.0
    %1278 = vmatprep.subr.mxu0 0.0
    %1279 = vmatpush1.msra.mxu0 0.0
    %1280 = vmatprep.subr.mxu0 0.0
    %1281 = vmatpush1.msra.mxu0 0.0
    %1282 = vmatprep.subr.mxu0 0.0
    %1283 = vmatpush1.msra.mxu0 0.0
    %1284 = vmatprep.subr.mxu0 0.0
    %1285 = vmatpush1.msra.mxu0 0.0
    %1286 = vmatprep.subr.mxu0 0.0
    %1287 = vmatpush1.msra.mxu0 0.0
    %1288 = vmatprep.subr.mxu0 0.0
    %1289 = vmatpush1.msra.mxu0 0.0
    %1290 = vmatprep.subr.mxu0 0.0
    %1291 = vmatpush1.msra.mxu0 0.0
    %1292 = vmatprep.subr.mxu0 0.0
    %1293 = vmatpush1.msra.mxu0 0.0
    %1294 = vmatprep.subr.mxu0 0.0
    %1295 = vmatpush1.msra.mxu0 0.0
    %1296 = vmatprep.subr.mxu0 0.0
    %1297 = vmatpush1.msra.mxu0 0.0
    %1298 = vmatprep.subr.mxu0 0.0
    %1299 = vmatpush1.msra.mxu0 0.0
    %1300 = vmatprep.subr.mxu0 0.0
    %1301 = vmatpush1.msra.mxu0 0.0
    %1302 = vmatprep.subr.mxu0 0.0
    %1303 = vmatpush1.msra.mxu0 0.0
    %1304 = vmatprep.subr.mxu0 0.0
    %1305 = vmatpush1.msra.mxu0 0.0
    %1306 = vmatprep.mubr.f32.mxu0 0.0
    %1307 = vmatmul.mubr.f32.gmra.mrb[0].mxu0 %v1240
    %v1308 = vpop.f32.mrb[0].mxu0
    %v1309 = vadd.f32 %v94, %v1308
    %v1310 = vpop.f32.mrb[0].mxu0
    %1311 = vdwg.mxu0
    %1312 = vmatprep.subr.mxu0 0.0
    %1313 = vmatpush1.msra.mxu0 %v81
    %1314 = vmatprep.subr.mxu0 0.0
    %1315 = vmatpush1.msra.mxu0 %v82
    %1316 = vmatprep.subr.mxu0 0.0
    %1317 = vmatpush1.msra.mxu0 %v83
    %1318 = vmatprep.subr.mxu0 0.0
    %1319 = vmatpush1.msra.mxu0 %v84
    %1320 = vmatprep.subr.mxu0 0.0
    %1321 = vmatpush1.msra.mxu0 0.0
    %1322 = vmatprep.subr.mxu0 0.0
    %1323 = vmatpush1.msra.mxu0 0.0
    %1324 = vmatprep.subr.mxu0 0.0
    %1325 = vmatpush1.msra.mxu0 0.0
    %1326 = vmatprep.subr.mxu0 0.0
    %1327 = vmatpush1.msra.mxu0 0.0
    %1328 = vmatprep.subr.mxu0 0.0
    %1329 = vmatpush1.msra.mxu0 0.0
    %1330 = vmatprep.subr.mxu0 0.0
    %1331 = vmatpush1.msra.mxu0 0.0
    %1332 = vmatprep.subr.mxu0 0.0
    %1333 = vmatpush1.msra.mxu0 0.0
    %1334 = vmatprep.subr.mxu0 0.0
    %1335 = vmatpush1.msra.mxu0 0.0
    %1336 = vmatprep.subr.mxu0 0.0
    %1337 = vmatpush1.msra.mxu0 0.0
    %1338 = vmatprep.subr.mxu0 0.0
    %1339 = vmatpush1.msra.mxu0 0.0
    %1340 = vmatprep.subr.mxu0 0.0
    %1341 = vmatpush1.msra.mxu0 0.0
    %1342 = vmatprep.subr.mxu0 0.0
    %1343 = vmatpush1.msra.mxu0 0.0
    %1344 = vmatprep.subr.mxu0 0.0
    %1345 = vmatpush1.msra.mxu0 0.0
    %1346 = vmatprep.subr.mxu0 0.0
    %1347 = vmatpush1.msra.mxu0 0.0
    %1348 = vmatprep.subr.mxu0 0.0
    %1349 = vmatpush1.msra.mxu0 0.0
    %1350 = vmatprep.subr.mxu0 0.0
    %1351 = vmatpush1.msra.mxu0 0.0
    %1352 = vmatprep.subr.mxu0 0.0
    %1353 = vmatpush1.msra.mxu0 0.0
    %1354 = vmatprep.subr.mxu0 0.0
    %1355 = vmatpush1.msra.mxu0 0.0
    %1356 = vmatprep.subr.mxu0 0.0
    %1357 = vmatpush1.msra.mxu0 0.0
    %1358 = vmatprep.subr.mxu0 0.0
    %1359 = vmatpush1.msra.mxu0 0.0
    %1360 = vmatprep.subr.mxu0 0.0
    %1361 = vmatpush1.msra.mxu0 0.0
    %1362 = vmatprep.subr.mxu0 0.0
    %1363 = vmatpush1.msra.mxu0 0.0
    %1364 = vmatprep.subr.mxu0 0.0
    %1365 = vmatpush1.msra.mxu0 0.0
    %1366 = vmatprep.subr.mxu0 0.0
    %1367 = vmatpush1.msra.mxu0 0.0
    %1368 = vmatprep.subr.mxu0 0.0
    %1369 = vmatpush1.msra.mxu0 0.0
    %1370 = vmatprep.subr.mxu0 0.0
    %1371 = vmatpush1.msra.mxu0 0.0
    %1372 = vmatprep.subr.mxu0 0.0
    %1373 = vmatpush1.msra.mxu0 0.0
    %1374 = vmatprep.subr.mxu0 0.0
    %1375 = vmatpush1.msra.mxu0 0.0
    %1376 = vmatprep.mubr.f32.mxu0 0.0
    %1377 = vmatmul.mubr.f32.gmra.mrb[0].mxu0 %v1240
    %v1378 = vpop.f32.mrb[0].mxu0
    %v1379 = vadd.f32 0.0, %v1378
    %v1380 = vpop.f32.mrb[0].mxu0
    %1381 = vdwg.mxu0
    %v1382 = vadd.f32 %v299, %v1379
    %v1383 = vxor.u32 %v1382, 2147483648
    %v1384 = vmul.f32 %v1383, 1.442695
    %v1385 = vpow.pop %v1384
    %v1386 = vadd.f32 %v1385, 1.0
    %v1387 = vrcp.pop %v1386
    %v1388 = vmul.f32 1.0, %v1387
    %v1389 = vtanh.pop %v1382
    %v1391 = vrot.slane %v1129, 6
    %v1393 = vmul.f32 %v1388, %v1391
    %1395 = vrot.lane.b32.xlu0 %v1389, 64
    %v1396 = vpop.permute.xlu0 %1395
    %v1398 = vmul.f32 %v1388, %v1396
    %1400 = vrot.lane.b32.xlu0 %v1398, 32
    %v1401 = vpop.permute.xlu0 %1400
    %v1403 = vadd.f32 %v1393, %v1401
    %v1404 = vtanh.pop %v1403
    %1406 = vrot.lane.b32.xlu0 %v1404, 64
    %v1407 = vpop.permute.xlu0 %1406
    %v1409 = vmul.f32 %v1388, %v1407
    %1411 = vrot.lane.b32.xlu0 %v1235, 32
    %v1412 = vpop.permute.xlu0 %1411
    %v1413 = vsel %vm220, %v1412, 0
    %1415 = vmatprep.subr.mxu0 0.0
    %1416 = vmatpush1.msra.mxu0 %v85
    %1417 = vmatprep.subr.mxu0 0.0
    %1418 = vmatpush1.msra.mxu0 %v86
    %1419 = vmatprep.subr.mxu0 0.0
    %1420 = vmatpush1.msra.mxu0 %v87
    %1421 = vmatprep.subr.mxu0 0.0
    %1422 = vmatpush1.msra.mxu0 %v88
    %1423 = vmatprep.subr.mxu0 0.0
    %1424 = vmatpush1.msra.mxu0 0.0
    %1425 = vmatprep.subr.mxu0 0.0
    %1426 = vmatpush1.msra.mxu0 0.0
    %1427 = vmatprep.subr.mxu0 0.0
    %1428 = vmatpush1.msra.mxu0 0.0
    %1429 = vmatprep.subr.mxu0 0.0
    %1430 = vmatpush1.msra.mxu0 0.0
    %1431 = vmatprep.subr.mxu0 0.0
    %1432 = vmatpush1.msra.mxu0 0.0
    %1433 = vmatprep.subr.mxu0 0.0
    %1434 = vmatpush1.msra.mxu0 0.0
    %1435 = vmatprep.subr.mxu0 0.0
    %1436 = vmatpush1.msra.mxu0 0.0
    %1437 = vmatprep.subr.mxu0 0.0
    %1438 = vmatpush1.msra.mxu0 0.0
    %1439 = vmatprep.subr.mxu0 0.0
    %1440 = vmatpush1.msra.mxu0 0.0
    %1441 = vmatprep.subr.mxu0 0.0
    %1442 = vmatpush1.msra.mxu0 0.0
    %1443 = vmatprep.subr.mxu0 0.0
    %1444 = vmatpush1.msra.mxu0 0.0
    %1445 = vmatprep.subr.mxu0 0.0
    %1446 = vmatpush1.msra.mxu0 0.0
    %1447 = vmatprep.subr.mxu0 0.0
    %1448 = vmatpush1.msra.mxu0 0.0
    %1449 = vmatprep.subr.mxu0 0.0
    %1450 = vmatpush1.msra.mxu0 0.0
    %1451 = vmatprep.subr.mxu0 0.0
    %1452 = vmatpush1.msra.mxu0 0.0
    %1453 = vmatprep.subr.mxu0 0.0
    %1454 = vmatpush1.msra.mxu0 0.0
    %1455 = vmatprep.subr.mxu0 0.0
    %1456 = vmatpush1.msra.mxu0 0.0
    %1457 = vmatprep.subr.mxu0 0.0
    %1458 = vmatpush1.msra.mxu0 0.0
    %1459 = vmatprep.subr.mxu0 0.0
    %1460 = vmatpush1.msra.mxu0 0.0
    %1461 = vmatprep.subr.mxu0 0.0
    %1462 = vmatpush1.msra.mxu0 0.0
    %1463 = vmatprep.subr.mxu0 0.0
    %1464 = vmatpush1.msra.mxu0 0.0
    %1465 = vmatprep.subr.mxu0 0.0
    %1466 = vmatpush1.msra.mxu0 0.0
    %1467 = vmatprep.subr.mxu0 0.0
    %1468 = vmatpush1.msra.mxu0 0.0
    %1469 = vmatprep.subr.mxu0 0.0
    %1470 = vmatpush1.msra.mxu0 0.0
    %1471 = vmatprep.subr.mxu0 0.0
    %1472 = vmatpush1.msra.mxu0 0.0
    %1473 = vmatprep.subr.mxu0 0.0
    %1474 = vmatpush1.msra.mxu0 0.0
    %1475 = vmatprep.subr.mxu0 0.0
    %1476 = vmatpush1.msra.mxu0 0.0
    %1477 = vmatprep.subr.mxu0 0.0
    %1478 = vmatpush1.msra.mxu0 0.0
    %1479 = vmatprep.mubr.f32.mxu0 0.0
    %1480 = vmatmul.mubr.f32.gmra.mrb[0].mxu0 %v1413
    %v1481 = vpop.f32.mrb[0].mxu0
    %v1482 = vadd.f32 0.0, %v1481
    %v1483 = vpop.f32.mrb[0].mxu0
    %1484 = vdwg.mxu0
    %v1485 = vadd.f32 %v1309, %v1482
    %v1486 = vxor.u32 %v1485, 2147483648
    %v1487 = vmul.f32 %v1486, 1.442695
    %v1488 = vpow.pop %v1487
    %v1489 = vadd.f32 %v1488, 1.0
    %v1490 = vrcp.pop %v1489
    %v1491 = vmul.f32 1.0, %v1490
    %v1492 = vtanh.pop %v1485
    %v1493 = vmul.f32 %v1491, %v1229
    %1495 = vrot.lane.b32.xlu0 %v1492, 64
    %v1496 = vpop.permute.xlu0 %1495
    %v1498 = vmul.f32 %v1491, %v1496
    %1500 = vrot.lane.b32.xlu0 %v1498, 32
    %v1501 = vpop.permute.xlu0 %1500
    %v1503 = vadd.f32 %v1493, %v1501
    %v1504 = vtanh.pop %v1503
    %1506 = vrot.lane.b32.xlu0 %v1504, 64
    %v1507 = vpop.permute.xlu0 %1506
    %v1509 = vmul.f32 %v1491, %v1507
    %1511 = vrot.lane.b32.xlu0 %v1409, 32
    %v1512 = vpop.permute.xlu0 %1511
    %v1513 = vsel %vm220, %v1512, 0
    %1515 = vmatprep.subr.mxu0 0.0
    %1516 = vmatpush1.msra.mxu0 %v77
    %1517 = vmatprep.subr.mxu0 0.0
    %1518 = vmatpush1.msra.mxu0 %v78
    %1519 = vmatprep.subr.mxu0 0.0
    %1520 = vmatpush1.msra.mxu0 %v79
    %1521 = vmatprep.subr.mxu0 0.0
    %1522 = vmatpush1.msra.mxu0 %v80
    %1523 = vmatprep.subr.mxu0 0.0
    %1524 = vmatpush1.msra.mxu0 0.0
    %1525 = vmatprep.subr.mxu0 0.0
    %1526 = vmatpush1.msra.mxu0 0.0
    %1527 = vmatprep.subr.mxu0 0.0
    %1528 = vmatpush1.msra.mxu0 0.0
    %1529 = vmatprep.subr.mxu0 0.0
    %1530 = vmatpush1.msra.mxu0 0.0
    %1531 = vmatprep.subr.mxu0 0.0
    %1532 = vmatpush1.msra.mxu0 0.0
    %1533 = vmatprep.subr.mxu0 0.0
    %1534 = vmatpush1.msra.mxu0 0.0
    %1535 = vmatprep.subr.mxu0 0.0
    %1536 = vmatpush1.msra.mxu0 0.0
    %1537 = vmatprep.subr.mxu0 0.0
    %1538 = vmatpush1.msra.mxu0 0.0
    %1539 = vmatprep.subr.mxu0 0.0
    %1540 = vmatpush1.msra.mxu0 0.0
    %1541 = vmatprep.subr.mxu0 0.0
    %1542 = vmatpush1.msra.mxu0 0.0
    %1543 = vmatprep.subr.mxu0 0.0
    %1544 = vmatpush1.msra.mxu0 0.0
    %1545 = vmatprep.subr.mxu0 0.0
    %1546 = vmatpush1.msra.mxu0 0.0
    %1547 = vmatprep.subr.mxu0 0.0
    %1548 = vmatpush1.msra.mxu0 0.0
    %1549 = vmatprep.subr.mxu0 0.0
    %1550 = vmatpush1.msra.mxu0 0.0
    %1551 = vmatprep.subr.mxu0 0.0
    %1552 = vmatpush1.msra.mxu0 0.0
    %1553 = vmatprep.subr.mxu0 0.0
    %1554 = vmatpush1.msra.mxu0 0.0
    %1555 = vmatprep.subr.mxu0 0.0
    %1556 = vmatpush1.msra.mxu0 0.0
    %1557 = vmatprep.subr.mxu0 0.0
    %1558 = vmatpush1.msra.mxu0 0.0
    %1559 = vmatprep.subr.mxu0 0.0
    %1560 = vmatpush1.msra.mxu0 0.0
    %1561 = vmatprep.subr.mxu0 0.0
    %1562 = vmatpush1.msra.mxu0 0.0
    %1563 = vmatprep.subr.mxu0 0.0
    %1564 = vmatpush1.msra.mxu0 0.0
    %1565 = vmatprep.subr.mxu0 0.0
    %1566 = vmatpush1.msra.mxu0 0.0
    %1567 = vmatprep.subr.mxu0 0.0
    %1568 = vmatpush1.msra.mxu0 0.0
    %1569 = vmatprep.subr.mxu0 0.0
    %1570 = vmatpush1.msra.mxu0 0.0
    %1571 = vmatprep.subr.mxu0 0.0
    %1572 = vmatpush1.msra.mxu0 0.0
    %1573 = vmatprep.subr.mxu0 0.0
    %1574 = vmatpush1.msra.mxu0 0.0
    %1575 = vmatprep.subr.mxu0 0.0
    %1576 = vmatpush1.msra.mxu0 0.0
    %1577 = vmatprep.subr.mxu0 0.0
    %1578 = vmatpush1.msra.mxu0 0.0
    %1579 = vmatprep.mubr.f32.mxu0 0.0
    %1580 = vmatmul.mubr.f32.gmra.mrb[0].mxu0 %v1513
    %v1581 = vpop.f32.mrb[0].mxu0
    %v1582 = vadd.f32 %v94, %v1581
    %v1583 = vpop.f32.mrb[0].mxu0
    %1584 = vdwg.mxu0
    %1585 = vmatprep.subr.mxu0 0.0
    %1586 = vmatpush1.msra.mxu0 %v81
    %1587 = vmatprep.subr.mxu0 0.0
    %1588 = vmatpush1.msra.mxu0 %v82
    %1589 = vmatprep.subr.mxu0 0.0
    %1590 = vmatpush1.msra.mxu0 %v83
    %1591 = vmatprep.subr.mxu0 0.0
    %1592 = vmatpush1.msra.mxu0 %v84
    %1593 = vmatprep.subr.mxu0 0.0
    %1594 = vmatpush1.msra.mxu0 0.0
    %1595 = vmatprep.subr.mxu0 0.0
    %1596 = vmatpush1.msra.mxu0 0.0
    %1597 = vmatprep.subr.mxu0 0.0
    %1598 = vmatpush1.msra.mxu0 0.0
    %1599 = vmatprep.subr.mxu0 0.0
    %1600 = vmatpush1.msra.mxu0 0.0
    %1601 = vmatprep.subr.mxu0 0.0
    %1602 = vmatpush1.msra.mxu0 0.0
    %1603 = vmatprep.subr.mxu0 0.0
    %1604 = vmatpush1.msra.mxu0 0.0
    %1605 = vmatprep.subr.mxu0 0.0
    %1606 = vmatpush1.msra.mxu0 0.0
    %1607 = vmatprep.subr.mxu0 0.0
    %1608 = vmatpush1.msra.mxu0 0.0
    %1609 = vmatprep.subr.mxu0 0.0
    %1610 = vmatpush1.msra.mxu0 0.0
    %1611 = vmatprep.subr.mxu0 0.0
    %1612 = vmatpush1.msra.mxu0 0.0
    %1613 = vmatprep.subr.mxu0 0.0
    %1614 = vmatpush1.msra.mxu0 0.0
    %1615 = vmatprep.subr.mxu0 0.0
    %1616 = vmatpush1.msra.mxu0 0.0
    %1617 = vmatprep.subr.mxu0 0.0
    %1618 = vmatpush1.msra.mxu0 0.0
    %1619 = vmatprep.subr.mxu0 0.0
    %1620 = vmatpush1.msra.mxu0 0.0
    %1621 = vmatprep.subr.mxu0 0.0
    %1622 = vmatpush1.msra.mxu0 0.0
    %1623 = vmatprep.subr.mxu0 0.0
    %1624 = vmatpush1.msra.mxu0 0.0
    %1625 = vmatprep.subr.mxu0 0.0
    %1626 = vmatpush1.msra.mxu0 0.0
    %1627 = vmatprep.subr.mxu0 0.0
    %1628 = vmatpush1.msra.mxu0 0.0
    %1629 = vmatprep.subr.mxu0 0.0
    %1630 = vmatpush1.msra.mxu0 0.0
    %1631 = vmatprep.subr.mxu0 0.0
    %1632 = vmatpush1.msra.mxu0 0.0
    %1633 = vmatprep.subr.mxu0 0.0
    %1634 = vmatpush1.msra.mxu0 0.0
    %1635 = vmatprep.subr.mxu0 0.0
    %1636 = vmatpush1.msra.mxu0 0.0
    %1637 = vmatprep.subr.mxu0 0.0
    %1638 = vmatpush1.msra.mxu0 0.0
    %1639 = vmatprep.subr.mxu0 0.0
    %1640 = vmatpush1.msra.mxu0 0.0
    %1641 = vmatprep.subr.mxu0 0.0
    %1642 = vmatpush1.msra.mxu0 0.0
    %1643 = vmatprep.subr.mxu0 0.0
    %1644 = vmatpush1.msra.mxu0 0.0
    %1645 = vmatprep.subr.mxu0 0.0
    %1646 = vmatpush1.msra.mxu0 0.0
    %1647 = vmatprep.subr.mxu0 0.0
    %1648 = vmatpush1.msra.mxu0 0.0
    %1649 = vmatprep.mubr.f32.mxu0 0.0
    %1650 = vmatmul.mubr.f32.gmra.mrb[0].mxu0 %v1513
    %v1651 = vpop.f32.mrb[0].mxu0
    %v1652 = vadd.f32 0.0, %v1651
    %v1653 = vpop.f32.mrb[0].mxu0
    %1654 = vdwg.mxu0
    %v1656 = vrot.slane %v1652, 6
    %v1658 = vadd.f32 %v299, %v1656
    %v1659 = vxor.u32 %v1658, 2147483648
    %v1660 = vmul.f32 %v1659, 1.442695
    %v1661 = vpow.pop %v1660
    %v1662 = vadd.f32 %v1661, 1.0
    %v1663 = vrcp.pop %v1662
    %v1664 = vmul.f32 1.0, %v1663
    %v1665 = vtanh.pop %v1658
    %v1667 = vrot.slane %v1403, 6
    %v1669 = vmul.f32 %v1664, %v1667
    %1671 = vrot.lane.b32.xlu0 %v1665, 64
    %v1672 = vpop.permute.xlu0 %1671
    %v1674 = vmul.f32 %v1664, %v1672
    %1676 = vrot.lane.b32.xlu0 %v1674, 32
    %v1677 = vpop.permute.xlu0 %1676
    %v1679 = vadd.f32 %v1669, %v1677
    %v1680 = vtanh.pop %v1679
    %1682 = vrot.lane.b32.xlu0 %v1680, 64
    %v1683 = vpop.permute.xlu0 %1682
    %v1685 = vmul.f32 %v1664, %v1683
    %1687 = vrot.lane.b32.xlu0 %v1509, 32
    %v1688 = vpop.permute.xlu0 %1687
    %v1689 = vsel %vm220, %v1688, 0
    %1691 = vmatprep.subr.mxu0 0.0
    %1692 = vmatpush1.msra.mxu0 %v85
    %1693 = vmatprep.subr.mxu0 0.0
    %1694 = vmatpush1.msra.mxu0 %v86
    %1695 = vmatprep.subr.mxu0 0.0
    %1696 = vmatpush1.msra.mxu0 %v87
    %1697 = vmatprep.subr.mxu0 0.0
    %1698 = vmatpush1.msra.mxu0 %v88
    %1699 = vmatprep.subr.mxu0 0.0
    %1700 = vmatpush1.msra.mxu0 0.0
    %1701 = vmatprep.subr.mxu0 0.0
    %1702 = vmatpush1.msra.mxu0 0.0
    %1703 = vmatprep.subr.mxu0 0.0
    %1704 = vmatpush1.msra.mxu0 0.0
    %1705 = vmatprep.subr.mxu0 0.0
    %1706 = vmatpush1.msra.mxu0 0.0
    %1707 = vmatprep.subr.mxu0 0.0
    %1708 = vmatpush1.msra.mxu0 0.0
    %1709 = vmatprep.subr.mxu0 0.0
    %1710 = vmatpush1.msra.mxu0 0.0
    %1711 = vmatprep.subr.mxu0 0.0
    %1712 = vmatpush1.msra.mxu0 0.0
    %1713 = vmatprep.subr.mxu0 0.0
    %1714 = vmatpush1.msra.mxu0 0.0
    %1715 = vmatprep.subr.mxu0 0.0
    %1716 = vmatpush1.msra.mxu0 0.0
    %1717 = vmatprep.subr.mxu0 0.0
    %1718 = vmatpush1.msra.mxu0 0.0
    %1719 = vmatprep.subr.mxu0 0.0
    %1720 = vmatpush1.msra.mxu0 0.0
    %1721 = vmatprep.subr.mxu0 0.0
    %1722 = vmatpush1.msra.mxu0 0.0
    %1723 = vmatprep.subr.mxu0 0.0
    %1724 = vmatpush1.msra.mxu0 0.0
    %1725 = vmatprep.subr.mxu0 0.0
    %1726 = vmatpush1.msra.mxu0 0.0
    %1727 = vmatprep.subr.mxu0 0.0
    %1728 = vmatpush1.msra.mxu0 0.0
    %1729 = vmatprep.subr.mxu0 0.0
    %1730 = vmatpush1.msra.mxu0 0.0
    %1731 = vmatprep.subr.mxu0 0.0
    %1732 = vmatpush1.msra.mxu0 0.0
    %1733 = vmatprep.subr.mxu0 0.0
    %1734 = vmatpush1.msra.mxu0 0.0
    %1735 = vmatprep.subr.mxu0 0.0
    %1736 = vmatpush1.msra.mxu0 0.0
    %1737 = vmatprep.subr.mxu0 0.0
    %1738 = vmatpush1.msra.mxu0 0.0
    %1739 = vmatprep.subr.mxu0 0.0
    %1740 = vmatpush1.msra.mxu0 0.0
    %1741 = vmatprep.subr.mxu0 0.0
    %1742 = vmatpush1.msra.mxu0 0.0
    %1743 = vmatprep.subr.mxu0 0.0
    %1744 = vmatpush1.msra.mxu0 0.0
    %1745 = vmatprep.subr.mxu0 0.0
    %1746 = vmatpush1.msra.mxu0 0.0
    %1747 = vmatprep.subr.mxu0 0.0
    %1748 = vmatpush1.msra.mxu0 0.0
    %1749 = vmatprep.subr.mxu0 0.0
    %1750 = vmatpush1.msra.mxu0 0.0
    %1751 = vmatprep.subr.mxu0 0.0
    %1752 = vmatpush1.msra.mxu0 0.0
    %1753 = vmatprep.subr.mxu0 0.0
    %1754 = vmatpush1.msra.mxu0 0.0
    %1755 = vmatprep.mubr.f32.mxu0 0.0
    %1756 = vmatmul.mubr.f32.gmra.mrb[0].mxu0 %v1689
    %v1757 = vpop.f32.mrb[0].mxu0
    %v1758 = vadd.f32 0.0, %v1757
    %v1759 = vpop.f32.mrb[0].mxu0
    %1760 = vdwg.mxu0
    %v1761 = vadd.f32 %v1582, %v1758
    %v1762 = vxor.u32 %v1761, 2147483648
    %v1763 = vmul.f32 %v1762, 1.442695
    %v1764 = vpow.pop %v1763
    %v1765 = vadd.f32 %v1764, 1.0
    %v1766 = vrcp.pop %v1765
    %v1767 = vmul.f32 1.0, %v1766
    %v1768 = vtanh.pop %v1761
    %v1769 = vmul.f32 %v1767, %v1503
    %1771 = vrot.lane.b32.xlu0 %v1768, 64
    %v1772 = vpop.permute.xlu0 %1771
    %v1774 = vmul.f32 %v1767, %v1772
    %1776 = vrot.lane.b32.xlu0 %v1774, 32
    %v1777 = vpop.permute.xlu0 %1776
    %v1779 = vadd.f32 %v1769, %v1777
    %v1780 = vtanh.pop %v1779
    %1782 = vrot.lane.b32.xlu0 %v1780, 64
    %v1783 = vpop.permute.xlu0 %1782
    %v1785 = vmul.f32 %v1767, %v1783
    %v1787 = vrot.slane %v1685, 2
    %1788 = vrot.lane.b32.xlu0 %v1787, 32
    %v1789 = vpop.permute.xlu0 %1788
    %v1790 = vsel %vm220, %v1789, 0
    %1792 = vmatprep.subr.mxu0 0.0
    %1793 = vmatpush1.msra.mxu0 %v77
    %1794 = vmatprep.subr.mxu0 0.0
    %1795 = vmatpush1.msra.mxu0 %v78
    %1796 = vmatprep.subr.mxu0 0.0
    %1797 = vmatpush1.msra.mxu0 %v79
    %1798 = vmatprep.subr.mxu0 0.0
    %1799 = vmatpush1.msra.mxu0 %v80
    %1800 = vmatprep.subr.mxu0 0.0
    %1801 = vmatpush1.msra.mxu0 0.0
    %1802 = vmatprep.subr.mxu0 0.0
    %1803 = vmatpush1.msra.mxu0 0.0
    %1804 = vmatprep.subr.mxu0 0.0
    %1805 = vmatpush1.msra.mxu0 0.0
    %1806 = vmatprep.subr.mxu0 0.0
    %1807 = vmatpush1.msra.mxu0 0.0
    %1808 = vmatprep.subr.mxu0 0.0
    %1809 = vmatpush1.msra.mxu0 0.0
    %1810 = vmatprep.subr.mxu0 0.0
    %1811 = vmatpush1.msra.mxu0 0.0
    %1812 = vmatprep.subr.mxu0 0.0
    %1813 = vmatpush1.msra.mxu0 0.0
    %1814 = vmatprep.subr.mxu0 0.0
    %1815 = vmatpush1.msra.mxu0 0.0
    %1816 = vmatprep.subr.mxu0 0.0
    %1817 = vmatpush1.msra.mxu0 0.0
    %1818 = vmatprep.subr.mxu0 0.0
    %1819 = vmatpush1.msra.mxu0 0.0
    %1820 = vmatprep.subr.mxu0 0.0
    %1821 = vmatpush1.msra.mxu0 0.0
    %1822 = vmatprep.subr.mxu0 0.0
    %1823 = vmatpush1.msra.mxu0 0.0
    %1824 = vmatprep.subr.mxu0 0.0
    %1825 = vmatpush1.msra.mxu0 0.0
    %1826 = vmatprep.subr.mxu0 0.0
    %1827 = vmatpush1.msra.mxu0 0.0
    %1828 = vmatprep.subr.mxu0 0.0
    %1829 = vmatpush1.msra.mxu0 0.0
    %1830 = vmatprep.subr.mxu0 0.0
    %1831 = vmatpush1.msra.mxu0 0.0
    %1832 = vmatprep.subr.mxu0 0.0
    %1833 = vmatpush1.msra.mxu0 0.0
    %1834 = vmatprep.subr.mxu0 0.0
    %1835 = vmatpush1.msra.mxu0 0.0
    %1836 = vmatprep.subr.mxu0 0.0
    %1837 = vmatpush1.msra.mxu0 0.0
    %1838 = vmatprep.subr.mxu0 0.0
    %1839 = vmatpush1.msra.mxu0 0.0
    %1840 = vmatprep.subr.mxu0 0.0
    %1841 = vmatpush1.msra.mxu0 0.0
    %1842 = vmatprep.subr.mxu0 0.0
    %1843 = vmatpush1.msra.mxu0 0.0
    %1844 = vmatprep.subr.mxu0 0.0
    %1845 = vmatpush1.msra.mxu0 0.0
    %1846 = vmatprep.subr.mxu0 0.0
    %1847 = vmatpush1.msra.mxu0 0.0
    %1848 = vmatprep.subr.mxu0 0.0
    %1849 = vmatpush1.msra.mxu0 0.0
    %1850 = vmatprep.subr.mxu0 0.0
    %1851 = vmatpush1.msra.mxu0 0.0
    %1852 = vmatprep.subr.mxu0 0.0
    %1853 = vmatpush1.msra.mxu0 0.0
    %1854 = vmatprep.subr.mxu0 0.0
    %1855 = vmatpush1.msra.mxu0 0.0
    %1856 = vmatprep.mubr.f32.mxu0 0.0
    %1857 = vmatmul.mubr.f32.gmra.mrb[0].mxu0 %v1790
    %v1858 = vpop.f32.mrb[0].mxu0
    %v1859 = vadd.f32 %v94, %v1858
    %v1860 = vpop.f32.mrb[0].mxu0
    %1861 = vdwg.mxu0
    %1862 = vmatprep.subr.mxu0 0.0
    %1863 = vmatpush1.msra.mxu0 %v81
    %1864 = vmatprep.subr.mxu0 0.0
    %1865 = vmatpush1.msra.mxu0 %v82
    %1866 = vmatprep.subr.mxu0 0.0
    %1867 = vmatpush1.msra.mxu0 %v83
    %1868 = vmatprep.subr.mxu0 0.0
    %1869 = vmatpush1.msra.mxu0 %v84
    %1870 = vmatprep.subr.mxu0 0.0
    %1871 = vmatpush1.msra.mxu0 0.0
    %1872 = vmatprep.subr.mxu0 0.0
    %1873 = vmatpush1.msra.mxu0 0.0
    %1874 = vmatprep.subr.mxu0 0.0
    %1875 = vmatpush1.msra.mxu0 0.0
    %1876 = vmatprep.subr.mxu0 0.0
    %1877 = vmatpush1.msra.mxu0 0.0
    %1878 = vmatprep.subr.mxu0 0.0
    %1879 = vmatpush1.msra.mxu0 0.0
    %1880 = vmatprep.subr.mxu0 0.0
    %1881 = vmatpush1.msra.mxu0 0.0
    %1882 = vmatprep.subr.mxu0 0.0
    %1883 = vmatpush1.msra.mxu0 0.0
    %1884 = vmatprep.subr.mxu0 0.0
    %1885 = vmatpush1.msra.mxu0 0.0
    %1886 = vmatprep.subr.mxu0 0.0
    %1887 = vmatpush1.msra.mxu0 0.0
    %1888 = vmatprep.subr.mxu0 0.0
    %1889 = vmatpush1.msra.mxu0 0.0
    %1890 = vmatprep.subr.mxu0 0.0
    %1891 = vmatpush1.msra.mxu0 0.0
    %1892 = vmatprep.subr.mxu0 0.0
    %1893 = vmatpush1.msra.mxu0 0.0
    %1894 = vmatprep.subr.mxu0 0.0
    %1895 = vmatpush1.msra.mxu0 0.0
    %1896 = vmatprep.subr.mxu0 0.0
    %1897 = vmatpush1.msra.mxu0 0.0
    %1898 = vmatprep.subr.mxu0 0.0
    %1899 = vmatpush1.msra.mxu0 0.0
    %1900 = vmatprep.subr.mxu0 0.0
    %1901 = vmatpush1.msra.mxu0 0.0
    %1902 = vmatprep.subr.mxu0 0.0
    %1903 = vmatpush1.msra.mxu0 0.0
    %1904 = vmatprep.subr.mxu0 0.0
    %1905 = vmatpush1.msra.mxu0 0.0
    %1906 = vmatprep.subr.mxu0 0.0
    %1907 = vmatpush1.msra.mxu0 0.0
    %1908 = vmatprep.subr.mxu0 0.0
    %1909 = vmatpush1.msra.mxu0 0.0
    %1910 = vmatprep.subr.mxu0 0.0
    %1911 = vmatpush1.msra.mxu0 0.0
    %1912 = vmatprep.subr.mxu0 0.0
    %1913 = vmatpush1.msra.mxu0 0.0
    %1914 = vmatprep.subr.mxu0 0.0
    %1915 = vmatpush1.msra.mxu0 0.0
    %1916 = vmatprep.subr.mxu0 0.0
    %1917 = vmatpush1.msra.mxu0 0.0
    %1918 = vmatprep.subr.mxu0 0.0
    %1919 = vmatpush1.msra.mxu0 0.0
    %1920 = vmatprep.subr.mxu0 0.0
    %1921 = vmatpush1.msra.mxu0 0.0
    %1922 = vmatprep.subr.mxu0 0.0
    %1923 = vmatpush1.msra.mxu0 0.0
    %1924 = vmatprep.subr.mxu0 0.0
    %1925 = vmatpush1.msra.mxu0 0.0
    %1926 = vmatprep.mubr.f32.mxu0 0.0
    %1927 = vmatmul.mubr.f32.gmra.mrb[0].mxu0 %v1790
    %v1928 = vpop.f32.mrb[0].mxu0
    %v1929 = vadd.f32 0.0, %v1928
    %v1930 = vpop.f32.mrb[0].mxu0
    %1931 = vdwg.mxu0
    %v1933 = vrot.slane %v1929, 4
    %v1935 = vadd.f32 %v299, %v1933
    %v1936 = vxor.u32 %v1935, 2147483648
    %v1937 = vmul.f32 %v1936, 1.442695
    %v1938 = vpow.pop %v1937
    %v1939 = vadd.f32 %v1938, 1.0
    %v1940 = vrcp.pop %v1939
    %v1941 = vmul.f32 1.0, %v1940
    %v1942 = vtanh.pop %v1935
    %v1944 = vrot.slane %v1679, 6
    %v1946 = vmul.f32 %v1941, %v1944
    %1948 = vrot.lane.b32.xlu0 %v1942, 64
    %v1949 = vpop.permute.xlu0 %1948
    %v1951 = vmul.f32 %v1941, %v1949
    %1953 = vrot.lane.b32.xlu0 %v1951, 32
    %v1954 = vpop.permute.xlu0 %1953
    %v1956 = vadd.f32 %v1946, %v1954
    %v1957 = vtanh.pop %v1956
    %1959 = vrot.lane.b32.xlu0 %v1957, 64
    %v1960 = vpop.permute.xlu0 %1959
    %v1962 = vmul.f32 %v1941, %v1960
    %1964 = vrot.lane.b32.xlu0 %v1785, 32
    %v1965 = vpop.permute.xlu0 %1964
    %v1966 = vsel %vm220, %v1965, 0
    %1968 = vmatprep.subr.mxu0 0.0
    %1969 = vmatpush1.msra.mxu0 %v85
    %1970 = vmatprep.subr.mxu0 0.0
    %1971 = vmatpush1.msra.mxu0 %v86
    %1972 = vmatprep.subr.mxu0 0.0
    %1973 = vmatpush1.msra.mxu0 %v87
    %1974 = vmatprep.subr.mxu0 0.0
    %1975 = vmatpush1.msra.mxu0 %v88
    %1976 = vmatprep.subr.mxu0 0.0
    %1977 = vmatpush1.msra.mxu0 0.0
    %1978 = vmatprep.subr.mxu0 0.0
    %1979 = vmatpush1.msra.mxu0 0.0
    %1980 = vmatprep.subr.mxu0 0.0
    %1981 = vmatpush1.msra.mxu0 0.0
    %1982 = vmatprep.subr.mxu0 0.0
    %1983 = vmatpush1.msra.mxu0 0.0
    %1984 = vmatprep.subr.mxu0 0.0
    %1985 = vmatpush1.msra.mxu0 0.0
    %1986 = vmatprep.subr.mxu0 0.0
    %1987 = vmatpush1.msra.mxu0 0.0
    %1988 = vmatprep.subr.mxu0 0.0
    %1989 = vmatpush1.msra.mxu0 0.0
    %1990 = vmatprep.subr.mxu0 0.0
    %1991 = vmatpush1.msra.mxu0 0.0
    %1992 = vmatprep.subr.mxu0 0.0
    %1993 = vmatpush1.msra.mxu0 0.0
    %1994 = vmatprep.subr.mxu0 0.0
    %1995 = vmatpush1.msra.mxu0 0.0
    %1996 = vmatprep.subr.mxu0 0.0
    %1997 = vmatpush1.msra.mxu0 0.0
    %1998 = vmatprep.subr.mxu0 0.0
    %1999 = vmatpush1.msra.mxu0 0.0
    %2000 = vmatprep.subr.mxu0 0.0
    %2001 = vmatpush1.msra.mxu0 0.0
    %2002 = vmatprep.subr.mxu0 0.0
    %2003 = vmatpush1.msra.mxu0 0.0
    %2004 = vmatprep.subr.mxu0 0.0
    %2005 = vmatpush1.msra.mxu0 0.0
    %2006 = vmatprep.subr.mxu0 0.0
    %2007 = vmatpush1.msra.mxu0 0.0
    %2008 = vmatprep.subr.mxu0 0.0
    %2009 = vmatpush1.msra.mxu0 0.0
    %2010 = vmatprep.subr.mxu0 0.0
    %2011 = vmatpush1.msra.mxu0 0.0
    %2012 = vmatprep.subr.mxu0 0.0
    %2013 = vmatpush1.msra.mxu0 0.0
    %2014 = vmatprep.subr.mxu0 0.0
    %2015 = vmatpush1.msra.mxu0 0.0
    %2016 = vmatprep.subr.mxu0 0.0
    %2017 = vmatpush1.msra.mxu0 0.0
    %2018 = vmatprep.subr.mxu0 0.0
    %2019 = vmatpush1.msra.mxu0 0.0
    %2020 = vmatprep.subr.mxu0 0.0
    %2021 = vmatpush1.msra.mxu0 0.0
    %2022 = vmatprep.subr.mxu0 0.0
    %2023 = vmatpush1.msra.mxu0 0.0
    %2024 = vmatprep.subr.mxu0 0.0
    %2025 = vmatpush1.msra.mxu0 0.0
    %2026 = vmatprep.subr.mxu0 0.0
    %2027 = vmatpush1.msra.mxu0 0.0
    %2028 = vmatprep.subr.mxu0 0.0
    %2029 = vmatpush1.msra.mxu0 0.0
    %2030 = vmatprep.subr.mxu0 0.0
    %2031 = vmatpush1.msra.mxu0 0.0
    %2032 = vmatprep.mubr.f32.mxu0 0.0
    %2033 = vmatmul.mubr.f32.gmra.mrb[0].mxu0 %v1966
    %v2034 = vpop.f32.mrb[0].mxu0
    %v2035 = vadd.f32 0.0, %v2034
    %v2036 = vpop.f32.mrb[0].mxu0
    %2037 = vdwg.mxu0
    %v2038 = vadd.f32 %v1859, %v2035
    %v2039 = vxor.u32 %v2038, 2147483648
    %v2040 = vmul.f32 %v2039, 1.442695
    %v2041 = vpow.pop %v2040
    %v2042 = vadd.f32 %v2041, 1.0
    %v2043 = vrcp.pop %v2042
    %v2044 = vmul.f32 1.0, %v2043
    %v2045 = vtanh.pop %v2038
    %v2046 = vmul.f32 %v2044, %v1779
    %2048 = vrot.lane.b32.xlu0 %v2045, 64
    %v2049 = vpop.permute.xlu0 %2048
    %v2051 = vmul.f32 %v2044, %v2049
    %2053 = vrot.lane.b32.xlu0 %v2051, 32
    %v2054 = vpop.permute.xlu0 %2053
    %v2056 = vadd.f32 %v2046, %v2054
    %v2057 = vtanh.pop %v2056
    %2059 = vrot.lane.b32.xlu0 %v2057, 64
    %v2060 = vpop.permute.xlu0 %2059
    %v2062 = vmul.f32 %v2044, %v2060
    %v2064 = vrot.slane %v1962, 4
    %2065 = vrot.lane.b32.xlu0 %v2064, 32
    %v2066 = vpop.permute.xlu0 %2065
    %v2067 = vsel %vm220, %v2066, 0
    %2069 = vmatprep.subr.mxu0 0.0
    %2070 = vmatpush1.msra.mxu0 %v77
    %2071 = vmatprep.subr.mxu0 0.0
    %2072 = vmatpush1.msra.mxu0 %v78
    %2073 = vmatprep.subr.mxu0 0.0
    %2074 = vmatpush1.msra.mxu0 %v79
    %2075 = vmatprep.subr.mxu0 0.0
    %2076 = vmatpush1.msra.mxu0 %v80
    %2077 = vmatprep.subr.mxu0 0.0
    %2078 = vmatpush1.msra.mxu0 0.0
    %2079 = vmatprep.subr.mxu0 0.0
    %2080 = vmatpush1.msra.mxu0 0.0
    %2081 = vmatprep.subr.mxu0 0.0
    %2082 = vmatpush1.msra.mxu0 0.0
    %2083 = vmatprep.subr.mxu0 0.0
    %2084 = vmatpush1.msra.mxu0 0.0
    %2085 = vmatprep.subr.mxu0 0.0
    %2086 = vmatpush1.msra.mxu0 0.0
    %2087 = vmatprep.subr.mxu0 0.0
    %2088 = vmatpush1.msra.mxu0 0.0
    %2089 = vmatprep.subr.mxu0 0.0
    %2090 = vmatpush1.msra.mxu0 0.0
    %2091 = vmatprep.subr.mxu0 0.0
    %2092 = vmatpush1.msra.mxu0 0.0
    %2093 = vmatprep.subr.mxu0 0.0
    %2094 = vmatpush1.msra.mxu0 0.0
    %2095 = vmatprep.subr.mxu0 0.0
    %2096 = vmatpush1.msra.mxu0 0.0
    %2097 = vmatprep.subr.mxu0 0.0
    %2098 = vmatpush1.msra.mxu0 0.0
    %2099 = vmatprep.subr.mxu0 0.0
    %2100 = vmatpush1.msra.mxu0 0.0
    %2101 = vmatprep.subr.mxu0 0.0
    %2102 = vmatpush1.msra.mxu0 0.0
    %2103 = vmatprep.subr.mxu0 0.0
    %2104 = vmatpush1.msra.mxu0 0.0
    %2105 = vmatprep.subr.mxu0 0.0
    %2106 = vmatpush1.msra.mxu0 0.0
    %2107 = vmatprep.subr.mxu0 0.0
    %2108 = vmatpush1.msra.mxu0 0.0
    %2109 = vmatprep.subr.mxu0 0.0
    %2110 = vmatpush1.msra.mxu0 0.0
    %2111 = vmatprep.subr.mxu0 0.0
    %2112 = vmatpush1.msra.mxu0 0.0
    %2113 = vmatprep.subr.mxu0 0.0
    %2114 = vmatpush1.msra.mxu0 0.0
    %2115 = vmatprep.subr.mxu0 0.0
    %2116 = vmatpush1.msra.mxu0 0.0
    %2117 = vmatprep.subr.mxu0 0.0
    %2118 = vmatpush1.msra.mxu0 0.0
    %2119 = vmatprep.subr.mxu0 0.0
    %2120 = vmatpush1.msra.mxu0 0.0
    %2121 = vmatprep.subr.mxu0 0.0
    %2122 = vmatpush1.msra.mxu0 0.0
    %2123 = vmatprep.subr.mxu0 0.0
    %2124 = vmatpush1.msra.mxu0 0.0
    %2125 = vmatprep.subr.mxu0 0.0
    %2126 = vmatpush1.msra.mxu0 0.0
    %2127 = vmatprep.subr.mxu0 0.0
    %2128 = vmatpush1.msra.mxu0 0.0
    %2129 = vmatprep.subr.mxu0 0.0
    %2130 = vmatpush1.msra.mxu0 0.0
    %2131 = vmatprep.subr.mxu0 0.0
    %2132 = vmatpush1.msra.mxu0 0.0
    %2133 = vmatprep.mubr.f32.mxu0 0.0
    %2134 = vmatmul.mubr.f32.gmra.mrb[0].mxu0 %v2067
    %v2135 = vpop.f32.mrb[0].mxu0
    %v2136 = vadd.f32 %v94, %v2135
    %v2137 = vpop.f32.mrb[0].mxu0
    %2138 = vdwg.mxu0
    %2139 = vmatprep.subr.mxu0 0.0
    %2140 = vmatpush1.msra.mxu0 %v81
    %2141 = vmatprep.subr.mxu0 0.0
    %2142 = vmatpush1.msra.mxu0 %v82
    %2143 = vmatprep.subr.mxu0 0.0
    %2144 = vmatpush1.msra.mxu0 %v83
    %2145 = vmatprep.subr.mxu0 0.0
    %2146 = vmatpush1.msra.mxu0 %v84
    %2147 = vmatprep.subr.mxu0 0.0
    %2148 = vmatpush1.msra.mxu0 0.0
    %2149 = vmatprep.subr.mxu0 0.0
    %2150 = vmatpush1.msra.mxu0 0.0
    %2151 = vmatprep.subr.mxu0 0.0
    %2152 = vmatpush1.msra.mxu0 0.0
    %2153 = vmatprep.subr.mxu0 0.0
    %2154 = vmatpush1.msra.mxu0 0.0
    %2155 = vmatprep.subr.mxu0 0.0
    %2156 = vmatpush1.msra.mxu0 0.0
    %2157 = vmatprep.subr.mxu0 0.0
    %2158 = vmatpush1.msra.mxu0 0.0
    %2159 = vmatprep.subr.mxu0 0.0
    %2160 = vmatpush1.msra.mxu0 0.0
    %2161 = vmatprep.subr.mxu0 0.0
    %2162 = vmatpush1.msra.mxu0 0.0
    %2163 = vmatprep.subr.mxu0 0.0
    %2164 = vmatpush1.msra.mxu0 0.0
    %2165 = vmatprep.subr.mxu0 0.0
    %2166 = vmatpush1.msra.mxu0 0.0
    %2167 = vmatprep.subr.mxu0 0.0
    %2168 = vmatpush1.msra.mxu0 0.0
    %2169 = vmatprep.subr.mxu0 0.0
    %2170 = vmatpush1.msra.mxu0 0.0
    %2171 = vmatprep.subr.mxu0 0.0
    %2172 = vmatpush1.msra.mxu0 0.0
    %2173 = vmatprep.subr.mxu0 0.0
    %2174 = vmatpush1.msra.mxu0 0.0
    %2175 = vmatprep.subr.mxu0 0.0
    %2176 = vmatpush1.msra.mxu0 0.0
    %2177 = vmatprep.subr.mxu0 0.0
    %2178 = vmatpush1.msra.mxu0 0.0
    %2179 = vmatprep.subr.mxu0 0.0
    %2180 = vmatpush1.msra.mxu0 0.0
    %2181 = vmatprep.subr.mxu0 0.0
    %2182 = vmatpush1.msra.mxu0 0.0
    %2183 = vmatprep.subr.mxu0 0.0
    %2184 = vmatpush1.msra.mxu0 0.0
    %2185 = vmatprep.subr.mxu0 0.0
    %2186 = vmatpush1.msra.mxu0 0.0
    %2187 = vmatprep.subr.mxu0 0.0
    %2188 = vmatpush1.msra.mxu0 0.0
    %2189 = vmatprep.subr.mxu0 0.0
    %2190 = vmatpush1.msra.mxu0 0.0
    %2191 = vmatprep.subr.mxu0 0.0
    %2192 = vmatpush1.msra.mxu0 0.0
    %2193 = vmatprep.subr.mxu0 0.0
    %2194 = vmatpush1.msra.mxu0 0.0
    %2195 = vmatprep.subr.mxu0 0.0
    %2196 = vmatpush1.msra.mxu0 0.0
    %2197 = vmatprep.subr.mxu0 0.0
    %2198 = vmatpush1.msra.mxu0 0.0
    %2199 = vmatprep.subr.mxu0 0.0
    %2200 = vmatpush1.msra.mxu0 0.0
    %2201 = vmatprep.subr.mxu0 0.0
    %2202 = vmatpush1.msra.mxu0 0.0
    %2203 = vmatprep.mubr.f32.mxu0 0.0
    %2204 = vmatmul.mubr.f32.gmra.mrb[0].mxu0 %v2067
    %v2205 = vpop.f32.mrb[0].mxu0
    %v2206 = vadd.f32 0.0, %v2205
    %v2207 = vpop.f32.mrb[0].mxu0
    %2208 = vdwg.mxu0
    %v2210 = vrot.slane %v2206, 2
    %v2212 = vadd.f32 %v299, %v2210
    %v2213 = vxor.u32 %v2212, 2147483648
    %v2214 = vmul.f32 %v2213, 1.442695
    %v2215 = vpow.pop %v2214
    %v2216 = vadd.f32 %v2215, 1.0
    %v2217 = vrcp.pop %v2216
    %v2218 = vmul.f32 1.0, %v2217
    %v2219 = vtanh.pop %v2212
    %v2221 = vrot.slane %v1956, 6
    %v2223 = vmul.f32 %v2218, %v2221
    %2225 = vrot.lane.b32.xlu0 %v2219, 64
    %v2226 = vpop.permute.xlu0 %2225
    %v2228 = vmul.f32 %v2218, %v2226
    %2230 = vrot.lane.b32.xlu0 %v2228, 32
    %v2231 = vpop.permute.xlu0 %2230
    %v2233 = vadd.f32 %v2223, %v2231
    %v2234 = vtanh.pop %v2233
    %2236 = vrot.lane.b32.xlu0 %v2234, 64
    %v2237 = vpop.permute.xlu0 %2236
    %v2239 = vmul.f32 %v2218, %v2237
    %2241 = vrot.lane.b32.xlu0 %v2062, 32
    %v2242 = vpop.permute.xlu0 %2241
    %v2243 = vsel %vm220, %v2242, 0
    %2245 = vmatprep.subr.mxu0 0.0
    %2246 = vmatpush1.msra.mxu0 %v85
    %2247 = vmatprep.subr.mxu0 0.0
    %2248 = vmatpush1.msra.mxu0 %v86
    %2249 = vmatprep.subr.mxu0 0.0
    %2250 = vmatpush1.msra.mxu0 %v87
    %2251 = vmatprep.subr.mxu0 0.0
    %2252 = vmatpush1.msra.mxu0 %v88
    %2253 = vmatprep.subr.mxu0 0.0
    %2254 = vmatpush1.msra.mxu0 0.0
    %2255 = vmatprep.subr.mxu0 0.0
    %2256 = vmatpush1.msra.mxu0 0.0
    %2257 = vmatprep.subr.mxu0 0.0
    %2258 = vmatpush1.msra.mxu0 0.0
    %2259 = vmatprep.subr.mxu0 0.0
    %2260 = vmatpush1.msra.mxu0 0.0
    %2261 = vmatprep.subr.mxu0 0.0
    %2262 = vmatpush1.msra.mxu0 0.0
    %2263 = vmatprep.subr.mxu0 0.0
    %2264 = vmatpush1.msra.mxu0 0.0
    %2265 = vmatprep.subr.mxu0 0.0
    %2266 = vmatpush1.msra.mxu0 0.0
    %2267 = vmatprep.subr.mxu0 0.0
    %2268 = vmatpush1.msra.mxu0 0.0
    %2269 = vmatprep.subr.mxu0 0.0
    %2270 = vmatpush1.msra.mxu0 0.0
    %2271 = vmatprep.subr.mxu0 0.0
    %2272 = vmatpush1.msra.mxu0 0.0
    %2273 = vmatprep.subr.mxu0 0.0
    %2274 = vmatpush1.msra.mxu0 0.0
    %2275 = vmatprep.subr.mxu0 0.0
    %2276 = vmatpush1.msra.mxu0 0.0
    %2277 = vmatprep.subr.mxu0 0.0
    %2278 = vmatpush1.msra.mxu0 0.0
    %2279 = vmatprep.subr.mxu0 0.0
    %2280 = vmatpush1.msra.mxu0 0.0
    %2281 = vmatprep.subr.mxu0 0.0
    %2282 = vmatpush1.msra.mxu0 0.0
    %2283 = vmatprep.subr.mxu0 0.0
    %2284 = vmatpush1.msra.mxu0 0.0
    %2285 = vmatprep.subr.mxu0 0.0
    %2286 = vmatpush1.msra.mxu0 0.0
    %2287 = vmatprep.subr.mxu0 0.0
    %2288 = vmatpush1.msra.mxu0 0.0
    %2289 = vmatprep.subr.mxu0 0.0
    %2290 = vmatpush1.msra.mxu0 0.0
    %2291 = vmatprep.subr.mxu0 0.0
    %2292 = vmatpush1.msra.mxu0 0.0
    %2293 = vmatprep.subr.mxu0 0.0
    %2294 = vmatpush1.msra.mxu0 0.0
    %2295 = vmatprep.subr.mxu0 0.0
    %2296 = vmatpush1.msra.mxu0 0.0
    %2297 = vmatprep.subr.mxu0 0.0
    %2298 = vmatpush1.msra.mxu0 0.0
    %2299 = vmatprep.subr.mxu0 0.0
    %2300 = vmatpush1.msra.mxu0 0.0
    %2301 = vmatprep.subr.mxu0 0.0
    %2302 = vmatpush1.msra.mxu0 0.0
    %2303 = vmatprep.subr.mxu0 0.0
    %2304 = vmatpush1.msra.mxu0 0.0
    %2305 = vmatprep.subr.mxu0 0.0
    %2306 = vmatpush1.msra.mxu0 0.0
    %2307 = vmatprep.subr.mxu0 0.0
    %2308 = vmatpush1.msra.mxu0 0.0
    %2309 = vmatprep.mubr.f32.mxu0 0.0
    %2310 = vmatmul.mubr.f32.gmra.mrb[0].mxu0 %v2243
    %v2311 = vpop.f32.mrb[0].mxu0
    %v2312 = vadd.f32 0.0, %v2311
    %v2313 = vpop.f32.mrb[0].mxu0
    %2314 = vdwg.mxu0
    %v2315 = vadd.f32 %v2136, %v2312
    %v2316 = vxor.u32 %v2315, 2147483648
    %v2317 = vmul.f32 %v2316, 1.442695
    %v2318 = vpow.pop %v2317
    %v2319 = vadd.f32 %v2318, 1.0
    %v2320 = vrcp.pop %v2319
    %v2321 = vmul.f32 1.0, %v2320
    %v2322 = vtanh.pop %v2315
    %v2323 = vmul.f32 %v2321, %v2056
    %2325 = vrot.lane.b32.xlu0 %v2322, 64
    %v2326 = vpop.permute.xlu0 %2325
    %v2328 = vmul.f32 %v2321, %v2326
    %2330 = vrot.lane.b32.xlu0 %v2328, 32
    %v2331 = vpop.permute.xlu0 %2330
    %v2333 = vadd.f32 %v2323, %v2331
    %v2334 = vtanh.pop %v2333
    %2336 = vrot.lane.b32.xlu0 %v2334, 64
    %v2337 = vpop.permute.xlu0 %2336
    %v2339 = vmul.f32 %v2321, %v2337
    %v2341 = vrot.slane %v2239, 6
    %2342 = vrot.lane.b32.xlu0 %v2341, 32
    %v2343 = vpop.permute.xlu0 %2342
    %v2344 = vsel %vm220, %v2343, 0
    %2346 = vmatprep.subr.mxu0 0.0
    %2347 = vmatpush1.msra.mxu0 %v77
    %2348 = vmatprep.subr.mxu0 0.0
    %2349 = vmatpush1.msra.mxu0 %v78
    %2350 = vmatprep.subr.mxu0 0.0
    %2351 = vmatpush1.msra.mxu0 %v79
    %2352 = vmatprep.subr.mxu0 0.0
    %2353 = vmatpush1.msra.mxu0 %v80
    %2354 = vmatprep.subr.mxu0 0.0
    %2355 = vmatpush1.msra.mxu0 0.0
    %2356 = vmatprep.subr.mxu0 0.0
    %2357 = vmatpush1.msra.mxu0 0.0
    %2358 = vmatprep.subr.mxu0 0.0
    %2359 = vmatpush1.msra.mxu0 0.0
    %2360 = vmatprep.subr.mxu0 0.0
    %2361 = vmatpush1.msra.mxu0 0.0
    %2362 = vmatprep.subr.mxu0 0.0
    %2363 = vmatpush1.msra.mxu0 0.0
    %2364 = vmatprep.subr.mxu0 0.0
    %2365 = vmatpush1.msra.mxu0 0.0
    %2366 = vmatprep.subr.mxu0 0.0
    %2367 = vmatpush1.msra.mxu0 0.0
    %2368 = vmatprep.subr.mxu0 0.0
    %2369 = vmatpush1.msra.mxu0 0.0
    %2370 = vmatprep.subr.mxu0 0.0
    %2371 = vmatpush1.msra.mxu0 0.0
    %2372 = vmatprep.subr.mxu0 0.0
    %2373 = vmatpush1.msra.mxu0 0.0
    %2374 = vmatprep.subr.mxu0 0.0
    %2375 = vmatpush1.msra.mxu0 0.0
    %2376 = vmatprep.subr.mxu0 0.0
    %2377 = vmatpush1.msra.mxu0 0.0
    %2378 = vmatprep.subr.mxu0 0.0
    %2379 = vmatpush1.msra.mxu0 0.0
    %2380 = vmatprep.subr.mxu0 0.0
    %2381 = vmatpush1.msra.mxu0 0.0
    %2382 = vmatprep.subr.mxu0 0.0
    %2383 = vmatpush1.msra.mxu0 0.0
    %2384 = vmatprep.subr.mxu0 0.0
    %2385 = vmatpush1.msra.mxu0 0.0
    %2386 = vmatprep.subr.mxu0 0.0
    %2387 = vmatpush1.msra.mxu0 0.0
    %2388 = vmatprep.subr.mxu0 0.0
    %2389 = vmatpush1.msra.mxu0 0.0
    %2390 = vmatprep.subr.mxu0 0.0
    %2391 = vmatpush1.msra.mxu0 0.0
    %2392 = vmatprep.subr.mxu0 0.0
    %2393 = vmatpush1.msra.mxu0 0.0
    %2394 = vmatprep.subr.mxu0 0.0
    %2395 = vmatpush1.msra.mxu0 0.0
    %2396 = vmatprep.subr.mxu0 0.0
    %2397 = vmatpush1.msra.mxu0 0.0
    %2398 = vmatprep.subr.mxu0 0.0
    %2399 = vmatpush1.msra.mxu0 0.0
    %2400 = vmatprep.subr.mxu0 0.0
    %2401 = vmatpush1.msra.mxu0 0.0
    %2402 = vmatprep.subr.mxu0 0.0
    %2403 = vmatpush1.msra.mxu0 0.0
    %2404 = vmatprep.subr.mxu0 0.0
    %2405 = vmatpush1.msra.mxu0 0.0
    %2406 = vmatprep.subr.mxu0 0.0
    %2407 = vmatpush1.msra.mxu0 0.0
    %2408 = vmatprep.subr.mxu0 0.0
    %2409 = vmatpush1.msra.mxu0 0.0
    %2410 = vmatprep.mubr.f32.mxu0 0.0
    %2411 = vmatmul.mubr.f32.gmra.mrb[0].mxu0 %v2344
    %v2412 = vpop.f32.mrb[0].mxu0
    %v2413 = vadd.f32 %v94, %v2412
    %v2414 = vpop.f32.mrb[0].mxu0
    %2415 = vdwg.mxu0
    %2417 = vrot.lane.b32.xlu0 %v2339, 32
    %v2418 = vpop.permute.xlu0 %2417
    %v2419 = vsel %vm220, %v2418, 0
    %2421 = vmatprep.subr.mxu0 0.0
    %2422 = vmatpush1.msra.mxu0 %v85
    %2423 = vmatprep.subr.mxu0 0.0
    %2424 = vmatpush1.msra.mxu0 %v86
    %2425 = vmatprep.subr.mxu0 0.0
    %2426 = vmatpush1.msra.mxu0 %v87
    %2427 = vmatprep.subr.mxu0 0.0
    %2428 = vmatpush1.msra.mxu0 %v88
    %2429 = vmatprep.subr.mxu0 0.0
    %2430 = vmatpush1.msra.mxu0 0.0
    %2431 = vmatprep.subr.mxu0 0.0
    %2432 = vmatpush1.msra.mxu0 0.0
    %2433 = vmatprep.subr.mxu0 0.0
    %2434 = vmatpush1.msra.mxu0 0.0
    %2435 = vmatprep.subr.mxu0 0.0
    %2436 = vmatpush1.msra.mxu0 0.0
    %2437 = vmatprep.subr.mxu0 0.0
    %2438 = vmatpush1.msra.mxu0 0.0
    %2439 = vmatprep.subr.mxu0 0.0
    %2440 = vmatpush1.msra.mxu0 0.0
    %2441 = vmatprep.subr.mxu0 0.0
    %2442 = vmatpush1.msra.mxu0 0.0
    %2443 = vmatprep.subr.mxu0 0.0
    %2444 = vmatpush1.msra.mxu0 0.0
    %2445 = vmatprep.subr.mxu0 0.0
    %2446 = vmatpush1.msra.mxu0 0.0
    %2447 = vmatprep.subr.mxu0 0.0
    %2448 = vmatpush1.msra.mxu0 0.0
    %2449 = vmatprep.subr.mxu0 0.0
    %2450 = vmatpush1.msra.mxu0 0.0
    %2451 = vmatprep.subr.mxu0 0.0
    %2452 = vmatpush1.msra.mxu0 0.0
    %2453 = vmatprep.subr.mxu0 0.0
    %2454 = vmatpush1.msra.mxu0 0.0
    %2455 = vmatprep.subr.mxu0 0.0
    %2456 = vmatpush1.msra.mxu0 0.0
    %2457 = vmatprep.subr.mxu0 0.0
    %2458 = vmatpush1.msra.mxu0 0.0
    %2459 = vmatprep.subr.mxu0 0.0
    %2460 = vmatpush1.msra.mxu0 0.0
    %2461 = vmatprep.subr.mxu0 0.0
    %2462 = vmatpush1.msra.mxu0 0.0
    %2463 = vmatprep.subr.mxu0 0.0
    %2464 = vmatpush1.msra.mxu0 0.0
    %2465 = vmatprep.subr.mxu0 0.0
    %2466 = vmatpush1.msra.mxu0 0.0
    %2467 = vmatprep.subr.mxu0 0.0
    %2468 = vmatpush1.msra.mxu0 0.0
    %2469 = vmatprep.subr.mxu0 0.0
    %2470 = vmatpush1.msra.mxu0 0.0
    %2471 = vmatprep.subr.mxu0 0.0
    %2472 = vmatpush1.msra.mxu0 0.0
    %2473 = vmatprep.subr.mxu0 0.0
    %2474 = vmatpush1.msra.mxu0 0.0
    %2475 = vmatprep.subr.mxu0 0.0
    %2476 = vmatpush1.msra.mxu0 0.0
    %2477 = vmatprep.subr.mxu0 0.0
    %2478 = vmatpush1.msra.mxu0 0.0
    %2479 = vmatprep.subr.mxu0 0.0
    %2480 = vmatpush1.msra.mxu0 0.0
    %2481 = vmatprep.subr.mxu0 0.0
    %2482 = vmatpush1.msra.mxu0 0.0
    %2483 = vmatprep.subr.mxu0 0.0
    %2484 = vmatpush1.msra.mxu0 0.0
    %2485 = vmatprep.mubr.f32.mxu0 0.0
    %2486 = vmatmul.mubr.f32.gmra.mrb[0].mxu0 %v2419
    %v2487 = vpop.f32.mrb[0].mxu0
    %v2488 = vadd.f32 0.0, %v2487
    %v2489 = vpop.f32.mrb[0].mxu0
    %2490 = vdwg.mxu0
    %v2491 = vadd.f32 %v2413, %v2488
    %v2492 = vxor.u32 %v2491, 2147483648
    %v2493 = vmul.f32 %v2492, 1.442695
    %v2494 = vpow.pop %v2493
    %v2495 = vadd.f32 %v2494, 1.0
    %v2496 = vrcp.pop %v2495
    %v2497 = vmul.f32 1.0, %v2496
    %v2498 = vtanh.pop %v2491
    %v2499 = vmul.f32 %v2497, %v2333
    %2501 = vrot.lane.b32.xlu0 %v2498, 64
    %v2502 = vpop.permute.xlu0 %2501
    %v2504 = vmul.f32 %v2497, %v2502
    %2506 = vrot.lane.b32.xlu0 %v2504, 32
    %v2507 = vpop.permute.xlu0 %2506
    %v2509 = vadd.f32 %v2499, %v2507
    %v2510 = vtanh.pop %v2509
    %2512 = vrot.lane.b32.xlu0 %v2510, 64
    %v2513 = vpop.permute.xlu0 %2512
    %v2515 = vmul.f32 %v2497, %v2513
    %2516 = vrot.lane.b32.xlu0 %v2239, 32
    %v2517 = vpop.permute.xlu0 %2516
    %vm2519 = vcmask 261126
    %2520 = vst.msk [vmem:[#allocation6 - $0x6] sm:$0xc0] %vm2519, %v2517
    %2522 = vrot.lane.b32.xlu0 %v2233, 96
    %v2523 = vpop.permute.xlu0 %2522
    %2525 = vst.msk [vmem:[#allocation7 - $0x6] sm:$0xc0] %vm2519, %v2523
    %2527 = vrot.lane.b32.xlu0 %v2515, 32
    %v2528 = vpop.permute.xlu0 %2527
    %s2530 = scalar_lea.vmem [#allocation6], 2
    %vm2531 = vcmask 254976
    %2532 = vst.msk [vmem:[%s2530] sm:$0x3] %vm2531, %v2528
    %2534 = vrot.lane.b32.xlu0 %v2509, 96
    %v2535 = vpop.permute.xlu0 %2534
    %s2537 = scalar_lea.vmem [#allocation7], 2
    %2538 = vst.msk [vmem:[%s2537] sm:$0x3] %vm2531, %v2535
    %v2539 = vld [vmem:[%s14] sm:$0xff]
    %v2540 = vld [vmem:[%s14 + $0x8] sm:$0xff]
    %v2541 = vld [vmem:[#allocation2] sm:$0x1]
    %v2542 = vld [vmem:[%s12] sm:$0xff]
    %v2543 = vld [vmem:[%s12 + $0x8] sm:$0xff]
    %v2544 = vld [vmem:[%s12 + $0x10] sm:$0xff]
    %v2545 = vld [vmem:[%s12 + $0x18] sm:$0xff]
    %v2546 = vld [vmem:[%s12 + $0x20] sm:$0xff]
    %v2547 = vld [vmem:[%s12 + $0x28] sm:$0xff]
    %v2548 = vld [vmem:[%s12 + $0x30] sm:$0xff]
    %v2549 = vld [vmem:[%s12 + $0x38] sm:$0xff]
    %vm2550 = vcmask 130048
    %v2552 = vsel %vm2550, %v2542, 0
    %v2555 = vsel %vm2550, %v2543, 0
    %v2558 = vsel %vm2550, %v2544, 0
    %v2561 = vsel %vm2550, %v2545, 0
    %v2564 = vsel %vm2550, %v2546, 0
    %v2567 = vsel %vm2550, %v2547, 0
    %v2570 = vsel %vm2550, %v2548, 0
    %v2573 = vsel %vm2550, %v2549, 0
    %2575 = vmatprep.subr.mxu0 0.0
    %2576 = vmatpush1.msra.mxu0 %v2539
    %2577 = vmatprep.subr.mxu0 0.0
    %2578 = vmatpush1.msra.mxu0 %v2540
    %2579 = vmatprep.subr.mxu0 0.0
    %2580 = vmatpush1.msra.mxu0 0.0
    %2581 = vmatprep.subr.mxu0 0.0
    %2582 = vmatpush1.msra.mxu0 0.0
    %2583 = vmatprep.subr.mxu0 0.0
    %2584 = vmatpush1.msra.mxu0 0.0
    %2585 = vmatprep.subr.mxu0 0.0
    %2586 = vmatpush1.msra.mxu0 0.0
    %2587 = vmatprep.subr.mxu0 0.0
    %2588 = vmatpush1.msra.mxu0 0.0
    %2589 = vmatprep.subr.mxu0 0.0
    %2590 = vmatpush1.msra.mxu0 0.0
    %2591 = vmatprep.subr.mxu0 0.0
    %2592 = vmatpush1.msra.mxu0 0.0
    %2593 = vmatprep.subr.mxu0 0.0
    %2594 = vmatpush1.msra.mxu0 0.0
    %2595 = vmatprep.subr.mxu0 0.0
    %2596 = vmatpush1.msra.mxu0 0.0
    %2597 = vmatprep.subr.mxu0 0.0
    %2598 = vmatpush1.msra.mxu0 0.0
    %2599 = vmatprep.subr.mxu0 0.0
    %2600 = vmatpush1.msra.mxu0 0.0
    %2601 = vmatprep.subr.mxu0 0.0
    %2602 = vmatpush1.msra.mxu0 0.0
    %2603 = vmatprep.subr.mxu0 0.0
    %2604 = vmatpush1.msra.mxu0 0.0
    %2605 = vmatprep.subr.mxu0 0.0
    %2606 = vmatpush1.msra.mxu0 0.0
    %2607 = vmatprep.subr.mxu0 0.0
    %2608 = vmatpush1.msra.mxu0 0.0
    %2609 = vmatprep.subr.mxu0 0.0
    %2610 = vmatpush1.msra.mxu0 0.0
    %2611 = vmatprep.subr.mxu0 0.0
    %2612 = vmatpush1.msra.mxu0 0.0
    %2613 = vmatprep.subr.mxu0 0.0
    %2614 = vmatpush1.msra.mxu0 0.0
    %2615 = vmatprep.subr.mxu0 0.0
    %2616 = vmatpush1.msra.mxu0 0.0
    %2617 = vmatprep.subr.mxu0 0.0
    %2618 = vmatpush1.msra.mxu0 0.0
    %2619 = vmatprep.subr.mxu0 0.0
    %2620 = vmatpush1.msra.mxu0 0.0
    %2621 = vmatprep.subr.mxu0 0.0
    %2622 = vmatpush1.msra.mxu0 0.0
    %2623 = vmatprep.subr.mxu0 0.0
    %2624 = vmatpush1.msra.mxu0 0.0
    %2625 = vmatprep.subr.mxu0 0.0
    %2626 = vmatpush1.msra.mxu0 0.0
    %2627 = vmatprep.subr.mxu0 0.0
    %2628 = vmatpush1.msra.mxu0 0.0
    %2629 = vmatprep.subr.mxu0 0.0
    %2630 = vmatpush1.msra.mxu0 0.0
    %2631 = vmatprep.subr.mxu0 0.0
    %2632 = vmatpush1.msra.mxu0 0.0
    %2633 = vmatprep.subr.mxu0 0.0
    %2634 = vmatpush1.msra.mxu0 0.0
    %2635 = vmatprep.subr.mxu0 0.0
    %2636 = vmatpush1.msra.mxu0 0.0
    %2637 = vmatprep.subr.mxu0 0.0
    %2638 = vmatpush1.msra.mxu0 0.0
    %2639 = vmatprep.mubr.f32.mxu0 0.0
    %2640 = vmatmul.mubr.f32.gmra.mrb[0].mxu0 %v2552
    %v2641 = vpop.f32.mrb[0].mxu0
    %v2642 = vadd.f32 0.0, %v2641
    %v2643 = vpop.f32.mrb[0].mxu0
    %2644 = vmatprep.mubr.f32.mxu0 0.0
    %2645 = vmatmul.mubr.f32.gmra.mrb[0].mxu0 %v2555
    %v2646 = vpop.f32.mrb[0].mxu0
    %v2647 = vadd.f32 0.0, %v2646
    %v2648 = vpop.f32.mrb[0].mxu0
    %2649 = vmatprep.mubr.f32.mxu0 0.0
    %2650 = vmatmul.mubr.f32.gmra.mrb[0].mxu0 %v2558
    %v2651 = vpop.f32.mrb[0].mxu0
    %v2652 = vadd.f32 0.0, %v2651
    %v2653 = vpop.f32.mrb[0].mxu0
    %2654 = vmatprep.mubr.f32.mxu0 0.0
    %2655 = vmatmul.mubr.f32.gmra.mrb[0].mxu0 %v2561
    %v2656 = vpop.f32.mrb[0].mxu0
    %v2657 = vadd.f32 0.0, %v2656
    %v2658 = vpop.f32.mrb[0].mxu0
    %2659 = vmatprep.mubr.f32.mxu0 0.0
    %2660 = vmatmul.mubr.f32.gmra.mrb[0].mxu0 %v2564
    %v2661 = vpop.f32.mrb[0].mxu0
    %v2662 = vadd.f32 0.0, %v2661
    %v2663 = vpop.f32.mrb[0].mxu0
    %2664 = vmatprep.mubr.f32.mxu0 0.0
    %2665 = vmatmul.mubr.f32.gmra.mrb[0].mxu0 %v2567
    %v2666 = vpop.f32.mrb[0].mxu0
    %v2667 = vadd.f32 0.0, %v2666
    %v2668 = vpop.f32.mrb[0].mxu0
    %2669 = vmatprep.mubr.f32.mxu0 0.0
    %2670 = vmatmul.mubr.f32.gmra.mrb[0].mxu0 %v2570
    %v2671 = vpop.f32.mrb[0].mxu0
    %v2672 = vadd.f32 0.0, %v2671
    %v2673 = vpop.f32.mrb[0].mxu0
    %2674 = vmatprep.mubr.f32.mxu0 0.0
    %2675 = vmatmul.mubr.f32.gmra.mrb[0].mxu0 %v2573
    %v2676 = vpop.f32.mrb[0].mxu0
    %v2677 = vadd.f32 0.0, %v2676
    %v2678 = vpop.f32.mrb[0].mxu0
    %2679 = vdwg.mxu0
    %v2680 = vld [vmem:[%s10] sm:$0xff]
    %v2681 = vld [vmem:[%s10 + $0x8] sm:$0xff]
    %v2682 = vld [vmem:[%s10 + $0x10] sm:$0xff]
    %v2683 = vld [vmem:[%s10 + $0x18] sm:$0xff]
    %vm2684 = vcmask 523264
    %v2686 = vsel %vm2684, %v2680, 0
    %v2689 = vsel %vm2684, %v2681, 0
    %v2692 = vsel %vm2684, %v2682, 0
    %v2695 = vsel %vm2684, %v2683, 0
    %2697 = vmatprep.subr.mxu0 0.0
    %2698 = vmatpush1.msra.mxu0 %v2642
    %2699 = vmatprep.subr.mxu0 0.0
    %2700 = vmatpush1.msra.mxu0 %v2647
    %2701 = vmatprep.subr.mxu0 0.0
    %2702 = vmatpush1.msra.mxu0 %v2652
    %2703 = vmatprep.subr.mxu0 0.0
    %2704 = vmatpush1.msra.mxu0 %v2657
    %2705 = vmatprep.subr.mxu0 0.0
    %2706 = vmatpush1.msra.mxu0 %v2662
    %2707 = vmatprep.subr.mxu0 0.0
    %2708 = vmatpush1.msra.mxu0 %v2667
    %2709 = vmatprep.subr.mxu0 0.0
    %2710 = vmatpush1.msra.mxu0 %v2672
    %2711 = vmatprep.subr.mxu0 0.0
    %2712 = vmatpush1.msra.mxu0 %v2677
    %2713 = vmatprep.subr.mxu0 0.0
    %2714 = vmatpush1.msra.mxu0 0.0
    %2715 = vmatprep.subr.mxu0 0.0
    %2716 = vmatpush1.msra.mxu0 0.0
    %2717 = vmatprep.subr.mxu0 0.0
    %2718 = vmatpush1.msra.mxu0 0.0
    %2719 = vmatprep.subr.mxu0 0.0
    %2720 = vmatpush1.msra.mxu0 0.0
    %2721 = vmatprep.subr.mxu0 0.0
    %2722 = vmatpush1.msra.mxu0 0.0
    %2723 = vmatprep.subr.mxu0 0.0
    %2724 = vmatpush1.msra.mxu0 0.0
    %2725 = vmatprep.subr.mxu0 0.0
    %2726 = vmatpush1.msra.mxu0 0.0
    %2727 = vmatprep.subr.mxu0 0.0
    %2728 = vmatpush1.msra.mxu0 0.0
    %2729 = vmatprep.subr.mxu0 0.0
    %2730 = vmatpush1.msra.mxu0 0.0
    %2731 = vmatprep.subr.mxu0 0.0
    %2732 = vmatpush1.msra.mxu0 0.0
    %2733 = vmatprep.subr.mxu0 0.0
    %2734 = vmatpush1.msra.mxu0 0.0
    %2735 = vmatprep.subr.mxu0 0.0
    %2736 = vmatpush1.msra.mxu0 0.0
    %2737 = vmatprep.subr.mxu0 0.0
    %2738 = vmatpush1.msra.mxu0 0.0
    %2739 = vmatprep.subr.mxu0 0.0
    %2740 = vmatpush1.msra.mxu0 0.0
    %2741 = vmatprep.subr.mxu0 0.0
    %2742 = vmatpush1.msra.mxu0 0.0
    %2743 = vmatprep.subr.mxu0 0.0
    %2744 = vmatpush1.msra.mxu0 0.0
    %2745 = vmatprep.subr.mxu0 0.0
    %2746 = vmatpush1.msra.mxu0 0.0
    %2747 = vmatprep.subr.mxu0 0.0
    %2748 = vmatpush1.msra.mxu0 0.0
    %2749 = vmatprep.subr.mxu0 0.0
    %2750 = vmatpush1.msra.mxu0 0.0
    %2751 = vmatprep.subr.mxu0 0.0
    %2752 = vmatpush1.msra.mxu0 0.0
    %2753 = vmatprep.subr.mxu0 0.0
    %2754 = vmatpush1.msra.mxu0 0.0
    %2755 = vmatprep.subr.mxu0 0.0
    %2756 = vmatpush1.msra.mxu0 0.0
    %2757 = vmatprep.subr.mxu0 0.0
    %2758 = vmatpush1.msra.mxu0 0.0
    %2759 = vmatprep.subr.mxu0 0.0
    %2760 = vmatpush1.msra.mxu0 0.0
    %2761 = vmatprep.mubr.f32.mxu0 0.0
    %2762 = vmatmul.mubr.f32.gmra.mrb[0].mxu0 %v2686
    %v2763 = vpop.f32.mrb[0].mxu0
    %v2764 = vadd.f32 0.0, %v2763
    %v2765 = vpop.f32.mrb[0].mxu0
    %2766 = vmatprep.mubr.f32.mxu0 0.0
    %2767 = vmatmul.mubr.f32.gmra.mrb[0].mxu0 %v2689
    %v2768 = vpop.f32.mrb[0].mxu0
    %v2769 = vadd.f32 0.0, %v2768
    %v2770 = vpop.f32.mrb[0].mxu0
    %2771 = vmatprep.mubr.f32.mxu0 0.0
    %2772 = vmatmul.mubr.f32.gmra.mrb[0].mxu0 %v2692
    %v2773 = vpop.f32.mrb[0].mxu0
    %v2774 = vadd.f32 0.0, %v2773
    %v2775 = vpop.f32.mrb[0].mxu0
    %2776 = vmatprep.mubr.f32.mxu0 0.0
    %2777 = vmatmul.mubr.f32.gmra.mrb[0].mxu0 %v2695
    %v2778 = vpop.f32.mrb[0].mxu0
    %v2779 = vadd.f32 0.0, %v2778
    %v2780 = vpop.f32.mrb[0].mxu0
    %2781 = vdwg.mxu0
    %v2782 = vld [vmem:[%s11] sm:$0x1]
    %v2784 = vsel %vm2684, %v2782, 0
    %2786 = vmatprep.subr.mxu0 0.0
    %2787 = vmatpush1.msra.mxu0 %v2542
    %2788 = vmatprep.subr.mxu0 0.0
    %2789 = vmatpush1.msra.mxu0 %v2543
    %2790 = vmatprep.subr.mxu0 0.0
    %2791 = vmatpush1.msra.mxu0 %v2544
    %2792 = vmatprep.subr.mxu0 0.0
    %2793 = vmatpush1.msra.mxu0 %v2545
    %2794 = vmatprep.subr.mxu0 0.0
    %2795 = vmatpush1.msra.mxu0 %v2546
    %2796 = vmatprep.subr.mxu0 0.0
    %2797 = vmatpush1.msra.mxu0 %v2547
    %2798 = vmatprep.subr.mxu0 0.0
    %2799 = vmatpush1.msra.mxu0 %v2548
    %2800 = vmatprep.subr.mxu0 0.0
    %2801 = vmatpush1.msra.mxu0 %v2549
    %2802 = vmatprep.subr.mxu0 0.0
    %2803 = vmatpush1.msra.mxu0 0.0
    %2804 = vmatprep.subr.mxu0 0.0
    %2805 = vmatpush1.msra.mxu0 0.0
    %2806 = vmatprep.subr.mxu0 0.0
    %2807 = vmatpush1.msra.mxu0 0.0
    %2808 = vmatprep.subr.mxu0 0.0
    %2809 = vmatpush1.msra.mxu0 0.0
    %2810 = vmatprep.subr.mxu0 0.0
    %2811 = vmatpush1.msra.mxu0 0.0
    %2812 = vmatprep.subr.mxu0 0.0
    %2813 = vmatpush1.msra.mxu0 0.0
    %2814 = vmatprep.subr.mxu0 0.0
    %2815 = vmatpush1.msra.mxu0 0.0
    %2816 = vmatprep.subr.mxu0 0.0
    %2817 = vmatpush1.msra.mxu0 0.0
    %2818 = vmatprep.subr.mxu0 0.0
    %2819 = vmatpush1.msra.mxu0 0.0
    %2820 = vmatprep.subr.mxu0 0.0
    %2821 = vmatpush1.msra.mxu0 0.0
    %2822 = vmatprep.subr.mxu0 0.0
    %2823 = vmatpush1.msra.mxu0 0.0
    %2824 = vmatprep.subr.mxu0 0.0
    %2825 = vmatpush1.msra.mxu0 0.0
    %2826 = vmatprep.subr.mxu0 0.0
    %2827 = vmatpush1.msra.mxu0 0.0
    %2828 = vmatprep.subr.mxu0 0.0
    %2829 = vmatpush1.msra.mxu0 0.0
    %2830 = vmatprep.subr.mxu0 0.0
    %2831 = vmatpush1.msra.mxu0 0.0
    %2832 = vmatprep.subr.mxu0 0.0
    %2833 = vmatpush1.msra.mxu0 0.0
    %2834 = vmatprep.subr.mxu0 0.0
    %2835 = vmatpush1.msra.mxu0 0.0
    %2836 = vmatprep.subr.mxu0 0.0
    %2837 = vmatpush1.msra.mxu0 0.0
    %2838 = vmatprep.subr.mxu0 0.0
    %2839 = vmatpush1.msra.mxu0 0.0
    %2840 = vmatprep.subr.mxu0 0.0
    %2841 = vmatpush1.msra.mxu0 0.0
    %2842 = vmatprep.subr.mxu0 0.0
    %2843 = vmatpush1.msra.mxu0 0.0
    %2844 = vmatprep.subr.mxu0 0.0
    %2845 = vmatpush1.msra.mxu0 0.0
    %2846 = vmatprep.subr.mxu0 0.0
    %2847 = vmatpush1.msra.mxu0 0.0
    %2848 = vmatprep.subr.mxu0 0.0
    %2849 = vmatpush1.msra.mxu0 0.0
    %2850 = vmatprep.mubr.f32.mxu0 0.0
    %2851 = vmatmul.mubr.f32.gmra.mrb[0].mxu0 %v2784
    %v2852 = vpop.f32.mrb[0].mxu0
    %v2853 = vadd.f32 0.0, %v2852
    %v2854 = vpop.f32.mrb[0].mxu0
    %2855 = vdwg.mxu0
    %v2856 = vld [vmem:[%s13] sm:$0x1]
    %v2858 = vsel %vm2550, %v2856, 0
    %2860 = vmatprep.subr.mxu0 0.0
    %2861 = vmatpush1.msra.mxu0 %v2539
    %2862 = vmatprep.subr.mxu0 0.0
    %2863 = vmatpush1.msra.mxu0 %v2540
    %2864 = vmatprep.subr.mxu0 0.0
    %2865 = vmatpush1.msra.mxu0 0.0
    %2866 = vmatprep.subr.mxu0 0.0
    %2867 = vmatpush1.msra.mxu0 0.0
    %2868 = vmatprep.subr.mxu0 0.0
    %2869 = vmatpush1.msra.mxu0 0.0
    %2870 = vmatprep.subr.mxu0 0.0
    %2871 = vmatpush1.msra.mxu0 0.0
    %2872 = vmatprep.subr.mxu0 0.0
    %2873 = vmatpush1.msra.mxu0 0.0
    %2874 = vmatprep.subr.mxu0 0.0
    %2875 = vmatpush1.msra.mxu0 0.0
    %2876 = vmatprep.subr.mxu0 0.0
    %2877 = vmatpush1.msra.mxu0 0.0
    %2878 = vmatprep.subr.mxu0 0.0
    %2879 = vmatpush1.msra.mxu0 0.0
    %2880 = vmatprep.subr.mxu0 0.0
    %2881 = vmatpush1.msra.mxu0 0.0
    %2882 = vmatprep.subr.mxu0 0.0
    %2883 = vmatpush1.msra.mxu0 0.0
    %2884 = vmatprep.subr.mxu0 0.0
    %2885 = vmatpush1.msra.mxu0 0.0
    %2886 = vmatprep.subr.mxu0 0.0
    %2887 = vmatpush1.msra.mxu0 0.0
    %2888 = vmatprep.subr.mxu0 0.0
    %2889 = vmatpush1.msra.mxu0 0.0
    %2890 = vmatprep.subr.mxu0 0.0
    %2891 = vmatpush1.msra.mxu0 0.0
    %2892 = vmatprep.subr.mxu0 0.0
    %2893 = vmatpush1.msra.mxu0 0.0
    %2894 = vmatprep.subr.mxu0 0.0
    %2895 = vmatpush1.msra.mxu0 0.0
    %2896 = vmatprep.subr.mxu0 0.0
    %2897 = vmatpush1.msra.mxu0 0.0
    %2898 = vmatprep.subr.mxu0 0.0
    %2899 = vmatpush1.msra.mxu0 0.0
    %2900 = vmatprep.subr.mxu0 0.0
    %2901 = vmatpush1.msra.mxu0 0.0
    %2902 = vmatprep.subr.mxu0 0.0
    %2903 = vmatpush1.msra.mxu0 0.0
    %2904 = vmatprep.subr.mxu0 0.0
    %2905 = vmatpush1.msra.mxu0 0.0
    %2906 = vmatprep.subr.mxu0 0.0
    %2907 = vmatpush1.msra.mxu0 0.0
    %2908 = vmatprep.subr.mxu0 0.0
    %2909 = vmatpush1.msra.mxu0 0.0
    %2910 = vmatprep.subr.mxu0 0.0
    %2911 = vmatpush1.msra.mxu0 0.0
    %2912 = vmatprep.subr.mxu0 0.0
    %2913 = vmatpush1.msra.mxu0 0.0
    %2914 = vmatprep.subr.mxu0 0.0
    %2915 = vmatpush1.msra.mxu0 0.0
    %2916 = vmatprep.subr.mxu0 0.0
    %2917 = vmatpush1.msra.mxu0 0.0
    %2918 = vmatprep.subr.mxu0 0.0
    %2919 = vmatpush1.msra.mxu0 0.0
    %2920 = vmatprep.subr.mxu0 0.0
    %2921 = vmatpush1.msra.mxu0 0.0
    %2922 = vmatprep.subr.mxu0 0.0
    %2923 = vmatpush1.msra.mxu0 0.0
    %2924 = vmatprep.mubr.f32.mxu0 0.0
    %2925 = vmatmul.mubr.f32.gmra.mrb[0].mxu0 %v2858
    %v2926 = vpop.f32.mrb[0].mxu0
    %v2927 = vadd.f32 0.0, %v2926
    %v2928 = vpop.f32.mrb[0].mxu0
    %2929 = vdwg.mxu0
    %v2931 = vsel %vm2550, %v2853, 0
    %2933 = vmatprep.subr.mxu0 0.0
    %2934 = vmatpush1.msra.mxu0 %v2539
    %2935 = vmatprep.subr.mxu0 0.0
    %2936 = vmatpush1.msra.mxu0 %v2540
    %2937 = vmatprep.subr.mxu0 0.0
    %2938 = vmatpush1.msra.mxu0 0.0
    %2939 = vmatprep.subr.mxu0 0.0
    %2940 = vmatpush1.msra.mxu0 0.0
    %2941 = vmatprep.subr.mxu0 0.0
    %2942 = vmatpush1.msra.mxu0 0.0
    %2943 = vmatprep.subr.mxu0 0.0
    %2944 = vmatpush1.msra.mxu0 0.0
    %2945 = vmatprep.subr.mxu0 0.0
    %2946 = vmatpush1.msra.mxu0 0.0
    %2947 = vmatprep.subr.mxu0 0.0
    %2948 = vmatpush1.msra.mxu0 0.0
    %2949 = vmatprep.subr.mxu0 0.0
    %2950 = vmatpush1.msra.mxu0 0.0
    %2951 = vmatprep.subr.mxu0 0.0
    %2952 = vmatpush1.msra.mxu0 0.0
    %2953 = vmatprep.subr.mxu0 0.0
    %2954 = vmatpush1.msra.mxu0 0.0
    %2955 = vmatprep.subr.mxu0 0.0
    %2956 = vmatpush1.msra.mxu0 0.0
    %2957 = vmatprep.subr.mxu0 0.0
    %2958 = vmatpush1.msra.mxu0 0.0
    %2959 = vmatprep.subr.mxu0 0.0
    %2960 = vmatpush1.msra.mxu0 0.0
    %2961 = vmatprep.subr.mxu0 0.0
    %2962 = vmatpush1.msra.mxu0 0.0
    %2963 = vmatprep.subr.mxu0 0.0
    %2964 = vmatpush1.msra.mxu0 0.0
    %2965 = vmatprep.subr.mxu0 0.0
    %2966 = vmatpush1.msra.mxu0 0.0
    %2967 = vmatprep.subr.mxu0 0.0
    %2968 = vmatpush1.msra.mxu0 0.0
    %2969 = vmatprep.subr.mxu0 0.0
    %2970 = vmatpush1.msra.mxu0 0.0
    %2971 = vmatprep.subr.mxu0 0.0
    %2972 = vmatpush1.msra.mxu0 0.0
    %2973 = vmatprep.subr.mxu0 0.0
    %2974 = vmatpush1.msra.mxu0 0.0
    %2975 = vmatprep.subr.mxu0 0.0
    %2976 = vmatpush1.msra.mxu0 0.0
    %2977 = vmatprep.subr.mxu0 0.0
    %2978 = vmatpush1.msra.mxu0 0.0
    %2979 = vmatprep.subr.mxu0 0.0
    %2980 = vmatpush1.msra.mxu0 0.0
    %2981 = vmatprep.subr.mxu0 0.0
    %2982 = vmatpush1.msra.mxu0 0.0
    %2983 = vmatprep.subr.mxu0 0.0
    %2984 = vmatpush1.msra.mxu0 0.0
    %2985 = vmatprep.subr.mxu0 0.0
    %2986 = vmatpush1.msra.mxu0 0.0
    %2987 = vmatprep.subr.mxu0 0.0
    %2988 = vmatpush1.msra.mxu0 0.0
    %2989 = vmatprep.subr.mxu0 0.0
    %2990 = vmatpush1.msra.mxu0 0.0
    %2991 = vmatprep.subr.mxu0 0.0
    %2992 = vmatpush1.msra.mxu0 0.0
    %2993 = vmatprep.subr.mxu0 0.0
    %2994 = vmatpush1.msra.mxu0 0.0
    %2995 = vmatprep.subr.mxu0 0.0
    %2996 = vmatpush1.msra.mxu0 0.0
    %2997 = vmatprep.mubr.f32.mxu0 0.0
    %2998 = vmatmul.mubr.f32.gmra.mrb[0].mxu0 %v2931
    %v2999 = vpop.f32.mrb[0].mxu0
    %v3000 = vadd.f32 %v2927, %v2999
    %v3001 = vpop.f32.mrb[0].mxu0
    %3002 = vdwg.mxu0
    %v3003 = vadd.f32 %v3000, %v2541
    %v3004 = vlaneseq
    %v3005 = vshrl.u32 %v3004, 7
    %v3006 = vsub.s32 0, %v3005
    %v3007 = vrot.slane %v3003, %v3006
    %v3008 = vsel %vm220, %v2528, 0
    %3010 = vmatprep.subr.mxu0 0.0
    %3011 = vmatpush1.msra.mxu0 %v2764
    %3012 = vmatprep.subr.mxu0 0.0
    %3013 = vmatpush1.msra.mxu0 %v2769
    %3014 = vmatprep.subr.mxu0 0.0
    %3015 = vmatpush1.msra.mxu0 %v2774
    %3016 = vmatprep.subr.mxu0 0.0
    %3017 = vmatpush1.msra.mxu0 %v2779
    %3018 = vmatprep.subr.mxu0 0.0
    %3019 = vmatpush1.msra.mxu0 0.0
    %3020 = vmatprep.subr.mxu0 0.0
    %3021 = vmatpush1.msra.mxu0 0.0
    %3022 = vmatprep.subr.mxu0 0.0
    %3023 = vmatpush1.msra.mxu0 0.0
    %3024 = vmatprep.subr.mxu0 0.0
    %3025 = vmatpush1.msra.mxu0 0.0
    %3026 = vmatprep.subr.mxu0 0.0
    %3027 = vmatpush1.msra.mxu0 0.0
    %3028 = vmatprep.subr.mxu0 0.0
    %3029 = vmatpush1.msra.mxu0 0.0
    %3030 = vmatprep.subr.mxu0 0.0
    %3031 = vmatpush1.msra.mxu0 0.0
    %3032 = vmatprep.subr.mxu0 0.0
    %3033 = vmatpush1.msra.mxu0 0.0
    %3034 = vmatprep.subr.mxu0 0.0
    %3035 = vmatpush1.msra.mxu0 0.0
    %3036 = vmatprep.subr.mxu0 0.0
    %3037 = vmatpush1.msra.mxu0 0.0
    %3038 = vmatprep.subr.mxu0 0.0
    %3039 = vmatpush1.msra.mxu0 0.0
    %3040 = vmatprep.subr.mxu0 0.0
    %3041 = vmatpush1.msra.mxu0 0.0
    %3042 = vmatprep.subr.mxu0 0.0
    %3043 = vmatpush1.msra.mxu0 0.0
    %3044 = vmatprep.subr.mxu0 0.0
    %3045 = vmatpush1.msra.mxu0 0.0
    %3046 = vmatprep.subr.mxu0 0.0
    %3047 = vmatpush1.msra.mxu0 0.0
    %3048 = vmatprep.subr.mxu0 0.0
    %3049 = vmatpush1.msra.mxu0 0.0
    %3050 = vmatprep.subr.mxu0 0.0
    %3051 = vmatpush1.msra.mxu0 0.0
    %3052 = vmatprep.subr.mxu0 0.0
    %3053 = vmatpush1.msra.mxu0 0.0
    %3054 = vmatprep.subr.mxu0 0.0
    %3055 = vmatpush1.msra.mxu0 0.0
    %3056 = vmatprep.subr.mxu0 0.0
    %3057 = vmatpush1.msra.mxu0 0.0
    %3058 = vmatprep.subr.mxu0 0.0
    %3059 = vmatpush1.msra.mxu0 0.0
    %3060 = vmatprep.subr.mxu0 0.0
    %3061 = vmatpush1.msra.mxu0 0.0
    %3062 = vmatprep.subr.mxu0 0.0
    %3063 = vmatpush1.msra.mxu0 0.0
    %3064 = vmatprep.subr.mxu0 0.0
    %3065 = vmatpush1.msra.mxu0 0.0
    %3066 = vmatprep.subr.mxu0 0.0
    %3067 = vmatpush1.msra.mxu0 0.0
    %3068 = vmatprep.subr.mxu0 0.0
    %3069 = vmatpush1.msra.mxu0 0.0
    %3070 = vmatprep.subr.mxu0 0.0
    %3071 = vmatpush1.msra.mxu0 0.0
    %3072 = vmatprep.subr.mxu0 0.0
    %3073 = vmatpush1.msra.mxu0 0.0
    %3074 = vmatprep.mubr.f32.mxu0 0.0
    %3075 = vmatmul.mubr.f32.gmra.mrb[0].mxu0 %v3008
    %v3076 = vpop.f32.mrb[0].mxu0
    %v3077 = vadd.f32 %v3007, %v3076
    %v3078 = vpop.f32.mrb[0].mxu0
    %3079 = vdwg.mxu0
    %v3080 = vxor.u32 %v3077, 2147483648
    %v3081 = vmul.f32 %v3080, 1.442695
    %v3082 = vpow.pop %v3081
    %v3083 = vadd.f32 %v3082, 1.0
    %v3084 = vrcp.pop %v3083
    %v3085 = vmul.f32 1.0, %v3084
    %vm3086 = vcmask 1024
    %3087 = vst.msk [vmem:[%s16] sm:$0x3] %vm3086, %v3085
    // Predicated region
    $region70: #{tpu_custom_call.1} parent=1 // pred_check
      _
    $region71: #{tpu_custom_call.1} parent=1 // pred_check_branch
      %3089 = sbr.rel (0) target = $region73
    $region72: #{tpu_custom_call.1} parent=1 // pred_region
      _
    $region73: #{tpu_custom_call.1} parent=1 // pred_fallthru
      _
    // Predicated region
    $region74: #{tpu_custom_call.1} parent=1 // pred_check
      _
    $region75: #{tpu_custom_call.1} parent=1 // pred_check_branch
      %3091 = sbr.rel (0) target = $region77
    $region76: #{tpu_custom_call.1} parent=1 // pred_region
      %s3093 = ssub.s32 64, 64
      %3094 = vsyncadd [#allocation4], %s3093
      %s3095 = sshll.u32 [#allocation6], 4
      %s3096 = int_to_ptr.vmem [resolvable:$true] %s3095
      %3101 = dma.vmem_to_hbm [thread:$0]  %s3096, 64, %s17, [#allocation4], 32, 32, 2
    $region77: #{tpu_custom_call.1} parent=1 // pred_fallthru
      _
    // Predicated region
    $region78: #{tpu_custom_call.1} parent=1 // pred_check
      _
    $region79: #{tpu_custom_call.1} parent=1 // pred_check_branch
      %3103 = sbr.rel (0) target = $region81
    $region80: #{tpu_custom_call.1} parent=1 // pred_region
      %s3105 = ssub.s32 64, 64
      %3106 = vsyncadd [#allocation8], %s3105
      %s3107 = sshll.u32 [#allocation7], 4
      %s3108 = int_to_ptr.vmem [resolvable:$true] %s3107
      %3113 = dma.vmem_to_hbm [thread:$0]  %s3108, 64, %s18, [#allocation8], 32, 32, 2
    $region81: #{tpu_custom_call.1} parent=1 // pred_fallthru
      _
    // Predicated region
    $region82: #{tpu_custom_call.1} parent=1 // pred_check
      _
    $region83: #{tpu_custom_call.1} parent=1 // pred_check_branch
      %3115 = sbr.rel (0) target = $region85
    $region84: #{tpu_custom_call.1} parent=1 // pred_region
      _
    $region85: #{tpu_custom_call.1} parent=1 // pred_fallthru
      _
    // Predicated region
    $region86: #{tpu_custom_call.1} parent=1 // pred_check
      _
    $region87: #{tpu_custom_call.1} parent=1 // pred_check_branch
      %3117 = sbr.rel (0) target = $region89
    $region88: #{tpu_custom_call.1} parent=1 // pred_region
      %3118 = dma.done [#allocation4], 64
    $region89: #{tpu_custom_call.1} parent=1 // pred_fallthru
      _
    // Predicated region
    $region90: #{tpu_custom_call.1} parent=1 // pred_check
      _
    $region91: #{tpu_custom_call.1} parent=1 // pred_check_branch
      %3120 = sbr.rel (0) target = $region93
    $region92: #{tpu_custom_call.1} parent=1 // pred_region
      %3121 = dma.done [#allocation8], 64
    $region93: #{tpu_custom_call.1} parent=1 // pred_fallthru
      _
    %3122 = vsyncpa [#allocation4], 1
    %3123 = vsyncpa [#allocation8], 1
    %3124 = vsyncpa [#allocation5], 1

</llo_original>
